<compile_context>
chip_gen: v5e
topology: v5e:2x2
jax: 0.10.0
libtpu: 0.0.40
codegen_flags: <defaults>
</compile_context>

<pallas_src>
import functools
import math

import numpy as np

import jax
import jax.numpy as jnp
from jax.experimental import pallas as pl
from jax.experimental.pallas import tpu as pltpu


# ---------------------------------------------------------------------------
# Fused GCN kernel
# ---------------------------------------------------------------------------

def _gcn_kernel(xc_ref, wl1_ref, wl2_ref, wr1_ref, wr2_ref,
                bl1_ref, br1_ref, bout_ref, ml1_ref, mr1_ref,
                o_ref, *, k, p, H, W):
    """One batch element of GCN.

    xc_ref : (1, Cin, SX)   bf16  flat canvas, spatial (H+2p, W+2p) + 2p tail 0s
    w*_ref : (Co, k*C)      bf16  folded conv weights (tap-major, channel-minor)
    b*_ref : (Co, 1)        f32   biases (bout = b_l2 + b_r2)
    m*_ref : (1, L)         f32   column masks on the padded flat grid
    o_ref  : (1, Co, H*Wp)  f32   output on the (H, Wp) flat grid
    """
    Wp = W + 2 * p
    S1 = H * Wp + 2 * p            # l1 output flat length
    S2 = H * Wp                    # l2 / r2 / final output flat length
    Sr1 = (H + 2 * p) * Wp         # r1 output flat length

    x = xc_ref[0]                  # (Cin, SX) bf16

    def conv1d(src, w_ref, stride, out_len):
        # Fold the k taps into a single MXU matmul: the im2col patch is k
        # contiguous lane-slices of the flat buffer stacked on the channel axis.
        patch = jnp.concatenate(
            [src[:, a * stride: a * stride + out_len] for a in range(k)],
            axis=0)                                        # (k*C, out_len) bf16
        return jnp.dot(w_ref[...], patch,
                       preferred_element_type=jnp.float32)  # (Co, out_len) f32

    # ---- left branch: (k,1) conv along H, then (1,k) conv along W ----------
    l1 = conv1d(x, wl1_ref, Wp, S1)                  # H-conv (taps stride Wp)
    l1 = l1 + bl1_ref[...] * ml1_ref[...]            # bias only on valid cols
                                                     # (W-pad cols stay exactly 0)
    l2 = conv1d(l1.astype(jnp.bfloat16), wl2_ref, 1, S2)   # W-conv (taps stride 1)

    # ---- right branch: (1,k) conv along W, then (k,1) conv along H ---------
    r1 = conv1d(x, wr1_ref, 1, Sr1)                  # W-conv (valid) on H-padded x
    r1 = (r1 + br1_ref[...]) * mr1_ref[...]          # bias + re-zero pad columns
    r2 = conv1d(r1.astype(jnp.bfloat16), wr2_ref, Wp, S2)  # H-conv

    # ---- fused x_l + x_r (+ both trailing biases) --------------------------
    o_ref[0] = l2 + r2 + bout_ref[...]


# ---------------------------------------------------------------------------
# Wrapper
# ---------------------------------------------------------------------------

def gcn_forward(x, params, *, k):
    """GCN forward.  x: (N, Cin, H, W) f32 NCHW -> (N, Co, H, W) f32 NCHW."""
    N, Cin, H, W = x.shape
    Co = params["wl1"].shape[0]
    p = (k - 1) // 2
    Hp, Wp = H + 2 * p, W + 2 * p
    SX = Hp * Wp + 2 * p           # input canvas flat length
    S1 = H * Wp + 2 * p            # l1 output flat length
    S2 = H * Wp                    # l2 / r2 / final output flat length
    Sr1 = Hp * Wp                  # r1 output flat length

    # glue: zero-padded flat canvas (both spatial pads baked in, H-major rows)
    xc = jnp.pad(x, ((0, 0), (0, 0), (p, p), (p, p))).reshape(N, Cin, Hp * Wp)
    xc = jnp.pad(xc, ((0, 0), (0, 0), (0, 2 * p))).astype(jnp.bfloat16)

    # glue: fold (k,1)/(1,k) OIHW weights -> (Co, k*C) matmul layout, bf16
    def fold(w):
        co, ci = w.shape[:2]
        w = jnp.transpose(w.reshape(co, ci, k), (0, 2, 1))   # (Co, k, C)
        return w.reshape(co, k * ci).astype(jnp.bfloat16)

    wl1, wl2 = fold(params["wl1"]), fold(params["wl2"])
    wr1, wr2 = fold(params["wr1"]), fold(params["wr2"])
    bl1 = params["bl1"].reshape(Co, 1)
    br1 = params["br1"].reshape(Co, 1)
    bout = (params["bl2"] + params["br2"]).reshape(Co, 1)

    # glue: column masks on the padded flat grid (host-side numpy constants)
    def col_mask(rows, lo, hi, length):
        f = np.arange(length)
        m = ((f // Wp) < rows) & ((f % Wp) >= lo) & ((f % Wp) < hi)
        return jnp.asarray(m.astype(np.float32)[None, :])

    ml1 = col_mask(H, p, p + W, S1)        # l1 valid columns (interior W)
    mr1 = col_mask(Hp, p, W - p, Sr1)      # r1 valid columns (width W - 2p)

    out = pl.pallas_call(
        functools.partial(_gcn_kernel, k=k, p=p, H=H, W=W),
        grid=(N,),
        in_specs=[
            pl.BlockSpec((1, Cin, SX), lambda b: (b, 0, 0)),
            pl.BlockSpec((Co, k * Cin), lambda b: (0, 0)),
            pl.BlockSpec((Co, k * Co), lambda b: (0, 0)),
            pl.BlockSpec((Co, k * Cin), lambda b: (0, 0)),
            pl.BlockSpec((Co, k * Co), lambda b: (0, 0)),
            pl.BlockSpec((Co, 1), lambda b: (0, 0)),
            pl.BlockSpec((Co, 1), lambda b: (0, 0)),
            pl.BlockSpec((Co, 1), lambda b: (0, 0)),
            pl.BlockSpec((1, S1), lambda b: (0, 0)),
            pl.BlockSpec((1, Sr1), lambda b: (0, 0)),
        ],
        out_specs=pl.BlockSpec((1, Co, S2), lambda b: (b, 0, 0)),
        out_shape=jax.ShapeDtypeStruct((N, Co, S2), jnp.float32),
        compiler_params=pltpu.CompilerParams(
            dimension_semantics=("parallel",)),
    )(xc, wl1, wl2, wr1, wr2, bl1, br1, bout, ml1, mr1)

    # glue: strip the W-padding columns of the flat output grid
    return out.reshape(N, Co, H, Wp)[:, :, :, :W]


# ---------------------------------------------------------------------------
# Parameter init (PyTorch Conv2d defaults: U(-1/sqrt(fan_in), 1/sqrt(fan_in)))
# ---------------------------------------------------------------------------

def init_gcn(key, c, out_c, k):
    def conv_init(key, cout, cin, kh, kw):
        bound = 1.0 / math.sqrt(cin * kh * kw)
        kw_, kb_ = jax.random.split(key)
        w = jax.random.uniform(kw_, (cout, cin, kh, kw), jnp.float32, -bound, bound)
        b = jax.random.uniform(kb_, (cout,), jnp.float32, -bound, bound)
        return w, b

    k1, k2, k3, k4 = jax.random.split(key, 4)
    wl1, bl1 = conv_init(k1, out_c, c, k, 1)       # conv_l1, padding (p, 0)
    wl2, bl2 = conv_init(k2, out_c, out_c, 1, k)   # conv_l2, padding (0, p)
    wr1, br1 = conv_init(k3, out_c, c, 1, k)       # conv_r1, padding (p, 0)
    wr2, br2 = conv_init(k4, out_c, out_c, k, 1)   # conv_r2, padding (0, p)
    return dict(wl1=wl1, bl1=bl1, wl2=wl2, bl2=bl2,
                wr1=wr1, br1=br1, wr2=wr2, br2=br2)


# ---------------------------------------------------------------------------
# Pure-XLA reference (mirrors the PyTorch module, incl. its quirky paddings)
# ---------------------------------------------------------------------------

def gcn_reference(x, params, *, k):
    p = (k - 1) // 2

    def conv(inp, w, b, pad):
        y = jax.lax.conv_general_dilated(
            inp, w, window_strides=(1, 1), padding=pad,
            dimension_numbers=("NCHW", "OIHW", "NCHW"),
            precision=jax.lax.Precision.HIGHEST)
        return y + b.reshape(1, -1, 1, 1)

    xl = conv(x, params["wl1"], params["bl1"], ((p, p), (0, 0)))
    xl = conv(xl, params["wl2"], params["bl2"], ((0, 0), (p, p)))
    xr = conv(x, params["wr1"], params["br1"], ((p, p), (0, 0)))
    xr = conv(xr, params["wr2"], params["br2"], ((0, 0), (p, p)))
    return xl + xr


# ---------------------------------------------------------------------------
# Main
# ---------------------------------------------------------------------------

if __name__ == "__main__":
    N, C_IN, H, W = 2, 4, 32, 32          # spatial must be >= k for conv_r1
    OUT_C, K = 8, 13

    root = jax.random.PRNGKey(0)
    kx, kp = jax.random.split(root)
    x = jax.random.normal(kx, (N, C_IN, H, W), jnp.float32)
    params = init_gcn(kp, C_IN, OUT_C, K)

    fwd = jax.jit(functools.partial(gcn_forward, k=K))
    y = fwd(x, params)
    jax.block_until_ready(y)
    assert y.shape == (N, OUT_C, H, W), y.shape

    # Self-check vs. the XLA reference (bf16 MXU operands, f32 accumulation).
    y_ref = gcn_reference(x, params, k=K)
    rel = float(jnp.max(jnp.abs(y - y_ref)) / (jnp.max(jnp.abs(y_ref)) + 1e-6))
    assert rel < 3e-2, f"relative max error vs reference: {rel}"

    print("KERNEL_OK")
</pallas_src>

<mosaic_0001>
module attributes {stable_mosaic.version = 11 : i64} {
  func.func @_gcn_kernel(%arg0: i32, %arg1: memref<1x4x1948xbf16, #tpu.memory_space<vmem>>, %arg2: memref<8x52xbf16, #tpu.memory_space<vmem>>, %arg3: memref<8x104xbf16, #tpu.memory_space<vmem>>, %arg4: memref<8x52xbf16, #tpu.memory_space<vmem>>, %arg5: memref<8x104xbf16, #tpu.memory_space<vmem>>, %arg6: memref<8x1xf32, #tpu.memory_space<vmem>>, %arg7: memref<8x1xf32, #tpu.memory_space<vmem>>, %arg8: memref<8x1xf32, #tpu.memory_space<vmem>>, %arg9: memref<1x1420xf32, #tpu.memory_space<vmem>>, %arg10: memref<1x1936xf32, #tpu.memory_space<vmem>>, %arg11: memref<1x8x1408xf32, #tpu.memory_space<vmem>>) attributes {dimension_semantics = [#tpu.dimension_semantics<parallel>], iteration_bounds = array<i64: 2>, scalar_prefetch = 0 : i64, scratch_operands = 0 : i64, tpu.core_type = #tpu.core_type<tc>, window_params = [{transform_indices = @transform_0, window_bounds = array<i64: 1, 4, 1948>}, {pipeline_mode = #tpu.pipeline_mode<synchronous>, transform_indices = @transform_1, window_bounds = array<i64: 8, 52>}, {pipeline_mode = #tpu.pipeline_mode<synchronous>, transform_indices = @transform_2, window_bounds = array<i64: 8, 104>}, {pipeline_mode = #tpu.pipeline_mode<synchronous>, transform_indices = @transform_3, window_bounds = array<i64: 8, 52>}, {pipeline_mode = #tpu.pipeline_mode<synchronous>, transform_indices = @transform_4, window_bounds = array<i64: 8, 104>}, {pipeline_mode = #tpu.pipeline_mode<synchronous>, transform_indices = @transform_5, window_bounds = array<i64: 8, 1>}, {pipeline_mode = #tpu.pipeline_mode<synchronous>, transform_indices = @transform_6, window_bounds = array<i64: 8, 1>}, {pipeline_mode = #tpu.pipeline_mode<synchronous>, transform_indices = @transform_7, window_bounds = array<i64: 8, 1>}, {pipeline_mode = #tpu.pipeline_mode<synchronous>, transform_indices = @transform_8, window_bounds = array<i64: 1, 1420>}, {pipeline_mode = #tpu.pipeline_mode<synchronous>, transform_indices = @transform_9, window_bounds = array<i64: 1, 1936>}, {transform_indices = @transform_10, window_bounds = array<i64: 1, 8, 1408>}]} {
    %c0 = arith.constant 0 : index
    %c0_0 = arith.constant 0 : index
    %c0_1 = arith.constant 0 : index
    %0 = vector.load %arg1[%c0, %c0_0, %c0_1] : memref<1x4x1948xbf16, #tpu.memory_space<vmem>>, vector<1x4x1948xbf16>
    %1 = vector.shape_cast %0 : vector<1x4x1948xbf16> to vector<4x1948xbf16>
    %2 = vector.extract_strided_slice %1 {offsets = [0, 0], sizes = [4, 1420], strides = [1, 1]} : vector<4x1948xbf16> to vector<4x1420xbf16>
    %3 = vector.extract_strided_slice %1 {offsets = [0, 44], sizes = [4, 1420], strides = [1, 1]} : vector<4x1948xbf16> to vector<4x1420xbf16>
    %4 = vector.extract_strided_slice %1 {offsets = [0, 88], sizes = [4, 1420], strides = [1, 1]} : vector<4x1948xbf16> to vector<4x1420xbf16>
    %5 = vector.extract_strided_slice %1 {offsets = [0, 132], sizes = [4, 1420], strides = [1, 1]} : vector<4x1948xbf16> to vector<4x1420xbf16>
    %6 = vector.extract_strided_slice %1 {offsets = [0, 176], sizes = [4, 1420], strides = [1, 1]} : vector<4x1948xbf16> to vector<4x1420xbf16>
    %7 = vector.extract_strided_slice %1 {offsets = [0, 220], sizes = [4, 1420], strides = [1, 1]} : vector<4x1948xbf16> to vector<4x1420xbf16>
    %8 = vector.extract_strided_slice %1 {offsets = [0, 264], sizes = [4, 1420], strides = [1, 1]} : vector<4x1948xbf16> to vector<4x1420xbf16>
    %9 = vector.extract_strided_slice %1 {offsets = [0, 308], sizes = [4, 1420], strides = [1, 1]} : vector<4x1948xbf16> to vector<4x1420xbf16>
    %10 = vector.extract_strided_slice %1 {offsets = [0, 352], sizes = [4, 1420], strides = [1, 1]} : vector<4x1948xbf16> to vector<4x1420xbf16>
    %11 = vector.extract_strided_slice %1 {offsets = [0, 396], sizes = [4, 1420], strides = [1, 1]} : vector<4x1948xbf16> to vector<4x1420xbf16>
    %12 = vector.extract_strided_slice %1 {offsets = [0, 440], sizes = [4, 1420], strides = [1, 1]} : vector<4x1948xbf16> to vector<4x1420xbf16>
    %13 = vector.extract_strided_slice %1 {offsets = [0, 484], sizes = [4, 1420], strides = [1, 1]} : vector<4x1948xbf16> to vector<4x1420xbf16>
    %14 = vector.extract_strided_slice %1 {offsets = [0, 528], sizes = [4, 1420], strides = [1, 1]} : vector<4x1948xbf16> to vector<4x1420xbf16>
    %15 = tpu.concatenate %2, %3, %4, %5, %6, %7, %8, %9, %10, %11, %12, %13, %14 in 0 : vector<4x1420xbf16>, vector<4x1420xbf16>, vector<4x1420xbf16>, vector<4x1420xbf16>, vector<4x1420xbf16>, vector<4x1420xbf16>, vector<4x1420xbf16>, vector<4x1420xbf16>, vector<4x1420xbf16>, vector<4x1420xbf16>, vector<4x1420xbf16>, vector<4x1420xbf16>, vector<4x1420xbf16> -> vector<52x1420xbf16>
    %c0_2 = arith.constant 0 : index
    %c0_3 = arith.constant 0 : index
    %16 = vector.load %arg2[%c0_2, %c0_3] : memref<8x52xbf16, #tpu.memory_space<vmem>>, vector<8x52xbf16>
    %cst = arith.constant dense<0.000000e+00> : vector<8x1420xf32>
    %17 = tpu.matmul %16, %15, %cst {dimension_numbers = #tpu.dot_dimension_numbers<[1], [0], [0], [1], [0, 0, 1, 1], [], []>} : vector<8x52xbf16>, vector<52x1420xbf16>, vector<8x1420xf32> -> vector<8x1420xf32>
    %c0_4 = arith.constant 0 : index
    %c0_5 = arith.constant 0 : index
    %18 = vector.load %arg6[%c0_4, %c0_5] : memref<8x1xf32, #tpu.memory_space<vmem>>, vector<8x1xf32>
    %c0_6 = arith.constant 0 : index
    %c0_7 = arith.constant 0 : index
    %19 = vector.load %arg9[%c0_6, %c0_7] : memref<1x1420xf32, #tpu.memory_space<vmem>>, vector<1x1420xf32>
    %20 = vector.broadcast %18 : vector<8x1xf32> to vector<8x1420xf32>
    %21 = vector.broadcast %19 : vector<1x1420xf32> to vector<8x1420xf32>
    %22 = arith.mulf %20, %21 : vector<8x1420xf32>
    %23 = arith.addf %17, %22 : vector<8x1420xf32>
    %24 = arith.truncf %23 : vector<8x1420xf32> to vector<8x1420xbf16>
    %25 = vector.extract_strided_slice %24 {offsets = [0, 0], sizes = [8, 1408], strides = [1, 1]} : vector<8x1420xbf16> to vector<8x1408xbf16>
    %26 = vector.extract_strided_slice %24 {offsets = [0, 1], sizes = [8, 1408], strides = [1, 1]} : vector<8x1420xbf16> to vector<8x1408xbf16>
    %27 = vector.extract_strided_slice %24 {offsets = [0, 2], sizes = [8, 1408], strides = [1, 1]} : vector<8x1420xbf16> to vector<8x1408xbf16>
    %28 = vector.extract_strided_slice %24 {offsets = [0, 3], sizes = [8, 1408], strides = [1, 1]} : vector<8x1420xbf16> to vector<8x1408xbf16>
    %29 = vector.extract_strided_slice %24 {offsets = [0, 4], sizes = [8, 1408], strides = [1, 1]} : vector<8x1420xbf16> to vector<8x1408xbf16>
    %30 = vector.extract_strided_slice %24 {offsets = [0, 5], sizes = [8, 1408], strides = [1, 1]} : vector<8x1420xbf16> to vector<8x1408xbf16>
    %31 = vector.extract_strided_slice %24 {offsets = [0, 6], sizes = [8, 1408], strides = [1, 1]} : vector<8x1420xbf16> to vector<8x1408xbf16>
    %32 = vector.extract_strided_slice %24 {offsets = [0, 7], sizes = [8, 1408], strides = [1, 1]} : vector<8x1420xbf16> to vector<8x1408xbf16>
    %33 = vector.extract_strided_slice %24 {offsets = [0, 8], sizes = [8, 1408], strides = [1, 1]} : vector<8x1420xbf16> to vector<8x1408xbf16>
    %34 = vector.extract_strided_slice %24 {offsets = [0, 9], sizes = [8, 1408], strides = [1, 1]} : vector<8x1420xbf16> to vector<8x1408xbf16>
    %35 = vector.extract_strided_slice %24 {offsets = [0, 10], sizes = [8, 1408], strides = [1, 1]} : vector<8x1420xbf16> to vector<8x1408xbf16>
    %36 = vector.extract_strided_slice %24 {offsets = [0, 11], sizes = [8, 1408], strides = [1, 1]} : vector<8x1420xbf16> to vector<8x1408xbf16>
    %37 = vector.extract_strided_slice %24 {offsets = [0, 12], sizes = [8, 1408], strides = [1, 1]} : vector<8x1420xbf16> to vector<8x1408xbf16>
    %38 = tpu.concatenate %25, %26, %27, %28, %29, %30, %31, %32, %33, %34, %35, %36, %37 in 0 : vector<8x1408xbf16>, vector<8x1408xbf16>, vector<8x1408xbf16>, vector<8x1408xbf16>, vector<8x1408xbf16>, vector<8x1408xbf16>, vector<8x1408xbf16>, vector<8x1408xbf16>, vector<8x1408xbf16>, vector<8x1408xbf16>, vector<8x1408xbf16>, vector<8x1408xbf16>, vector<8x1408xbf16> -> vector<104x1408xbf16>
    %c0_8 = arith.constant 0 : index
    %c0_9 = arith.constant 0 : index
    %39 = vector.load %arg3[%c0_8, %c0_9] : memref<8x104xbf16, #tpu.memory_space<vmem>>, vector<8x104xbf16>
    %cst_10 = arith.constant dense<0.000000e+00> : vector<8x1408xf32>
    %40 = tpu.matmul %39, %38, %cst_10 {dimension_numbers = #tpu.dot_dimension_numbers<[1], [0], [0], [1], [0, 0, 1, 1], [], []>} : vector<8x104xbf16>, vector<104x1408xbf16>, vector<8x1408xf32> -> vector<8x1408xf32>
    %41 = vector.extract_strided_slice %1 {offsets = [0, 0], sizes = [4, 1936], strides = [1, 1]} : vector<4x1948xbf16> to vector<4x1936xbf16>
    %42 = vector.extract_strided_slice %1 {offsets = [0, 1], sizes = [4, 1936], strides = [1, 1]} : vector<4x1948xbf16> to vector<4x1936xbf16>
    %43 = vector.extract_strided_slice %1 {offsets = [0, 2], sizes = [4, 1936], strides = [1, 1]} : vector<4x1948xbf16> to vector<4x1936xbf16>
    %44 = vector.extract_strided_slice %1 {offsets = [0, 3], sizes = [4, 1936], strides = [1, 1]} : vector<4x1948xbf16> to vector<4x1936xbf16>
    %45 = vector.extract_strided_slice %1 {offsets = [0, 4], sizes = [4, 1936], strides = [1, 1]} : vector<4x1948xbf16> to vector<4x1936xbf16>
    %46 = vector.extract_strided_slice %1 {offsets = [0, 5], sizes = [4, 1936], strides = [1, 1]} : vector<4x1948xbf16> to vector<4x1936xbf16>
    %47 = vector.extract_strided_slice %1 {offsets = [0, 6], sizes = [4, 1936], strides = [1, 1]} : vector<4x1948xbf16> to vector<4x1936xbf16>
    %48 = vector.extract_strided_slice %1 {offsets = [0, 7], sizes = [4, 1936], strides = [1, 1]} : vector<4x1948xbf16> to vector<4x1936xbf16>
    %49 = vector.extract_strided_slice %1 {offsets = [0, 8], sizes = [4, 1936], strides = [1, 1]} : vector<4x1948xbf16> to vector<4x1936xbf16>
    %50 = vector.extract_strided_slice %1 {offsets = [0, 9], sizes = [4, 1936], strides = [1, 1]} : vector<4x1948xbf16> to vector<4x1936xbf16>
    %51 = vector.extract_strided_slice %1 {offsets = [0, 10], sizes = [4, 1936], strides = [1, 1]} : vector<4x1948xbf16> to vector<4x1936xbf16>
    %52 = vector.extract_strided_slice %1 {offsets = [0, 11], sizes = [4, 1936], strides = [1, 1]} : vector<4x1948xbf16> to vector<4x1936xbf16>
    %53 = vector.extract_strided_slice %1 {offsets = [0, 12], sizes = [4, 1936], strides = [1, 1]} : vector<4x1948xbf16> to vector<4x1936xbf16>
    %54 = tpu.concatenate %41, %42, %43, %44, %45, %46, %47, %48, %49, %50, %51, %52, %53 in 0 : vector<4x1936xbf16>, vector<4x1936xbf16>, vector<4x1936xbf16>, vector<4x1936xbf16>, vector<4x1936xbf16>, vector<4x1936xbf16>, vector<4x1936xbf16>, vector<4x1936xbf16>, vector<4x1936xbf16>, vector<4x1936xbf16>, vector<4x1936xbf16>, vector<4x1936xbf16>, vector<4x1936xbf16> -> vector<52x1936xbf16>
    %c0_11 = arith.constant 0 : index
    %c0_12 = arith.constant 0 : index
    %55 = vector.load %arg4[%c0_11, %c0_12] : memref<8x52xbf16, #tpu.memory_space<vmem>>, vector<8x52xbf16>
    %cst_13 = arith.constant dense<0.000000e+00> : vector<8x1936xf32>
    %56 = tpu.matmul %55, %54, %cst_13 {dimension_numbers = #tpu.dot_dimension_numbers<[1], [0], [0], [1], [0, 0, 1, 1], [], []>} : vector<8x52xbf16>, vector<52x1936xbf16>, vector<8x1936xf32> -> vector<8x1936xf32>
    %c0_14 = arith.constant 0 : index
    %c0_15 = arith.constant 0 : index
    %57 = vector.load %arg7[%c0_14, %c0_15] : memref<8x1xf32, #tpu.memory_space<vmem>>, vector<8x1xf32>
    %58 = vector.broadcast %57 : vector<8x1xf32> to vector<8x1936xf32>
    %59 = arith.addf %56, %58 : vector<8x1936xf32>
    %c0_16 = arith.constant 0 : index
    %c0_17 = arith.constant 0 : index
    %60 = vector.load %arg10[%c0_16, %c0_17] : memref<1x1936xf32, #tpu.memory_space<vmem>>, vector<1x1936xf32>
    %61 = vector.broadcast %60 : vector<1x1936xf32> to vector<8x1936xf32>
    %62 = arith.mulf %59, %61 : vector<8x1936xf32>
    %63 = arith.truncf %62 : vector<8x1936xf32> to vector<8x1936xbf16>
    %64 = vector.extract_strided_slice %63 {offsets = [0, 0], sizes = [8, 1408], strides = [1, 1]} : vector<8x1936xbf16> to vector<8x1408xbf16>
    %65 = vector.extract_strided_slice %63 {offsets = [0, 44], sizes = [8, 1408], strides = [1, 1]} : vector<8x1936xbf16> to vector<8x1408xbf16>
    %66 = vector.extract_strided_slice %63 {offsets = [0, 88], sizes = [8, 1408], strides = [1, 1]} : vector<8x1936xbf16> to vector<8x1408xbf16>
    %67 = vector.extract_strided_slice %63 {offsets = [0, 132], sizes = [8, 1408], strides = [1, 1]} : vector<8x1936xbf16> to vector<8x1408xbf16>
    %68 = vector.extract_strided_slice %63 {offsets = [0, 176], sizes = [8, 1408], strides = [1, 1]} : vector<8x1936xbf16> to vector<8x1408xbf16>
    %69 = vector.extract_strided_slice %63 {offsets = [0, 220], sizes = [8, 1408], strides = [1, 1]} : vector<8x1936xbf16> to vector<8x1408xbf16>
    %70 = vector.extract_strided_slice %63 {offsets = [0, 264], sizes = [8, 1408], strides = [1, 1]} : vector<8x1936xbf16> to vector<8x1408xbf16>
    %71 = vector.extract_strided_slice %63 {offsets = [0, 308], sizes = [8, 1408], strides = [1, 1]} : vector<8x1936xbf16> to vector<8x1408xbf16>
    %72 = vector.extract_strided_slice %63 {offsets = [0, 352], sizes = [8, 1408], strides = [1, 1]} : vector<8x1936xbf16> to vector<8x1408xbf16>
    %73 = vector.extract_strided_slice %63 {offsets = [0, 396], sizes = [8, 1408], strides = [1, 1]} : vector<8x1936xbf16> to vector<8x1408xbf16>
    %74 = vector.extract_strided_slice %63 {offsets = [0, 440], sizes = [8, 1408], strides = [1, 1]} : vector<8x1936xbf16> to vector<8x1408xbf16>
    %75 = vector.extract_strided_slice %63 {offsets = [0, 484], sizes = [8, 1408], strides = [1, 1]} : vector<8x1936xbf16> to vector<8x1408xbf16>
    %76 = vector.extract_strided_slice %63 {offsets = [0, 528], sizes = [8, 1408], strides = [1, 1]} : vector<8x1936xbf16> to vector<8x1408xbf16>
    %77 = tpu.concatenate %64, %65, %66, %67, %68, %69, %70, %71, %72, %73, %74, %75, %76 in 0 : vector<8x1408xbf16>, vector<8x1408xbf16>, vector<8x1408xbf16>, vector<8x1408xbf16>, vector<8x1408xbf16>, vector<8x1408xbf16>, vector<8x1408xbf16>, vector<8x1408xbf16>, vector<8x1408xbf16>, vector<8x1408xbf16>, vector<8x1408xbf16>, vector<8x1408xbf16>, vector<8x1408xbf16> -> vector<104x1408xbf16>
    %c0_18 = arith.constant 0 : index
    %c0_19 = arith.constant 0 : index
    %78 = vector.load %arg5[%c0_18, %c0_19] : memref<8x104xbf16, #tpu.memory_space<vmem>>, vector<8x104xbf16>
    %cst_20 = arith.constant dense<0.000000e+00> : vector<8x1408xf32>
    %79 = tpu.matmul %78, %77, %cst_20 {dimension_numbers = #tpu.dot_dimension_numbers<[1], [0], [0], [1], [0, 0, 1, 1], [], []>} : vector<8x104xbf16>, vector<104x1408xbf16>, vector<8x1408xf32> -> vector<8x1408xf32>
    %80 = arith.addf %40, %79 : vector<8x1408xf32>
    %c0_21 = arith.constant 0 : index
    %c0_22 = arith.constant 0 : index
    %81 = vector.load %arg8[%c0_21, %c0_22] : memref<8x1xf32, #tpu.memory_space<vmem>>, vector<8x1xf32>
    %82 = vector.broadcast %81 : vector<8x1xf32> to vector<8x1408xf32>
    %83 = arith.addf %80, %82 : vector<8x1408xf32>
    %c0_23 = arith.constant 0 : index
    %c0_24 = arith.constant 0 : index
    %c0_25 = arith.constant 0 : index
    %84 = vector.load %arg11[%c0_23, %c0_24, %c0_25] : memref<1x8x1408xf32, #tpu.memory_space<vmem>>, vector<1x8x1408xf32>
    %85 = vector.shape_cast %84 : vector<1x8x1408xf32> to vector<8x1408xf32>
    %86 = vector.shape_cast %83 : vector<8x1408xf32> to vector<1x8x1408xf32>
    tpu.vector_store %arg11[%c0_23, %c0_24, %c0_25], %86 {strides = array<i32>} : memref<1x8x1408xf32, #tpu.memory_space<vmem>>, vector<1x8x1408xf32>,
    return
  }
  func.func @transform_0(%arg0: i32) -> (i32, i32, i32) {
    %c0_i32 = arith.constant 0 : i32
    %c0_i32_0 = arith.constant 0 : i32
    %c0_i32_1 = arith.constant 0 : i32
    return %arg0, %c0_i32, %c0_i32_0 : i32, i32, i32
  }
  func.func @transform_1(%arg0: i32) -> (i32, i32) {
    %c0_i32 = arith.constant 0 : i32
    %c0_i32_0 = arith.constant 0 : i32
    %c0_i32_1 = arith.constant 0 : i32
    return %c0_i32, %c0_i32_0 : i32, i32
  }
  func.func @transform_2(%arg0: i32) -> (i32, i32) {
    %c0_i32 = arith.constant 0 : i32
    %c0_i32_0 = arith.constant 0 : i32
    %c0_i32_1 = arith.constant 0 : i32
    return %c0_i32, %c0_i32_0 : i32, i32
  }
  func.func @transform_3(%arg0: i32) -> (i32, i32) {
    %c0_i32 = arith.constant 0 : i32
    %c0_i32_0 = arith.constant 0 : i32
    %c0_i32_1 = arith.constant 0 : i32
    return %c0_i32, %c0_i32_0 : i32, i32
  }
  func.func @transform_4(%arg0: i32) -> (i32, i32) {
    %c0_i32 = arith.constant 0 : i32
    %c0_i32_0 = arith.constant 0 : i32
    %c0_i32_1 = arith.constant 0 : i32
    return %c0_i32, %c0_i32_0 : i32, i32
  }
  func.func @transform_5(%arg0: i32) -> (i32, i32) {
    %c0_i32 = arith.constant 0 : i32
    %c0_i32_0 = arith.constant 0 : i32
    %c0_i32_1 = arith.constant 0 : i32
    return %c0_i32, %c0_i32_0 : i32, i32
  }
  func.func @transform_6(%arg0: i32) -> (i32, i32) {
    %c0_i32 = arith.constant 0 : i32
    %c0_i32_0 = arith.constant 0 : i32
    %c0_i32_1 = arith.constant 0 : i32
    return %c0_i32, %c0_i32_0 : i32, i32
  }
  func.func @transform_7(%arg0: i32) -> (i32, i32) {
    %c0_i32 = arith.constant 0 : i32
    %c0_i32_0 = arith.constant 0 : i32
    %c0_i32_1 = arith.constant 0 : i32
    return %c0_i32, %c0_i32_0 : i32, i32
  }
  func.func @transform_8(%arg0: i32) -> (i32, i32) {
    %c0_i32 = arith.constant 0 : i32
    %c0_i32_0 = arith.constant 0 : i32
    %c0_i32_1 = arith.constant 0 : i32
    return %c0_i32, %c0_i32_0 : i32, i32
  }
  func.func @transform_9(%arg0: i32) -> (i32, i32) {
    %c0_i32 = arith.constant 0 : i32
    %c0_i32_0 = arith.constant 0 : i32
    %c0_i32_1 = arith.constant 0 : i32
    return %c0_i32, %c0_i32_0 : i32, i32
  }
  func.func @transform_10(%arg0: i32) -> (i32, i32, i32) {
    %c0_i32 = arith.constant 0 : i32
    %c0_i32_0 = arith.constant 0 : i32
    %c0_i32_1 = arith.constant 0 : i32
    return %arg0, %c0_i32, %c0_i32_0 : i32, i32, i32
  }
}

</mosaic_0001>

<llo_original>
// kernel: gcn_forward.1
$region0: #{gcn_forward.1}
  #allocation0 [shape = 'u32[]', space=smem, size = 0x4, offset = 0x4, fixed_abs, tag = 'smem constant byte address 0x4 - core index']
  #allocation1 [shape = 'u32[72,128]{1,0:T(1,128)}', space=vmem, size = 0x9000, scoped, tag = 'internal scratch']
  %s0 = inlined_call_operand.vmem [shape: bf16[2,4,1948], index: 0, kind: input, shape index: {}]
  %s1 = inlined_call_operand.vmem [shape: bf16[8,52], index: 1, kind: input, shape index: {}]
  %s2 = inlined_call_operand.vmem [shape: bf16[8,104], index: 2, kind: input, shape index: {}]
  %s3 = inlined_call_operand.vmem [shape: bf16[8,52], index: 3, kind: input, shape index: {}]
  %s4 = inlined_call_operand.vmem [shape: bf16[8,104], index: 4, kind: input, shape index: {}]
  %s5 = inlined_call_operand.vmem [shape: f32[8,1], index: 5, kind: input, shape index: {}]
  %s6 = inlined_call_operand.vmem [shape: f32[8,1], index: 6, kind: input, shape index: {}]
  %s7 = inlined_call_operand.vmem [shape: f32[8,1], index: 7, kind: input, shape index: {}]
  %s8 = inlined_call_operand.vmem [shape: f32[1,1420], index: 8, kind: input, shape index: {}]
  %s9 = inlined_call_operand.vmem [shape: f32[1,1936], index: 9, kind: input, shape index: {}]
  %s10 = inlined_call_operand.vmem [shape: f32[2,8,1408], index: 10, kind: output, shape index: {}]
  %s11 = sld [smem:[#allocation0]]
  $region73: #{gcn_forward.1} parent=0
    _
  %s13 = ssub.s32 1, %s11
  %s14 = scalar_select 0, %s13, %s11
  loop: start=0, step=1, limit=4
  $region2: #{gcn_forward.1} parent=0 // loop_pre_header
    _
  $region3: #{gcn_forward.1} parent=0 // loop_header
    %s16 = sphi 0, %s20
    %p17 = scmp.ge.s32.totalorder %s16, 4
    %s26 = sphi 0, %s28
    %s29 = sphi 0, %s26
    %s30 = sphi 0, %s29
    %s46 = sphi 0, %s30
    %s50 = sphi 0, %s50
    %s52 = sphi 0, %s50
    %s53 = sphi 0, %s52
    %s67 = sphi 0, %s53
    %s71 = sphi 0, %s71
    %s73 = sphi 0, %s71
    %s74 = sphi 0, %s73
    %s88 = sphi 0, %s74
    %s92 = sphi 0, %s92
    %s94 = sphi 0, %s92
    %s95 = sphi 0, %s94
    %s109 = sphi 0, %s95
    %s113 = sphi 0, %s113
    %s115 = sphi 0, %s113
    %s116 = sphi 0, %s115
    %s130 = sphi 0, %s116
    %s134 = sphi 0, %s134
    %s136 = sphi 0, %s134
    %s137 = sphi 0, %s136
    %s151 = sphi 0, %s137
    %s155 = sphi 0, %s155
    %s157 = sphi 0, %s155
    %s158 = sphi 0, %s157
    %s172 = sphi 0, %s158
    %s176 = sphi 0, %s176
    %s178 = sphi 0, %s176
    %s179 = sphi 0, %s178
    %s193 = sphi 0, %s179
    %s197 = sphi 0, %s197
    %s199 = sphi 0, %s197
    %s200 = sphi 0, %s199
    %s214 = sphi 0, %s200
    %s218 = sphi 0, %s218
    %s220 = sphi 0, %s218
    %s221 = sphi 0, %s220
    %s235 = sphi 0, %s221
    %s241 = sphi 0, %s243
    %s244 = sphi 0, %s241
    %s245 = sphi 0, %s244
    %s261 = sphi 0, %s245
  $region4: #{gcn_forward.1} parent=0 // loop_header_branch
    %19 = sbr.rel (%p17) target = $region8
  $region5: #{gcn_forward.1} parent=0 // loop_body
    %s21 = ssub.s32 %s16, 1
    %s22 = ssub.s32 %s16, 2
    %s23 = sadd.s32 %s16, 1
    %s24 = ssub.s32 %s16, %s23
    %p25 = scmp.eq.s32.totalorder %s24, 0
    %s27 = sadd.s32 %s26, 1
    %s28 = scalar_select %p25, %s26, %s27
    %p31 = pneg %p25
    %p32 = scmp.eq.s32.totalorder %s16, 1
    %p33 = por %p31, %p32
    %p34 = scmp.ne.s32.totalorder %s26, %s29
    %p35 = scmp.eq.s32.totalorder %s16, 0
    %p36 = por %p34, %p35
    %p37 = scmp.ne.s32.totalorder %s26, %s29
    %p38 = scmp.eq.s32.totalorder %s21, 1
    %p39 = por %p37, %p38
    %p40 = scmp.ne.s32.totalorder %s29, %s30
    %p41 = scmp.eq.s32.totalorder %s21, 0
    %p42 = por %p40, %p41
    %p43 = scmp.ne.s32.totalorder %s29, %s30
    %p44 = scmp.eq.s32.totalorder %s22, 1
    %p45 = por %p43, %p44
    %p47 = scmp.ne.s32.totalorder %s30, %s46
    %p48 = scmp.eq.s32.totalorder %s22, 0
    %p49 = por %p47, %p48
    %s51 = sadd.s32 %s50, 1
    %p54 = scmp.eq.s32.totalorder %s16, 1
    %p55 = scmp.ne.s32.totalorder %s50, %s52
    %p56 = scmp.eq.s32.totalorder %s16, 0
    %p57 = por %p55, %p56
    %p58 = scmp.ne.s32.totalorder %s50, %s52
    %p59 = scmp.eq.s32.totalorder %s21, 1
    %p60 = por %p58, %p59
    %p61 = scmp.ne.s32.totalorder %s52, %s53
    %p62 = scmp.eq.s32.totalorder %s21, 0
    %p63 = por %p61, %p62
    %p64 = scmp.ne.s32.totalorder %s52, %s53
    %p65 = scmp.eq.s32.totalorder %s22, 1
    %p66 = por %p64, %p65
    %p68 = scmp.ne.s32.totalorder %s53, %s67
    %p69 = scmp.eq.s32.totalorder %s22, 0
    %p70 = por %p68, %p69
    %s72 = sadd.s32 %s71, 1
    %p75 = scmp.eq.s32.totalorder %s16, 1
    %p76 = scmp.ne.s32.totalorder %s71, %s73
    %p77 = scmp.eq.s32.totalorder %s16, 0
    %p78 = por %p76, %p77
    %p79 = scmp.ne.s32.totalorder %s71, %s73
    %p80 = scmp.eq.s32.totalorder %s21, 1
    %p81 = por %p79, %p80
    %p82 = scmp.ne.s32.totalorder %s73, %s74
    %p83 = scmp.eq.s32.totalorder %s21, 0
    %p84 = por %p82, %p83
    %p85 = scmp.ne.s32.totalorder %s73, %s74
    %p86 = scmp.eq.s32.totalorder %s22, 1
    %p87 = por %p85, %p86
    %p89 = scmp.ne.s32.totalorder %s74, %s88
    %p90 = scmp.eq.s32.totalorder %s22, 0
    %p91 = por %p89, %p90
    %s93 = sadd.s32 %s92, 1
    %p96 = scmp.eq.s32.totalorder %s16, 1
    %p97 = scmp.ne.s32.totalorder %s92, %s94
    %p98 = scmp.eq.s32.totalorder %s16, 0
    %p99 = por %p97, %p98
    %p100 = scmp.ne.s32.totalorder %s92, %s94
    %p101 = scmp.eq.s32.totalorder %s21, 1
    %p102 = por %p100, %p101
    %p103 = scmp.ne.s32.totalorder %s94, %s95
    %p104 = scmp.eq.s32.totalorder %s21, 0
    %p105 = por %p103, %p104
    %p106 = scmp.ne.s32.totalorder %s94, %s95
    %p107 = scmp.eq.s32.totalorder %s22, 1
    %p108 = por %p106, %p107
    %p110 = scmp.ne.s32.totalorder %s95, %s109
    %p111 = scmp.eq.s32.totalorder %s22, 0
    %p112 = por %p110, %p111
    %s114 = sadd.s32 %s113, 1
    %p117 = scmp.eq.s32.totalorder %s16, 1
    %p118 = scmp.ne.s32.totalorder %s113, %s115
    %p119 = scmp.eq.s32.totalorder %s16, 0
    %p120 = por %p118, %p119
    %p121 = scmp.ne.s32.totalorder %s113, %s115
    %p122 = scmp.eq.s32.totalorder %s21, 1
    %p123 = por %p121, %p122
    %p124 = scmp.ne.s32.totalorder %s115, %s116
    %p125 = scmp.eq.s32.totalorder %s21, 0
    %p126 = por %p124, %p125
    %p127 = scmp.ne.s32.totalorder %s115, %s116
    %p128 = scmp.eq.s32.totalorder %s22, 1
    %p129 = por %p127, %p128
    %p131 = scmp.ne.s32.totalorder %s116, %s130
    %p132 = scmp.eq.s32.totalorder %s22, 0
    %p133 = por %p131, %p132
    %s135 = sadd.s32 %s134, 1
    %p138 = scmp.eq.s32.totalorder %s16, 1
    %p139 = scmp.ne.s32.totalorder %s134, %s136
    %p140 = scmp.eq.s32.totalorder %s16, 0
    %p141 = por %p139, %p140
    %p142 = scmp.ne.s32.totalorder %s134, %s136
    %p143 = scmp.eq.s32.totalorder %s21, 1
    %p144 = por %p142, %p143
    %p145 = scmp.ne.s32.totalorder %s136, %s137
    %p146 = scmp.eq.s32.totalorder %s21, 0
    %p147 = por %p145, %p146
    %p148 = scmp.ne.s32.totalorder %s136, %s137
    %p149 = scmp.eq.s32.totalorder %s22, 1
    %p150 = por %p148, %p149
    %p152 = scmp.ne.s32.totalorder %s137, %s151
    %p153 = scmp.eq.s32.totalorder %s22, 0
    %p154 = por %p152, %p153
    %s156 = sadd.s32 %s155, 1
    %p159 = scmp.eq.s32.totalorder %s16, 1
    %p160 = scmp.ne.s32.totalorder %s155, %s157
    %p161 = scmp.eq.s32.totalorder %s16, 0
    %p162 = por %p160, %p161
    %p163 = scmp.ne.s32.totalorder %s155, %s157
    %p164 = scmp.eq.s32.totalorder %s21, 1
    %p165 = por %p163, %p164
    %p166 = scmp.ne.s32.totalorder %s157, %s158
    %p167 = scmp.eq.s32.totalorder %s21, 0
    %p168 = por %p166, %p167
    %p169 = scmp.ne.s32.totalorder %s157, %s158
    %p170 = scmp.eq.s32.totalorder %s22, 1
    %p171 = por %p169, %p170
    %p173 = scmp.ne.s32.totalorder %s158, %s172
    %p174 = scmp.eq.s32.totalorder %s22, 0
    %p175 = por %p173, %p174
    %s177 = sadd.s32 %s176, 1
    %p180 = scmp.eq.s32.totalorder %s16, 1
    %p181 = scmp.ne.s32.totalorder %s176, %s178
    %p182 = scmp.eq.s32.totalorder %s16, 0
    %p183 = por %p181, %p182
    %p184 = scmp.ne.s32.totalorder %s176, %s178
    %p185 = scmp.eq.s32.totalorder %s21, 1
    %p186 = por %p184, %p185
    %p187 = scmp.ne.s32.totalorder %s178, %s179
    %p188 = scmp.eq.s32.totalorder %s21, 0
    %p189 = por %p187, %p188
    %p190 = scmp.ne.s32.totalorder %s178, %s179
    %p191 = scmp.eq.s32.totalorder %s22, 1
    %p192 = por %p190, %p191
    %p194 = scmp.ne.s32.totalorder %s179, %s193
    %p195 = scmp.eq.s32.totalorder %s22, 0
    %p196 = por %p194, %p195
    %s198 = sadd.s32 %s197, 1
    %p201 = scmp.eq.s32.totalorder %s16, 1
    %p202 = scmp.ne.s32.totalorder %s197, %s199
    %p203 = scmp.eq.s32.totalorder %s16, 0
    %p204 = por %p202, %p203
    %p205 = scmp.ne.s32.totalorder %s197, %s199
    %p206 = scmp.eq.s32.totalorder %s21, 1
    %p207 = por %p205, %p206
    %p208 = scmp.ne.s32.totalorder %s199, %s200
    %p209 = scmp.eq.s32.totalorder %s21, 0
    %p210 = por %p208, %p209
    %p211 = scmp.ne.s32.totalorder %s199, %s200
    %p212 = scmp.eq.s32.totalorder %s22, 1
    %p213 = por %p211, %p212
    %p215 = scmp.ne.s32.totalorder %s200, %s214
    %p216 = scmp.eq.s32.totalorder %s22, 0
    %p217 = por %p215, %p216
    %s219 = sadd.s32 %s218, 1
    %p222 = scmp.eq.s32.totalorder %s16, 1
    %p223 = scmp.ne.s32.totalorder %s218, %s220
    %p224 = scmp.eq.s32.totalorder %s16, 0
    %p225 = por %p223, %p224
    %p226 = scmp.ne.s32.totalorder %s218, %s220
    %p227 = scmp.eq.s32.totalorder %s21, 1
    %p228 = por %p226, %p227
    %p229 = scmp.ne.s32.totalorder %s220, %s221
    %p230 = scmp.eq.s32.totalorder %s21, 0
    %p231 = por %p229, %p230
    %p232 = scmp.ne.s32.totalorder %s220, %s221
    %p233 = scmp.eq.s32.totalorder %s22, 1
    %p234 = por %p232, %p233
    %p236 = scmp.ne.s32.totalorder %s221, %s235
    %p237 = scmp.eq.s32.totalorder %s22, 0
    %p238 = por %p236, %p237
    %s239 = ssub.s32 %s16, %s23
    %p240 = scmp.eq.s32.totalorder %s239, 0
    %s242 = sadd.s32 %s241, 1
    %s243 = scalar_select %p240, %s241, %s242
    %p246 = pneg %p240
    %p247 = scmp.eq.s32.totalorder %s16, 1
    %p248 = por %p246, %p247
    %p249 = scmp.ne.s32.totalorder %s241, %s244
    %p250 = scmp.eq.s32.totalorder %s16, 0
    %p251 = por %p249, %p250
    %p252 = scmp.ne.s32.totalorder %s241, %s244
    %p253 = scmp.eq.s32.totalorder %s21, 1
    %p254 = por %p252, %p253
    %p255 = scmp.ne.s32.totalorder %s244, %s245
    %p256 = scmp.eq.s32.totalorder %s21, 0
    %p257 = por %p255, %p256
    %p258 = scmp.ne.s32.totalorder %s244, %s245
    %p259 = scmp.eq.s32.totalorder %s22, 1
    %p260 = por %p258, %p259
    %p262 = scmp.ne.s32.totalorder %s245, %s261
    %p263 = scmp.eq.s32.totalorder %s22, 0
    %p264 = por %p262, %p263
    %p265 = scmp.le.s32.totalorder 1, %s16
    %p266 = scmp.lt.s32.totalorder %s16, 3
    %p267 = pnand %p265, %p266
    %p268 = pneg %p267
    // Predicated region
    $region9: #{gcn_forward.1} parent=5 // pred_check
      _
    $region10: #{gcn_forward.1} parent=5 // pred_check_branch
      %270 = sbr.rel (%p267) target = $region12
    $region11: #{gcn_forward.1} parent=5 // pred_region
      %s271 = ssub.s32 %s16, 1
      // Predicated region
      $region13: #{gcn_forward.1} parent=11 // pred_check
        %p272 = pneg %p63
      $region14: #{gcn_forward.1} parent=11 // pred_check_branch
        %274 = sbr.rel (%p272) target = $region16
      $region15: #{gcn_forward.1} parent=11 // pred_region
        _
      $region16: #{gcn_forward.1} parent=11 // pred_fallthru
        _
      // Predicated region
      $region17: #{gcn_forward.1} parent=11 // pred_check
        %p275 = pneg %p84
      $region18: #{gcn_forward.1} parent=11 // pred_check_branch
        %277 = sbr.rel (%p275) target = $region20
      $region19: #{gcn_forward.1} parent=11 // pred_region
        _
      $region20: #{gcn_forward.1} parent=11 // pred_fallthru
        _
      // Predicated region
      $region21: #{gcn_forward.1} parent=11 // pred_check
        %p278 = pneg %p105
      $region22: #{gcn_forward.1} parent=11 // pred_check_branch
        %280 = sbr.rel (%p278) target = $region24
      $region23: #{gcn_forward.1} parent=11 // pred_region
        _
      $region24: #{gcn_forward.1} parent=11 // pred_fallthru
        _
      // Predicated region
      $region25: #{gcn_forward.1} parent=11 // pred_check
        %p281 = pneg %p126
      $region26: #{gcn_forward.1} parent=11 // pred_check_branch
        %283 = sbr.rel (%p281) target = $region28
      $region27: #{gcn_forward.1} parent=11 // pred_region
        _
      $region28: #{gcn_forward.1} parent=11 // pred_fallthru
        _
      // Predicated region
      $region29: #{gcn_forward.1} parent=11 // pred_check
        %p284 = pneg %p147
      $region30: #{gcn_forward.1} parent=11 // pred_check_branch
        %286 = sbr.rel (%p284) target = $region32
      $region31: #{gcn_forward.1} parent=11 // pred_region
        _
      $region32: #{gcn_forward.1} parent=11 // pred_fallthru
        _
      // Predicated region
      $region33: #{gcn_forward.1} parent=11 // pred_check
        %p287 = pneg %p168
      $region34: #{gcn_forward.1} parent=11 // pred_check_branch
        %289 = sbr.rel (%p287) target = $region36
      $region35: #{gcn_forward.1} parent=11 // pred_region
        _
      $region36: #{gcn_forward.1} parent=11 // pred_fallthru
        _
      // Predicated region
      $region37: #{gcn_forward.1} parent=11 // pred_check
        %p290 = pneg %p189
      $region38: #{gcn_forward.1} parent=11 // pred_check_branch
        %292 = sbr.rel (%p290) target = $region40
      $region39: #{gcn_forward.1} parent=11 // pred_region
        _
      $region40: #{gcn_forward.1} parent=11 // pred_fallthru
        _
      // Predicated region
      $region41: #{gcn_forward.1} parent=11 // pred_check
        %p293 = pneg %p210
      $region42: #{gcn_forward.1} parent=11 // pred_check_branch
        %295 = sbr.rel (%p293) target = $region44
      $region43: #{gcn_forward.1} parent=11 // pred_region
        _
      $region44: #{gcn_forward.1} parent=11 // pred_fallthru
        _
      // Predicated region
      $region45: #{gcn_forward.1} parent=11 // pred_check
        %p296 = pneg %p231
      $region46: #{gcn_forward.1} parent=11 // pred_check_branch
        %298 = sbr.rel (%p296) target = $region48
      $region47: #{gcn_forward.1} parent=11 // pred_region
        _
      $region48: #{gcn_forward.1} parent=11 // pred_fallthru
        _
    $region12: #{gcn_forward.1} parent=5 // pred_fallthru
      _
    %p299 = scmp.lt.s32.totalorder %s16, 2
    // Predicated region
    $region49: #{gcn_forward.1} parent=5 // pred_check
      %p300 = pneg %p299
    $region50: #{gcn_forward.1} parent=5 // pred_check_branch
      %302 = sbr.rel (%p300) target = $region52
    $region51: #{gcn_forward.1} parent=5 // pred_region
      // Predicated region
      $region53: #{gcn_forward.1} parent=51 // pred_check
        %p303 = pneg %p36
      $region54: #{gcn_forward.1} parent=51 // pred_check_branch
        %305 = sbr.rel (%p303) target = $region56
      $region55: #{gcn_forward.1} parent=51 // pred_region
        %p306 = scmp.lt.s32.totalorder %s16, 1
        %s307 = scalar_select %p306, %s16, 1
        %s308 = smul.addr %s307, 16
        %s309 = smul.addr %s308, 2
        %s310 = scalar_lea.vmem %s0, %s309
      $region56: #{gcn_forward.1} parent=51 // pred_fallthru
        _
    $region52: #{gcn_forward.1} parent=5 // pred_fallthru
      _
    %p311 = scmp.le.s32.totalorder 1, %s16
    %p312 = scmp.lt.s32.totalorder %s16, 3
    %p313 = pnand %p311, %p312
    %p314 = pneg %p313
    // Predicated region
    $region57: #{gcn_forward.1} parent=5 // pred_check
      _
    $region58: #{gcn_forward.1} parent=5 // pred_check_branch
      %316 = sbr.rel (%p313) target = $region60
    $region59: #{gcn_forward.1} parent=5 // pred_region
      %s317 = ssub.s32 %s16, 1
      %p318 = scmp.lt.s32.totalorder %s21, 1
      %s319 = scalar_select %p318, %s21, 1
      %s320 = smul.addr %s319, 16
      %s321 = smul.addr %s320, 2
      %s322 = scalar_lea.vmem %s0, %s321
      %p323 = pneg %p42
      %p324 = pneg %p39
      %p325 = pneg %p63
      %p326 = pneg %p60
      %p327 = pneg %p84
      %p328 = pneg %p81
      %p329 = pneg %p105
      %p330 = pneg %p102
      %p331 = pneg %p126
      %p332 = pneg %p123
      %p333 = pneg %p147
      %p334 = pneg %p144
      %p335 = pneg %p168
      %p336 = pneg %p165
      %p337 = pneg %p189
      %p338 = pneg %p186
      %p339 = pneg %p210
      %p340 = pneg %p207
      %p341 = pneg %p231
      %p342 = pneg %p228
      %p343 = pneg %p257
      %p344 = pneg %p254
      %p345 = scmp.lt.s32.totalorder %s21, 1
      %s346 = scalar_select %p345, %s21, 1
      %s347 = smul.addr %s346, 11
      %s348 = smul.addr %s347, 8
      %s349 = scalar_lea.vmem %s10, %s348
      %p350 = scmp.lt.s32.totalorder %s21, 1
      %s351 = scalar_select %p350, %s21, 1
      %s352 = smul.addr %s351, 16
      %s353 = smul.addr %s352, 2
      %s354 = scalar_lea.vmem %s0, %s353
      %p355 = scmp.lt.s32.totalorder %s21, 1
      %s356 = scalar_select %p355, %s21, 1
      %s357 = smul.addr %s356, 11
      %s358 = smul.addr %s357, 8
      %s359 = scalar_lea.vmem %s10, %s358
      %v361 = vld [vmem:[%s354] sm:$0xff]
      %v362 = vld [vmem:[%s354 + $0x8] sm:$0xff]
      %v363 = vld [vmem:[%s354 + $0x10] sm:$0xff]
      %v364 = vld [vmem:[%s354 + $0x18] sm:$0xff]
      %366 = vst [vmem:[#allocation1] ss:$4 sm:$0xff] %v361
      %s368 = scalar_lea.vmem [#allocation1], 32
      %369 = vst [vmem:[%s368] ss:$4 sm:$0xff] %v362
      %v370 = vld.sshfl [vmem:[#allocation1] sm:$0xff pattern:$0x73625140]
      %v371 = vld.sshfl [vmem:[#allocation1 + $0x8] sm:$0xff pattern:$0x73625140]
      %v372 = vld.sshfl [vmem:[#allocation1 + $0x10] sm:$0xff pattern:$0x73625140]
      %v373 = vld.sshfl [vmem:[#allocation1 + $0x18] sm:$0xff pattern:$0x73625140]
      %v374 = vld.sshfl [vmem:[#allocation1 + $0x20] sm:$0xff pattern:$0x73625140]
      %v375 = vld.sshfl [vmem:[#allocation1 + $0x28] sm:$0xff pattern:$0x73625140]
      %v376 = vld.sshfl [vmem:[#allocation1 + $0x30] sm:$0xff pattern:$0x73625140]
      %v377 = vld.sshfl [vmem:[#allocation1 + $0x38] sm:$0xff pattern:$0x73625140]
      %379 = vst [vmem:[#allocation1] ss:$4 sm:$0xff] %v363
      %v380 = vld.sshfl [vmem:[#allocation1] sm:$0xff pattern:$0x73625140]
      %v381 = vld.sshfl [vmem:[#allocation1 + $0x8] sm:$0xff pattern:$0x73625140]
      %v382 = vld.sshfl [vmem:[#allocation1 + $0x10] sm:$0xff pattern:$0x73625140]
      %v383 = vld.sshfl [vmem:[#allocation1 + $0x18] sm:$0xff pattern:$0x73625140]
      %s384 = scalar_lea.vmem [#allocation1], 1
      %385 = vst [vmem:[%s384] ss:$4 sm:$0xff] %v361
      %s386 = scalar_lea.vmem [#allocation1], 33
      %387 = vst [vmem:[%s386] ss:$4 sm:$0xff] %v362
      %v388 = vld.sshfl [vmem:[#allocation1] sm:$0xff pattern:$0x73625140]
      %v390 = vld.sshfl [vmem:[#allocation1 + $0x8] sm:$0xff pattern:$0x73625140]
      %v392 = vld.sshfl [vmem:[#allocation1 + $0x10] sm:$0xff pattern:$0x73625140]
      %v394 = vld.sshfl [vmem:[#allocation1 + $0x18] sm:$0xff pattern:$0x73625140]
      %v396 = vld.sshfl [vmem:[#allocation1 + $0x20] sm:$0xff pattern:$0x73625140]
      %v398 = vld.sshfl [vmem:[#allocation1 + $0x28] sm:$0xff pattern:$0x73625140]
      %v400 = vld.sshfl [vmem:[#allocation1 + $0x30] sm:$0xff pattern:$0x73625140]
      %v402 = vld.sshfl [vmem:[#allocation1 + $0x38] sm:$0xff pattern:$0x73625140]
      %404 = vst [vmem:[%s384] ss:$4 sm:$0xff] %v363
      %v405 = vld.sshfl [vmem:[#allocation1] sm:$0xff pattern:$0x73625140]
      %v407 = vld.sshfl [vmem:[#allocation1 + $0x8] sm:$0xff pattern:$0x73625140]
      %v409 = vld.sshfl [vmem:[#allocation1 + $0x10] sm:$0xff pattern:$0x73625140]
      %v411 = vld.sshfl [vmem:[#allocation1 + $0x18] sm:$0xff pattern:$0x73625140]
      %413 = vrot.lane.b32.xlu0 %v388, 84
      %v414 = vpop.permute.xlu0 %413
      %415 = vrot.lane.b32.xlu0 %v390, 84
      %v416 = vpop.permute.xlu0 %415
      %417 = vrot.lane.b32.xlu0 %v392, 84
      %v418 = vpop.permute.xlu0 %417
      %419 = vrot.lane.b32.xlu0 %v394, 84
      %v420 = vpop.permute.xlu0 %419
      %421 = vrot.lane.b32.xlu0 %v396, 84
      %v422 = vpop.permute.xlu0 %421
      %423 = vrot.lane.b32.xlu0 %v398, 84
      %v424 = vpop.permute.xlu0 %423
      %425 = vrot.lane.b32.xlu0 %v400, 84
      %v426 = vpop.permute.xlu0 %425
      %427 = vrot.lane.b32.xlu0 %v402, 84
      %v428 = vpop.permute.xlu0 %427
      %429 = vrot.lane.b32.xlu0 %v405, 84
      %v430 = vpop.permute.xlu0 %429
      %431 = vrot.lane.b32.xlu0 %v407, 84
      %v432 = vpop.permute.xlu0 %431
      %433 = vrot.lane.b32.xlu0 %v409, 84
      %v434 = vpop.permute.xlu0 %433
      %435 = vrot.lane.b32.xlu0 %v411, 84
      %v436 = vpop.permute.xlu0 %435
      %vm437 = vcmask 687104
      %v438 = vsel %vm437, %v414, %v416
      %v439 = vsel %vm437, %v416, %v418
      %v440 = vsel %vm437, %v418, %v420
      %v441 = vsel %vm437, %v420, %v422
      %v442 = vsel %vm437, %v422, %v424
      %v443 = vsel %vm437, %v424, %v426
      %v444 = vsel %vm437, %v426, %v428
      %v445 = vsel %vm437, %v428, %v430
      %v446 = vsel %vm437, %v430, %v432
      %v447 = vsel %vm437, %v432, %v434
      %v448 = vsel %vm437, %v434, %v436
      %s449 = scalar_lea.vmem [#allocation1], 2
      %450 = vst [vmem:[%s449] ss:$4 sm:$0xff] %v361
      %s451 = scalar_lea.vmem [#allocation1], 34
      %452 = vst [vmem:[%s451] ss:$4 sm:$0xff] %v362
      %v453 = vld.sshfl [vmem:[#allocation1] sm:$0xff pattern:$0x73625140]
      %v455 = vld.sshfl [vmem:[#allocation1 + $0x8] sm:$0xff pattern:$0x73625140]
      %v457 = vld.sshfl [vmem:[#allocation1 + $0x10] sm:$0xff pattern:$0x73625140]
      %v459 = vld.sshfl [vmem:[#allocation1 + $0x18] sm:$0xff pattern:$0x73625140]
      %v461 = vld.sshfl [vmem:[#allocation1 + $0x20] sm:$0xff pattern:$0x73625140]
      %v463 = vld.sshfl [vmem:[#allocation1 + $0x28] sm:$0xff pattern:$0x73625140]
      %v465 = vld.sshfl [vmem:[#allocation1 + $0x30] sm:$0xff pattern:$0x73625140]
      %v467 = vld.sshfl [vmem:[#allocation1 + $0x38] sm:$0xff pattern:$0x73625140]
      %469 = vst [vmem:[%s449] ss:$4 sm:$0xff] %v363
      %v470 = vld.sshfl [vmem:[#allocation1] sm:$0xff pattern:$0x73625140]
      %v472 = vld.sshfl [vmem:[#allocation1 + $0x8] sm:$0xff pattern:$0x73625140]
      %v474 = vld.sshfl [vmem:[#allocation1 + $0x10] sm:$0xff pattern:$0x73625140]
      %v476 = vld.sshfl [vmem:[#allocation1 + $0x18] sm:$0xff pattern:$0x73625140]
      %478 = vrot.lane.b32.xlu0 %v453, 40
      %v479 = vpop.permute.xlu0 %478
      %480 = vrot.lane.b32.xlu0 %v455, 40
      %v481 = vpop.permute.xlu0 %480
      %482 = vrot.lane.b32.xlu0 %v457, 40
      %v483 = vpop.permute.xlu0 %482
      %484 = vrot.lane.b32.xlu0 %v459, 40
      %v485 = vpop.permute.xlu0 %484
      %486 = vrot.lane.b32.xlu0 %v461, 40
      %v487 = vpop.permute.xlu0 %486
      %488 = vrot.lane.b32.xlu0 %v463, 40
      %v489 = vpop.permute.xlu0 %488
      %490 = vrot.lane.b32.xlu0 %v465, 40
      %v491 = vpop.permute.xlu0 %490
      %492 = vrot.lane.b32.xlu0 %v467, 40
      %v493 = vpop.permute.xlu0 %492
      %494 = vrot.lane.b32.xlu0 %v470, 40
      %v495 = vpop.permute.xlu0 %494
      %496 = vrot.lane.b32.xlu0 %v472, 40
      %v497 = vpop.permute.xlu0 %496
      %498 = vrot.lane.b32.xlu0 %v474, 40
      %v499 = vpop.permute.xlu0 %498
      %500 = vrot.lane.b32.xlu0 %v476, 40
      %v501 = vpop.permute.xlu0 %500
      %vm502 = vcmask 326656
      %v503 = vsel %vm502, %v479, %v481
      %v504 = vsel %vm502, %v481, %v483
      %v505 = vsel %vm502, %v483, %v485
      %v506 = vsel %vm502, %v485, %v487
      %v507 = vsel %vm502, %v487, %v489
      %v508 = vsel %vm502, %v489, %v491
      %v509 = vsel %vm502, %v491, %v493
      %v510 = vsel %vm502, %v493, %v495
      %v511 = vsel %vm502, %v495, %v497
      %v512 = vsel %vm502, %v497, %v499
      %v513 = vsel %vm502, %v499, %v501
      %s514 = scalar_lea.vmem [#allocation1], 3
      %515 = vst [vmem:[%s514] ss:$4 sm:$0xff] %v361
      %s516 = scalar_lea.vmem [#allocation1], 35
      %517 = vst [vmem:[%s516] ss:$4 sm:$0xff] %v362
      %v518 = vld.sshfl [vmem:[#allocation1 + $0x8] sm:$0xff pattern:$0x73625140]
      %v520 = vld.sshfl [vmem:[#allocation1 + $0x10] sm:$0xff pattern:$0x73625140]
      %v522 = vld.sshfl [vmem:[#allocation1 + $0x18] sm:$0xff pattern:$0x73625140]
      %v524 = vld.sshfl [vmem:[#allocation1 + $0x20] sm:$0xff pattern:$0x73625140]
      %v526 = vld.sshfl [vmem:[#allocation1 + $0x28] sm:$0xff pattern:$0x73625140]
      %v528 = vld.sshfl [vmem:[#allocation1 + $0x30] sm:$0xff pattern:$0x73625140]
      %v530 = vld.sshfl [vmem:[#allocation1 + $0x38] sm:$0xff pattern:$0x73625140]
      %532 = vst [vmem:[%s514] ss:$4 sm:$0xff] %v363
      %534 = vst [vmem:[%s516] ss:$4 sm:$0xff] %v364
      %v535 = vld.sshfl [vmem:[#allocation1] sm:$0xff pattern:$0x73625140]
      %v537 = vld.sshfl [vmem:[#allocation1 + $0x8] sm:$0xff pattern:$0x73625140]
      %v539 = vld.sshfl [vmem:[#allocation1 + $0x10] sm:$0xff pattern:$0x73625140]
      %v541 = vld.sshfl [vmem:[#allocation1 + $0x18] sm:$0xff pattern:$0x73625140]
      %v543 = vld.sshfl [vmem:[#allocation1 + $0x20] sm:$0xff pattern:$0x73625140]
      %545 = vrot.lane.b32.xlu0 %v518, 124
      %v546 = vpop.permute.xlu0 %545
      %547 = vrot.lane.b32.xlu0 %v520, 124
      %v548 = vpop.permute.xlu0 %547
      %549 = vrot.lane.b32.xlu0 %v522, 124
      %v550 = vpop.permute.xlu0 %549
      %551 = vrot.lane.b32.xlu0 %v524, 124
      %v552 = vpop.permute.xlu0 %551
      %553 = vrot.lane.b32.xlu0 %v526, 124
      %v554 = vpop.permute.xlu0 %553
      %555 = vrot.lane.b32.xlu0 %v528, 124
      %v556 = vpop.permute.xlu0 %555
      %557 = vrot.lane.b32.xlu0 %v530, 124
      %v558 = vpop.permute.xlu0 %557
      %559 = vrot.lane.b32.xlu0 %v535, 124
      %v560 = vpop.permute.xlu0 %559
      %561 = vrot.lane.b32.xlu0 %v537, 124
      %v562 = vpop.permute.xlu0 %561
      %563 = vrot.lane.b32.xlu0 %v539, 124
      %v564 = vpop.permute.xlu0 %563
      %565 = vrot.lane.b32.xlu0 %v541, 124
      %v566 = vpop.permute.xlu0 %565
      %567 = vrot.lane.b32.xlu0 %v543, 124
      %v568 = vpop.permute.xlu0 %567
      %vm569 = vcmask 1014784
      %v570 = vsel %vm569, %v546, %v548
      %v571 = vsel %vm569, %v548, %v550
      %v572 = vsel %vm569, %v550, %v552
      %v573 = vsel %vm569, %v552, %v554
      %v574 = vsel %vm569, %v554, %v556
      %v575 = vsel %vm569, %v556, %v558
      %v576 = vsel %vm569, %v558, %v560
      %v577 = vsel %vm569, %v560, %v562
      %v578 = vsel %vm569, %v562, %v564
      %v579 = vsel %vm569, %v564, %v566
      %v580 = vsel %vm569, %v566, %v568
      %581 = vst [vmem:[#allocation1] ss:$4 sm:$0xff] %v361
      %s582 = scalar_lea.vmem [#allocation1], 32
      %583 = vst [vmem:[%s582] ss:$4 sm:$0xff] %v362
      %v584 = vld.sshfl [vmem:[#allocation1 + $0x8] sm:$0xff pattern:$0x73625140]
      %v586 = vld.sshfl [vmem:[#allocation1 + $0x10] sm:$0xff pattern:$0x73625140]
      %v588 = vld.sshfl [vmem:[#allocation1 + $0x18] sm:$0xff pattern:$0x73625140]
      %v590 = vld.sshfl [vmem:[#allocation1 + $0x20] sm:$0xff pattern:$0x73625140]
      %v592 = vld.sshfl [vmem:[#allocation1 + $0x28] sm:$0xff pattern:$0x73625140]
      %v594 = vld.sshfl [vmem:[#allocation1 + $0x30] sm:$0xff pattern:$0x73625140]
      %v596 = vld.sshfl [vmem:[#allocation1 + $0x38] sm:$0xff pattern:$0x73625140]
      %598 = vst [vmem:[#allocation1] ss:$4 sm:$0xff] %v363
      %599 = vst [vmem:[%s582] ss:$4 sm:$0xff] %v364
      %v600 = vld.sshfl [vmem:[#allocation1] sm:$0xff pattern:$0x73625140]
      %v602 = vld.sshfl [vmem:[#allocation1 + $0x8] sm:$0xff pattern:$0x73625140]
      %v604 = vld.sshfl [vmem:[#allocation1 + $0x10] sm:$0xff pattern:$0x73625140]
      %v606 = vld.sshfl [vmem:[#allocation1 + $0x18] sm:$0xff pattern:$0x73625140]
      %v608 = vld.sshfl [vmem:[#allocation1 + $0x20] sm:$0xff pattern:$0x73625140]
      %610 = vrot.lane.b32.xlu0 %v584, 80
      %v611 = vpop.permute.xlu0 %610
      %612 = vrot.lane.b32.xlu0 %v586, 80
      %v613 = vpop.permute.xlu0 %612
      %614 = vrot.lane.b32.xlu0 %v588, 80
      %v615 = vpop.permute.xlu0 %614
      %616 = vrot.lane.b32.xlu0 %v590, 80
      %v617 = vpop.permute.xlu0 %616
      %618 = vrot.lane.b32.xlu0 %v592, 80
      %v619 = vpop.permute.xlu0 %618
      %620 = vrot.lane.b32.xlu0 %v594, 80
      %v621 = vpop.permute.xlu0 %620
      %622 = vrot.lane.b32.xlu0 %v596, 80
      %v623 = vpop.permute.xlu0 %622
      %624 = vrot.lane.b32.xlu0 %v600, 80
      %v625 = vpop.permute.xlu0 %624
      %626 = vrot.lane.b32.xlu0 %v602, 80
      %v627 = vpop.permute.xlu0 %626
      %628 = vrot.lane.b32.xlu0 %v604, 80
      %v629 = vpop.permute.xlu0 %628
      %630 = vrot.lane.b32.xlu0 %v606, 80
      %v631 = vpop.permute.xlu0 %630
      %632 = vrot.lane.b32.xlu0 %v608, 80
      %v633 = vpop.permute.xlu0 %632
      %vm634 = vcmask 654336
      %v635 = vsel %vm634, %v611, %v613
      %v636 = vsel %vm634, %v613, %v615
      %v637 = vsel %vm634, %v615, %v617
      %v638 = vsel %vm634, %v617, %v619
      %v639 = vsel %vm634, %v619, %v621
      %v640 = vsel %vm634, %v621, %v623
      %v641 = vsel %vm634, %v623, %v625
      %v642 = vsel %vm634, %v625, %v627
      %v643 = vsel %vm634, %v627, %v629
      %v644 = vsel %vm634, %v629, %v631
      %v645 = vsel %vm634, %v631, %v633
      %s646 = scalar_lea.vmem [#allocation1], 1
      %647 = vst [vmem:[%s646] ss:$4 sm:$0xff] %v361
      %s648 = scalar_lea.vmem [#allocation1], 33
      %649 = vst [vmem:[%s648] ss:$4 sm:$0xff] %v362
      %v650 = vld.sshfl [vmem:[#allocation1 + $0x8] sm:$0xff pattern:$0x73625140]
      %v652 = vld.sshfl [vmem:[#allocation1 + $0x10] sm:$0xff pattern:$0x73625140]
      %v654 = vld.sshfl [vmem:[#allocation1 + $0x18] sm:$0xff pattern:$0x73625140]
      %v656 = vld.sshfl [vmem:[#allocation1 + $0x20] sm:$0xff pattern:$0x73625140]
      %v658 = vld.sshfl [vmem:[#allocation1 + $0x28] sm:$0xff pattern:$0x73625140]
      %v660 = vld.sshfl [vmem:[#allocation1 + $0x30] sm:$0xff pattern:$0x73625140]
      %v662 = vld.sshfl [vmem:[#allocation1 + $0x38] sm:$0xff pattern:$0x73625140]
      %664 = vst [vmem:[%s646] ss:$4 sm:$0xff] %v363
      %665 = vst [vmem:[%s648] ss:$4 sm:$0xff] %v364
      %v666 = vld.sshfl [vmem:[#allocation1] sm:$0xff pattern:$0x73625140]
      %v668 = vld.sshfl [vmem:[#allocation1 + $0x8] sm:$0xff pattern:$0x73625140]
      %v670 = vld.sshfl [vmem:[#allocation1 + $0x10] sm:$0xff pattern:$0x73625140]
      %v672 = vld.sshfl [vmem:[#allocation1 + $0x18] sm:$0xff pattern:$0x73625140]
      %v674 = vld.sshfl [vmem:[#allocation1 + $0x20] sm:$0xff pattern:$0x73625140]
      %676 = vrot.lane.b32.xlu0 %v650, 36
      %v677 = vpop.permute.xlu0 %676
      %678 = vrot.lane.b32.xlu0 %v652, 36
      %v679 = vpop.permute.xlu0 %678
      %680 = vrot.lane.b32.xlu0 %v654, 36
      %v681 = vpop.permute.xlu0 %680
      %682 = vrot.lane.b32.xlu0 %v656, 36
      %v683 = vpop.permute.xlu0 %682
      %684 = vrot.lane.b32.xlu0 %v658, 36
      %v685 = vpop.permute.xlu0 %684
      %686 = vrot.lane.b32.xlu0 %v660, 36
      %v687 = vpop.permute.xlu0 %686
      %688 = vrot.lane.b32.xlu0 %v662, 36
      %v689 = vpop.permute.xlu0 %688
      %690 = vrot.lane.b32.xlu0 %v666, 36
      %v691 = vpop.permute.xlu0 %690
      %692 = vrot.lane.b32.xlu0 %v668, 36
      %v693 = vpop.permute.xlu0 %692
      %694 = vrot.lane.b32.xlu0 %v670, 36
      %v695 = vpop.permute.xlu0 %694
      %696 = vrot.lane.b32.xlu0 %v672, 36
      %v697 = vpop.permute.xlu0 %696
      %698 = vrot.lane.b32.xlu0 %v674, 36
      %v699 = vpop.permute.xlu0 %698
      %vm700 = vcmask 293888
      %v701 = vsel %vm700, %v677, %v679
      %v702 = vsel %vm700, %v679, %v681
      %v703 = vsel %vm700, %v681, %v683
      %v704 = vsel %vm700, %v683, %v685
      %v705 = vsel %vm700, %v685, %v687
      %v706 = vsel %vm700, %v687, %v689
      %v707 = vsel %vm700, %v689, %v691
      %v708 = vsel %vm700, %v691, %v693
      %v709 = vsel %vm700, %v693, %v695
      %v710 = vsel %vm700, %v695, %v697
      %v711 = vsel %vm700, %v697, %v699
      %s712 = scalar_lea.vmem [#allocation1], 2
      %713 = vst [vmem:[%s712] ss:$4 sm:$0xff] %v361
      %s714 = scalar_lea.vmem [#allocation1], 34
      %715 = vst [vmem:[%s714] ss:$4 sm:$0xff] %v362
      %v716 = vld.sshfl [vmem:[#allocation1 + $0x10] sm:$0xff pattern:$0x73625140]
      %v718 = vld.sshfl [vmem:[#allocation1 + $0x18] sm:$0xff pattern:$0x73625140]
      %v720 = vld.sshfl [vmem:[#allocation1 + $0x20] sm:$0xff pattern:$0x73625140]
      %v722 = vld.sshfl [vmem:[#allocation1 + $0x28] sm:$0xff pattern:$0x73625140]
      %v724 = vld.sshfl [vmem:[#allocation1 + $0x30] sm:$0xff pattern:$0x73625140]
      %v726 = vld.sshfl [vmem:[#allocation1 + $0x38] sm:$0xff pattern:$0x73625140]
      %728 = vst [vmem:[%s712] ss:$4 sm:$0xff] %v363
      %729 = vst [vmem:[%s714] ss:$4 sm:$0xff] %v364
      %v730 = vld.sshfl [vmem:[#allocation1] sm:$0xff pattern:$0x73625140]
      %v732 = vld.sshfl [vmem:[#allocation1 + $0x8] sm:$0xff pattern:$0x73625140]
      %v734 = vld.sshfl [vmem:[#allocation1 + $0x10] sm:$0xff pattern:$0x73625140]
      %v736 = vld.sshfl [vmem:[#allocation1 + $0x18] sm:$0xff pattern:$0x73625140]
      %v738 = vld.sshfl [vmem:[#allocation1 + $0x20] sm:$0xff pattern:$0x73625140]
      %v740 = vld.sshfl [vmem:[#allocation1 + $0x28] sm:$0xff pattern:$0x73625140]
      %742 = vrot.lane.b32.xlu0 %v716, 120
      %v743 = vpop.permute.xlu0 %742
      %744 = vrot.lane.b32.xlu0 %v718, 120
      %v745 = vpop.permute.xlu0 %744
      %746 = vrot.lane.b32.xlu0 %v720, 120
      %v747 = vpop.permute.xlu0 %746
      %748 = vrot.lane.b32.xlu0 %v722, 120
      %v749 = vpop.permute.xlu0 %748
      %750 = vrot.lane.b32.xlu0 %v724, 120
      %v751 = vpop.permute.xlu0 %750
      %752 = vrot.lane.b32.xlu0 %v726, 120
      %v753 = vpop.permute.xlu0 %752
      %754 = vrot.lane.b32.xlu0 %v730, 120
      %v755 = vpop.permute.xlu0 %754
      %756 = vrot.lane.b32.xlu0 %v732, 120
      %v757 = vpop.permute.xlu0 %756
      %758 = vrot.lane.b32.xlu0 %v734, 120
      %v759 = vpop.permute.xlu0 %758
      %760 = vrot.lane.b32.xlu0 %v736, 120
      %v761 = vpop.permute.xlu0 %760
      %762 = vrot.lane.b32.xlu0 %v738, 120
      %v763 = vpop.permute.xlu0 %762
      %764 = vrot.lane.b32.xlu0 %v740, 120
      %v765 = vpop.permute.xlu0 %764
      %vm766 = vcmask 982016
      %v767 = vsel %vm766, %v743, %v745
      %v768 = vsel %vm766, %v745, %v747
      %v769 = vsel %vm766, %v747, %v749
      %v770 = vsel %vm766, %v749, %v751
      %v771 = vsel %vm766, %v751, %v753
      %v772 = vsel %vm766, %v753, %v755
      %v773 = vsel %vm766, %v755, %v757
      %v774 = vsel %vm766, %v757, %v759
      %v775 = vsel %vm766, %v759, %v761
      %v776 = vsel %vm766, %v761, %v763
      %v777 = vsel %vm766, %v763, %v765
      %s778 = scalar_lea.vmem [#allocation1], 3
      %779 = vst [vmem:[%s778] ss:$4 sm:$0xff] %v361
      %s780 = scalar_lea.vmem [#allocation1], 35
      %781 = vst [vmem:[%s780] ss:$4 sm:$0xff] %v362
      %v782 = vld.sshfl [vmem:[#allocation1 + $0x10] sm:$0xff pattern:$0x73625140]
      %v784 = vld.sshfl [vmem:[#allocation1 + $0x18] sm:$0xff pattern:$0x73625140]
      %v786 = vld.sshfl [vmem:[#allocation1 + $0x20] sm:$0xff pattern:$0x73625140]
      %v788 = vld.sshfl [vmem:[#allocation1 + $0x28] sm:$0xff pattern:$0x73625140]
      %v790 = vld.sshfl [vmem:[#allocation1 + $0x30] sm:$0xff pattern:$0x73625140]
      %v792 = vld.sshfl [vmem:[#allocation1 + $0x38] sm:$0xff pattern:$0x73625140]
      %794 = vst [vmem:[%s778] ss:$4 sm:$0xff] %v363
      %795 = vst [vmem:[%s780] ss:$4 sm:$0xff] %v364
      %v796 = vld.sshfl [vmem:[#allocation1] sm:$0xff pattern:$0x73625140]
      %v798 = vld.sshfl [vmem:[#allocation1 + $0x8] sm:$0xff pattern:$0x73625140]
      %v800 = vld.sshfl [vmem:[#allocation1 + $0x10] sm:$0xff pattern:$0x73625140]
      %v802 = vld.sshfl [vmem:[#allocation1 + $0x18] sm:$0xff pattern:$0x73625140]
      %v804 = vld.sshfl [vmem:[#allocation1 + $0x20] sm:$0xff pattern:$0x73625140]
      %v806 = vld.sshfl [vmem:[#allocation1 + $0x28] sm:$0xff pattern:$0x73625140]
      %808 = vrot.lane.b32.xlu0 %v782, 76
      %v809 = vpop.permute.xlu0 %808
      %810 = vrot.lane.b32.xlu0 %v784, 76
      %v811 = vpop.permute.xlu0 %810
      %812 = vrot.lane.b32.xlu0 %v786, 76
      %v813 = vpop.permute.xlu0 %812
      %814 = vrot.lane.b32.xlu0 %v788, 76
      %v815 = vpop.permute.xlu0 %814
      %816 = vrot.lane.b32.xlu0 %v790, 76
      %v817 = vpop.permute.xlu0 %816
      %818 = vrot.lane.b32.xlu0 %v792, 76
      %v819 = vpop.permute.xlu0 %818
      %820 = vrot.lane.b32.xlu0 %v796, 76
      %v821 = vpop.permute.xlu0 %820
      %822 = vrot.lane.b32.xlu0 %v798, 76
      %v823 = vpop.permute.xlu0 %822
      %824 = vrot.lane.b32.xlu0 %v800, 76
      %v825 = vpop.permute.xlu0 %824
      %826 = vrot.lane.b32.xlu0 %v802, 76
      %v827 = vpop.permute.xlu0 %826
      %828 = vrot.lane.b32.xlu0 %v804, 76
      %v829 = vpop.permute.xlu0 %828
      %830 = vrot.lane.b32.xlu0 %v806, 76
      %v831 = vpop.permute.xlu0 %830
      %vm832 = vcmask 621568
      %v833 = vsel %vm832, %v809, %v811
      %v834 = vsel %vm832, %v811, %v813
      %v835 = vsel %vm832, %v813, %v815
      %v836 = vsel %vm832, %v815, %v817
      %v837 = vsel %vm832, %v817, %v819
      %v838 = vsel %vm832, %v819, %v821
      %v839 = vsel %vm832, %v821, %v823
      %v840 = vsel %vm832, %v823, %v825
      %v841 = vsel %vm832, %v825, %v827
      %v842 = vsel %vm832, %v827, %v829
      %v843 = vsel %vm832, %v829, %v831
      %844 = vst [vmem:[#allocation1] ss:$4 sm:$0xff] %v361
      %s845 = scalar_lea.vmem [#allocation1], 32
      %846 = vst [vmem:[%s845] ss:$4 sm:$0xff] %v362
      %v847 = vld.sshfl [vmem:[#allocation1 + $0x10] sm:$0xff pattern:$0x73625140]
      %v849 = vld.sshfl [vmem:[#allocation1 + $0x18] sm:$0xff pattern:$0x73625140]
      %v851 = vld.sshfl [vmem:[#allocation1 + $0x20] sm:$0xff pattern:$0x73625140]
      %v853 = vld.sshfl [vmem:[#allocation1 + $0x28] sm:$0xff pattern:$0x73625140]
      %v855 = vld.sshfl [vmem:[#allocation1 + $0x30] sm:$0xff pattern:$0x73625140]
      %v857 = vld.sshfl [vmem:[#allocation1 + $0x38] sm:$0xff pattern:$0x73625140]
      %859 = vst [vmem:[#allocation1] ss:$4 sm:$0xff] %v363
      %860 = vst [vmem:[%s845] ss:$4 sm:$0xff] %v364
      %v861 = vld.sshfl [vmem:[#allocation1] sm:$0xff pattern:$0x73625140]
      %v863 = vld.sshfl [vmem:[#allocation1 + $0x8] sm:$0xff pattern:$0x73625140]
      %v865 = vld.sshfl [vmem:[#allocation1 + $0x10] sm:$0xff pattern:$0x73625140]
      %v867 = vld.sshfl [vmem:[#allocation1 + $0x18] sm:$0xff pattern:$0x73625140]
      %v869 = vld.sshfl [vmem:[#allocation1 + $0x20] sm:$0xff pattern:$0x73625140]
      %v871 = vld.sshfl [vmem:[#allocation1 + $0x28] sm:$0xff pattern:$0x73625140]
      %873 = vrot.lane.b32.xlu0 %v847, 32
      %v874 = vpop.permute.xlu0 %873
      %875 = vrot.lane.b32.xlu0 %v849, 32
      %v876 = vpop.permute.xlu0 %875
      %877 = vrot.lane.b32.xlu0 %v851, 32
      %v878 = vpop.permute.xlu0 %877
      %879 = vrot.lane.b32.xlu0 %v853, 32
      %v880 = vpop.permute.xlu0 %879
      %881 = vrot.lane.b32.xlu0 %v855, 32
      %v882 = vpop.permute.xlu0 %881
      %883 = vrot.lane.b32.xlu0 %v857, 32
      %v884 = vpop.permute.xlu0 %883
      %885 = vrot.lane.b32.xlu0 %v861, 32
      %v886 = vpop.permute.xlu0 %885
      %887 = vrot.lane.b32.xlu0 %v863, 32
      %v888 = vpop.permute.xlu0 %887
      %889 = vrot.lane.b32.xlu0 %v865, 32
      %v890 = vpop.permute.xlu0 %889
      %891 = vrot.lane.b32.xlu0 %v867, 32
      %v892 = vpop.permute.xlu0 %891
      %893 = vrot.lane.b32.xlu0 %v869, 32
      %v894 = vpop.permute.xlu0 %893
      %895 = vrot.lane.b32.xlu0 %v871, 32
      %v896 = vpop.permute.xlu0 %895
      %vm897 = vcmask 261120
      %v898 = vsel %vm897, %v874, %v876
      %v899 = vsel %vm897, %v876, %v878
      %v900 = vsel %vm897, %v878, %v880
      %v901 = vsel %vm897, %v880, %v882
      %v902 = vsel %vm897, %v882, %v884
      %v903 = vsel %vm897, %v884, %v886
      %v904 = vsel %vm897, %v886, %v888
      %v905 = vsel %vm897, %v888, %v890
      %v906 = vsel %vm897, %v890, %v892
      %v907 = vsel %vm897, %v892, %v894
      %v908 = vsel %vm897, %v894, %v896
      %s909 = scalar_lea.vmem [#allocation1], 1
      %910 = vst [vmem:[%s909] ss:$4 sm:$0xff] %v361
      %s911 = scalar_lea.vmem [#allocation1], 33
      %912 = vst [vmem:[%s911] ss:$4 sm:$0xff] %v362
      %v913 = vld.sshfl [vmem:[#allocation1 + $0x18] sm:$0xff pattern:$0x73625140]
      %v915 = vld.sshfl [vmem:[#allocation1 + $0x20] sm:$0xff pattern:$0x73625140]
      %v917 = vld.sshfl [vmem:[#allocation1 + $0x28] sm:$0xff pattern:$0x73625140]
      %v919 = vld.sshfl [vmem:[#allocation1 + $0x30] sm:$0xff pattern:$0x73625140]
      %v921 = vld.sshfl [vmem:[#allocation1 + $0x38] sm:$0xff pattern:$0x73625140]
      %923 = vst [vmem:[%s909] ss:$4 sm:$0xff] %v363
      %924 = vst [vmem:[%s911] ss:$4 sm:$0xff] %v364
      %v925 = vld.sshfl [vmem:[#allocation1] sm:$0xff pattern:$0x73625140]
      %v927 = vld.sshfl [vmem:[#allocation1 + $0x8] sm:$0xff pattern:$0x73625140]
      %v929 = vld.sshfl [vmem:[#allocation1 + $0x10] sm:$0xff pattern:$0x73625140]
      %v931 = vld.sshfl [vmem:[#allocation1 + $0x18] sm:$0xff pattern:$0x73625140]
      %v933 = vld.sshfl [vmem:[#allocation1 + $0x20] sm:$0xff pattern:$0x73625140]
      %v935 = vld.sshfl [vmem:[#allocation1 + $0x28] sm:$0xff pattern:$0x73625140]
      %v937 = vld.sshfl [vmem:[#allocation1 + $0x30] sm:$0xff pattern:$0x73625140]
      %939 = vrot.lane.b32.xlu0 %v913, 116
      %v940 = vpop.permute.xlu0 %939
      %941 = vrot.lane.b32.xlu0 %v915, 116
      %v942 = vpop.permute.xlu0 %941
      %943 = vrot.lane.b32.xlu0 %v917, 116
      %v944 = vpop.permute.xlu0 %943
      %945 = vrot.lane.b32.xlu0 %v919, 116
      %v946 = vpop.permute.xlu0 %945
      %947 = vrot.lane.b32.xlu0 %v921, 116
      %v948 = vpop.permute.xlu0 %947
      %949 = vrot.lane.b32.xlu0 %v925, 116
      %v950 = vpop.permute.xlu0 %949
      %951 = vrot.lane.b32.xlu0 %v927, 116
      %v952 = vpop.permute.xlu0 %951
      %953 = vrot.lane.b32.xlu0 %v929, 116
      %v954 = vpop.permute.xlu0 %953
      %955 = vrot.lane.b32.xlu0 %v931, 116
      %v956 = vpop.permute.xlu0 %955
      %957 = vrot.lane.b32.xlu0 %v933, 116
      %v958 = vpop.permute.xlu0 %957
      %959 = vrot.lane.b32.xlu0 %v935, 116
      %v960 = vpop.permute.xlu0 %959
      %961 = vrot.lane.b32.xlu0 %v937, 116
      %v962 = vpop.permute.xlu0 %961
      %vm963 = vcmask 949248
      %v964 = vsel %vm963, %v940, %v942
      %v965 = vsel %vm963, %v942, %v944
      %v966 = vsel %vm963, %v944, %v946
      %v967 = vsel %vm963, %v946, %v948
      %v968 = vsel %vm963, %v948, %v950
      %v969 = vsel %vm963, %v950, %v952
      %v970 = vsel %vm963, %v952, %v954
      %v971 = vsel %vm963, %v954, %v956
      %v972 = vsel %vm963, %v956, %v958
      %v973 = vsel %vm963, %v958, %v960
      %v974 = vsel %vm963, %v960, %v962
      %s975 = scalar_lea.vmem [#allocation1], 2
      %976 = vst [vmem:[%s975] ss:$4 sm:$0xff] %v361
      %s977 = scalar_lea.vmem [#allocation1], 34
      %978 = vst [vmem:[%s977] ss:$4 sm:$0xff] %v362
      %v979 = vld.sshfl [vmem:[#allocation1 + $0x18] sm:$0xff pattern:$0x73625140]
      %v981 = vld.sshfl [vmem:[#allocation1 + $0x20] sm:$0xff pattern:$0x73625140]
      %v983 = vld.sshfl [vmem:[#allocation1 + $0x28] sm:$0xff pattern:$0x73625140]
      %v985 = vld.sshfl [vmem:[#allocation1 + $0x30] sm:$0xff pattern:$0x73625140]
      %v987 = vld.sshfl [vmem:[#allocation1 + $0x38] sm:$0xff pattern:$0x73625140]
      %989 = vst [vmem:[%s975] ss:$4 sm:$0xff] %v363
      %990 = vst [vmem:[%s977] ss:$4 sm:$0xff] %v364
      %v991 = vld.sshfl [vmem:[#allocation1] sm:$0xff pattern:$0x73625140]
      %v993 = vld.sshfl [vmem:[#allocation1 + $0x8] sm:$0xff pattern:$0x73625140]
      %v995 = vld.sshfl [vmem:[#allocation1 + $0x10] sm:$0xff pattern:$0x73625140]
      %v997 = vld.sshfl [vmem:[#allocation1 + $0x18] sm:$0xff pattern:$0x73625140]
      %v999 = vld.sshfl [vmem:[#allocation1 + $0x20] sm:$0xff pattern:$0x73625140]
      %v1001 = vld.sshfl [vmem:[#allocation1 + $0x28] sm:$0xff pattern:$0x73625140]
      %v1003 = vld.sshfl [vmem:[#allocation1 + $0x30] sm:$0xff pattern:$0x73625140]
      %1005 = vrot.lane.b32.xlu0 %v979, 72
      %v1006 = vpop.permute.xlu0 %1005
      %1007 = vrot.lane.b32.xlu0 %v981, 72
      %v1008 = vpop.permute.xlu0 %1007
      %1009 = vrot.lane.b32.xlu0 %v983, 72
      %v1010 = vpop.permute.xlu0 %1009
      %1011 = vrot.lane.b32.xlu0 %v985, 72
      %v1012 = vpop.permute.xlu0 %1011
      %1013 = vrot.lane.b32.xlu0 %v987, 72
      %v1014 = vpop.permute.xlu0 %1013
      %1015 = vrot.lane.b32.xlu0 %v991, 72
      %v1016 = vpop.permute.xlu0 %1015
      %1017 = vrot.lane.b32.xlu0 %v993, 72
      %v1018 = vpop.permute.xlu0 %1017
      %1019 = vrot.lane.b32.xlu0 %v995, 72
      %v1020 = vpop.permute.xlu0 %1019
      %1021 = vrot.lane.b32.xlu0 %v997, 72
      %v1022 = vpop.permute.xlu0 %1021
      %1023 = vrot.lane.b32.xlu0 %v999, 72
      %v1024 = vpop.permute.xlu0 %1023
      %1025 = vrot.lane.b32.xlu0 %v1001, 72
      %v1026 = vpop.permute.xlu0 %1025
      %1027 = vrot.lane.b32.xlu0 %v1003, 72
      %v1028 = vpop.permute.xlu0 %1027
      %vm1029 = vcmask 588800
      %v1030 = vsel %vm1029, %v1006, %v1008
      %v1031 = vsel %vm1029, %v1008, %v1010
      %v1032 = vsel %vm1029, %v1010, %v1012
      %v1033 = vsel %vm1029, %v1012, %v1014
      %v1034 = vsel %vm1029, %v1014, %v1016
      %v1035 = vsel %vm1029, %v1016, %v1018
      %v1036 = vsel %vm1029, %v1018, %v1020
      %v1037 = vsel %vm1029, %v1020, %v1022
      %v1038 = vsel %vm1029, %v1022, %v1024
      %v1039 = vsel %vm1029, %v1024, %v1026
      %v1040 = vsel %vm1029, %v1026, %v1028
      %s1041 = scalar_lea.vmem [#allocation1], 3
      %1042 = vst [vmem:[%s1041] ss:$4 sm:$0xff] %v361
      %s1043 = scalar_lea.vmem [#allocation1], 35
      %1044 = vst [vmem:[%s1043] ss:$4 sm:$0xff] %v362
      %v1045 = vld.sshfl [vmem:[#allocation1 + $0x18] sm:$0xff pattern:$0x73625140]
      %v1047 = vld.sshfl [vmem:[#allocation1 + $0x20] sm:$0xff pattern:$0x73625140]
      %v1049 = vld.sshfl [vmem:[#allocation1 + $0x28] sm:$0xff pattern:$0x73625140]
      %v1051 = vld.sshfl [vmem:[#allocation1 + $0x30] sm:$0xff pattern:$0x73625140]
      %v1053 = vld.sshfl [vmem:[#allocation1 + $0x38] sm:$0xff pattern:$0x73625140]
      %1055 = vst [vmem:[%s1041] ss:$4 sm:$0xff] %v363
      %1056 = vst [vmem:[%s1043] ss:$4 sm:$0xff] %v364
      %v1057 = vld.sshfl [vmem:[#allocation1] sm:$0xff pattern:$0x73625140]
      %v1059 = vld.sshfl [vmem:[#allocation1 + $0x8] sm:$0xff pattern:$0x73625140]
      %v1061 = vld.sshfl [vmem:[#allocation1 + $0x10] sm:$0xff pattern:$0x73625140]
      %v1063 = vld.sshfl [vmem:[#allocation1 + $0x18] sm:$0xff pattern:$0x73625140]
      %v1065 = vld.sshfl [vmem:[#allocation1 + $0x20] sm:$0xff pattern:$0x73625140]
      %v1067 = vld.sshfl [vmem:[#allocation1 + $0x28] sm:$0xff pattern:$0x73625140]
      %v1069 = vld.sshfl [vmem:[#allocation1 + $0x30] sm:$0xff pattern:$0x73625140]
      %1071 = vrot.lane.b32.xlu0 %v1045, 28
      %v1072 = vpop.permute.xlu0 %1071
      %1073 = vrot.lane.b32.xlu0 %v1047, 28
      %v1074 = vpop.permute.xlu0 %1073
      %1075 = vrot.lane.b32.xlu0 %v1049, 28
      %v1076 = vpop.permute.xlu0 %1075
      %1077 = vrot.lane.b32.xlu0 %v1051, 28
      %v1078 = vpop.permute.xlu0 %1077
      %1079 = vrot.lane.b32.xlu0 %v1053, 28
      %v1080 = vpop.permute.xlu0 %1079
      %1081 = vrot.lane.b32.xlu0 %v1057, 28
      %v1082 = vpop.permute.xlu0 %1081
      %1083 = vrot.lane.b32.xlu0 %v1059, 28
      %v1084 = vpop.permute.xlu0 %1083
      %1085 = vrot.lane.b32.xlu0 %v1061, 28
      %v1086 = vpop.permute.xlu0 %1085
      %1087 = vrot.lane.b32.xlu0 %v1063, 28
      %v1088 = vpop.permute.xlu0 %1087
      %1089 = vrot.lane.b32.xlu0 %v1065, 28
      %v1090 = vpop.permute.xlu0 %1089
      %1091 = vrot.lane.b32.xlu0 %v1067, 28
      %v1092 = vpop.permute.xlu0 %1091
      %1093 = vrot.lane.b32.xlu0 %v1069, 28
      %v1094 = vpop.permute.xlu0 %1093
      %vm1095 = vcmask 228352
      %v1096 = vsel %vm1095, %v1072, %v1074
      %v1097 = vsel %vm1095, %v1074, %v1076
      %v1098 = vsel %vm1095, %v1076, %v1078
      %v1099 = vsel %vm1095, %v1078, %v1080
      %v1100 = vsel %vm1095, %v1080, %v1082
      %v1101 = vsel %vm1095, %v1082, %v1084
      %v1102 = vsel %vm1095, %v1084, %v1086
      %v1103 = vsel %vm1095, %v1086, %v1088
      %v1104 = vsel %vm1095, %v1088, %v1090
      %v1105 = vsel %vm1095, %v1090, %v1092
      %v1106 = vsel %vm1095, %v1092, %v1094
      %1107 = vst [vmem:[#allocation1] ss:$4 sm:$0xff] %v362
      %s1108 = scalar_lea.vmem [#allocation1], 32
      %1109 = vst [vmem:[%s1108] ss:$4 sm:$0xff] %v363
      %v1110 = vld.sshfl [vmem:[#allocation1] sm:$0xff pattern:$0x73625140]
      %v1112 = vld.sshfl [vmem:[#allocation1 + $0x8] sm:$0xff pattern:$0x73625140]
      %v1114 = vld.sshfl [vmem:[#allocation1 + $0x10] sm:$0xff pattern:$0x73625140]
      %v1116 = vld.sshfl [vmem:[#allocation1 + $0x18] sm:$0xff pattern:$0x73625140]
      %v1118 = vld.sshfl [vmem:[#allocation1 + $0x20] sm:$0xff pattern:$0x73625140]
      %v1120 = vld.sshfl [vmem:[#allocation1 + $0x28] sm:$0xff pattern:$0x73625140]
      %v1122 = vld.sshfl [vmem:[#allocation1 + $0x30] sm:$0xff pattern:$0x73625140]
      %v1124 = vld.sshfl [vmem:[#allocation1 + $0x38] sm:$0xff pattern:$0x73625140]
      %1126 = vst [vmem:[#allocation1] ss:$4 sm:$0xff] %v364
      %v1127 = vld.sshfl [vmem:[#allocation1] sm:$0xff pattern:$0x73625140]
      %v1129 = vld.sshfl [vmem:[#allocation1 + $0x8] sm:$0xff pattern:$0x73625140]
      %v1131 = vld.sshfl [vmem:[#allocation1 + $0x10] sm:$0xff pattern:$0x73625140]
      %v1133 = vld.sshfl [vmem:[#allocation1 + $0x18] sm:$0xff pattern:$0x73625140]
      %1135 = vrot.lane.b32.xlu0 %v1110, 112
      %v1136 = vpop.permute.xlu0 %1135
      %1137 = vrot.lane.b32.xlu0 %v1112, 112
      %v1138 = vpop.permute.xlu0 %1137
      %1139 = vrot.lane.b32.xlu0 %v1114, 112
      %v1140 = vpop.permute.xlu0 %1139
      %1141 = vrot.lane.b32.xlu0 %v1116, 112
      %v1142 = vpop.permute.xlu0 %1141
      %1143 = vrot.lane.b32.xlu0 %v1118, 112
      %v1144 = vpop.permute.xlu0 %1143
      %1145 = vrot.lane.b32.xlu0 %v1120, 112
      %v1146 = vpop.permute.xlu0 %1145
      %1147 = vrot.lane.b32.xlu0 %v1122, 112
      %v1148 = vpop.permute.xlu0 %1147
      %1149 = vrot.lane.b32.xlu0 %v1124, 112
      %v1150 = vpop.permute.xlu0 %1149
      %1151 = vrot.lane.b32.xlu0 %v1127, 112
      %v1152 = vpop.permute.xlu0 %1151
      %1153 = vrot.lane.b32.xlu0 %v1129, 112
      %v1154 = vpop.permute.xlu0 %1153
      %1155 = vrot.lane.b32.xlu0 %v1131, 112
      %v1156 = vpop.permute.xlu0 %1155
      %1157 = vrot.lane.b32.xlu0 %v1133, 112
      %v1158 = vpop.permute.xlu0 %1157
      %vm1159 = vcmask 916480
      %v1160 = vsel %vm1159, %v1136, %v1138
      %v1161 = vsel %vm1159, %v1138, %v1140
      %v1162 = vsel %vm1159, %v1140, %v1142
      %v1163 = vsel %vm1159, %v1142, %v1144
      %v1164 = vsel %vm1159, %v1144, %v1146
      %v1165 = vsel %vm1159, %v1146, %v1148
      %v1166 = vsel %vm1159, %v1148, %v1150
      %v1167 = vsel %vm1159, %v1150, %v1152
      %v1168 = vsel %vm1159, %v1152, %v1154
      %v1169 = vsel %vm1159, %v1154, %v1156
      %v1170 = vsel %vm1159, %v1156, %v1158
      %vm1171 = vcmask 1041408
      %v1173 = vsel %vm1171, %v370, %v438
      %v1175 = vsel %vm1171, %v371, %v439
      %v1177 = vsel %vm1171, %v372, %v440
      %v1179 = vsel %vm1171, %v373, %v441
      %v1181 = vsel %vm1171, %v374, %v442
      %v1183 = vsel %vm1171, %v375, %v443
      %v1185 = vsel %vm1171, %v376, %v444
      %v1187 = vsel %vm1171, %v377, %v445
      %v1189 = vsel %vm1171, %v380, %v446
      %v1191 = vsel %vm1171, %v381, %v447
      %v1193 = vsel %vm1171, %v382, %v448
      %v1195 = vsel %vm1171, %v383, %v436
      %vm1196 = vcmask 1043456
      %v1198 = vsel %vm1196, %v1173, %v503
      %v1200 = vsel %vm1196, %v1175, %v504
      %v1202 = vsel %vm1196, %v1177, %v505
      %v1204 = vsel %vm1196, %v1179, %v506
      %v1206 = vsel %vm1196, %v1181, %v507
      %v1208 = vsel %vm1196, %v1183, %v508
      %v1210 = vsel %vm1196, %v1185, %v509
      %v1212 = vsel %vm1196, %v1187, %v510
      %v1214 = vsel %vm1196, %v1189, %v511
      %v1216 = vsel %vm1196, %v1191, %v512
      %v1218 = vsel %vm1196, %v1193, %v513
      %v1220 = vsel %vm1196, %v1195, %v501
      %vm1221 = vcmask 1045504
      %v1223 = vsel %vm1221, %v1198, %v570
      %v1226 = vsel %vm1221, %v1200, %v571
      %v1229 = vsel %vm1221, %v1202, %v572
      %v1232 = vsel %vm1221, %v1204, %v573
      %v1235 = vsel %vm1221, %v1206, %v574
      %v1238 = vsel %vm1221, %v1208, %v575
      %v1241 = vsel %vm1221, %v1210, %v576
      %v1244 = vsel %vm1221, %v1212, %v577
      %v1247 = vsel %vm1221, %v1214, %v578
      %v1250 = vsel %vm1221, %v1216, %v579
      %v1253 = vsel %vm1221, %v1218, %v580
      %v1256 = vsel %vm1221, %v1220, %v568
      %v1260 = vsel %vm1171, %v635, %v701
      %v1263 = vsel %vm1171, %v636, %v702
      %v1266 = vsel %vm1171, %v637, %v703
      %v1269 = vsel %vm1171, %v638, %v704
      %v1272 = vsel %vm1171, %v639, %v705
      %v1275 = vsel %vm1171, %v640, %v706
      %v1278 = vsel %vm1171, %v641, %v707
      %v1281 = vsel %vm1171, %v642, %v708
      %v1284 = vsel %vm1171, %v643, %v709
      %v1287 = vsel %vm1171, %v644, %v710
      %v1290 = vsel %vm1171, %v645, %v711
      %v1293 = vsel %vm1171, %v633, %v699
      %v1295 = vsel %vm1196, %v1260, %v767
      %v1297 = vsel %vm1196, %v1263, %v768
      %v1299 = vsel %vm1196, %v1266, %v769
      %v1301 = vsel %vm1196, %v1269, %v770
      %v1303 = vsel %vm1196, %v1272, %v771
      %v1305 = vsel %vm1196, %v1275, %v772
      %v1307 = vsel %vm1196, %v1278, %v773
      %v1309 = vsel %vm1196, %v1281, %v774
      %v1311 = vsel %vm1196, %v1284, %v775
      %v1313 = vsel %vm1196, %v1287, %v776
      %v1315 = vsel %vm1196, %v1290, %v777
      %v1317 = vsel %vm1196, %v1293, %v765
      %v1319 = vsel %vm1221, %v1295, %v833
      %v1322 = vsel %vm1221, %v1297, %v834
      %v1325 = vsel %vm1221, %v1299, %v835
      %v1328 = vsel %vm1221, %v1301, %v836
      %v1331 = vsel %vm1221, %v1303, %v837
      %v1334 = vsel %vm1221, %v1305, %v838
      %v1337 = vsel %vm1221, %v1307, %v839
      %v1340 = vsel %vm1221, %v1309, %v840
      %v1343 = vsel %vm1221, %v1311, %v841
      %v1346 = vsel %vm1221, %v1313, %v842
      %v1349 = vsel %vm1221, %v1315, %v843
      %v1352 = vsel %vm1221, %v1317, %v831
      %v1356 = vsel %vm1171, %v898, %v964
      %v1359 = vsel %vm1171, %v899, %v965
      %v1362 = vsel %vm1171, %v900, %v966
      %v1365 = vsel %vm1171, %v901, %v967
      %v1368 = vsel %vm1171, %v902, %v968
      %v1371 = vsel %vm1171, %v903, %v969
      %v1374 = vsel %vm1171, %v904, %v970
      %v1377 = vsel %vm1171, %v905, %v971
      %v1380 = vsel %vm1171, %v906, %v972
      %v1383 = vsel %vm1171, %v907, %v973
      %v1386 = vsel %vm1171, %v908, %v974
      %v1389 = vsel %vm1171, %v896, %v962
      %v1391 = vsel %vm1196, %v1356, %v1030
      %v1393 = vsel %vm1196, %v1359, %v1031
      %v1395 = vsel %vm1196, %v1362, %v1032
      %v1397 = vsel %vm1196, %v1365, %v1033
      %v1399 = vsel %vm1196, %v1368, %v1034
      %v1401 = vsel %vm1196, %v1371, %v1035
      %v1403 = vsel %vm1196, %v1374, %v1036
      %v1405 = vsel %vm1196, %v1377, %v1037
      %v1407 = vsel %vm1196, %v1380, %v1038
      %v1409 = vsel %vm1196, %v1383, %v1039
      %v1411 = vsel %vm1196, %v1386, %v1040
      %v1413 = vsel %vm1196, %v1389, %v1028
      %v1415 = vsel %vm1221, %v1391, %v1096
      %v1418 = vsel %vm1221, %v1393, %v1097
      %v1421 = vsel %vm1221, %v1395, %v1098
      %v1424 = vsel %vm1221, %v1397, %v1099
      %v1427 = vsel %vm1221, %v1399, %v1100
      %v1430 = vsel %vm1221, %v1401, %v1101
      %v1433 = vsel %vm1221, %v1403, %v1102
      %v1436 = vsel %vm1221, %v1405, %v1103
      %v1439 = vsel %vm1221, %v1407, %v1104
      %v1442 = vsel %vm1221, %v1409, %v1105
      %v1445 = vsel %vm1221, %v1411, %v1106
      %v1448 = vsel %vm1221, %v1413, %v1094
      %v1450 = vld [vmem:[%s1] sm:$0xf]
      %v1451 = vld [vmem:[%s5] sm:$0xff]
      %v1452 = vld [vmem:[%s8] sm:$0xff]
      %v1453 = vld [vmem:[%s8 + $0x8] sm:$0xf]
      %1455 = vset.pattern.permute.xlu0 0
      %1456 = vperm.xlu0 %1455, %v1451
      %v1457 = vpop.permute.xlu0 %1456
      %v1461 = vperm.slane %v1452, 0
      %v1462 = vperm.slane %v1452, 1
      %v1463 = vperm.slane %v1452, 2
      %v1464 = vperm.slane %v1452, 3
      %v1465 = vperm.slane %v1452, 4
      %v1466 = vperm.slane %v1452, 5
      %v1467 = vperm.slane %v1452, 6
      %v1468 = vperm.slane %v1452, 7
      %v1469 = vperm.slane %v1453, 0
      %v1470 = vperm.slane %v1453, 1
      %v1471 = vperm.slane %v1453, 2
      %v1472 = vperm.slane %v1453, 3
      %v1485 = vmul.f32 %v1457, %v1461
      %v1486 = vmul.f32 %v1457, %v1462
      %v1487 = vmul.f32 %v1457, %v1463
      %v1488 = vmul.f32 %v1457, %v1464
      %v1489 = vmul.f32 %v1457, %v1465
      %v1490 = vmul.f32 %v1457, %v1466
      %v1491 = vmul.f32 %v1457, %v1467
      %v1492 = vmul.f32 %v1457, %v1468
      %v1493 = vmul.f32 %v1457, %v1469
      %v1494 = vmul.f32 %v1457, %v1470
      %v1495 = vmul.f32 %v1457, %v1471
      %v1496 = vmul.f32 %v1457, %v1472
      %vm1497 = vcmask 424960
      %v1499 = vsel %vm1497, %v1450, 0
      %v1502 = vsel %vm1171, %v1160, 0
      %v1505 = vsel %vm1171, %v1161, 0
      %v1508 = vsel %vm1171, %v1162, 0
      %v1511 = vsel %vm1171, %v1163, 0
      %v1514 = vsel %vm1171, %v1164, 0
      %v1517 = vsel %vm1171, %v1165, 0
      %v1520 = vsel %vm1171, %v1166, 0
      %v1523 = vsel %vm1171, %v1167, 0
      %v1526 = vsel %vm1171, %v1168, 0
      %v1529 = vsel %vm1171, %v1169, 0
      %v1532 = vsel %vm1171, %v1170, 0
      %v1535 = vsel %vm1171, %v1158, 0
      %1537 = vmatpush.bf16.msra.mxu0 0
      %1538 = vmatpush.bf16.msra.mxu0 0
      %1539 = vmatpush.bf16.msra.mxu0 0
      %1540 = vmatpush.bf16.msra.mxu0 0
      %1541 = vmatpush.bf16.msra.mxu0 %v1502
      %1542 = vmatpush.bf16.msra.mxu0 %v1415
      %1543 = vmatpush.bf16.msra.mxu0 %v1319
      %1544 = vmatpush.bf16.msra.mxu0 %v1223
      %1545 = vmatmul.bf16.gmra.mxu0 %v1499
      %v1546 = vpop.f32.mrf.mxu0
      %v1547 = vadd.f32 %v1485, %v1546
      %v1548 = vpop.f32.mrf.mxu0
      %1549 = vdwg.mxu0
      %1550 = vmatpush.bf16.msra.mxu0 0
      %1551 = vmatpush.bf16.msra.mxu0 0
      %1552 = vmatpush.bf16.msra.mxu0 0
      %1553 = vmatpush.bf16.msra.mxu0 0
      %1554 = vmatpush.bf16.msra.mxu0 %v1505
      %1555 = vmatpush.bf16.msra.mxu0 %v1418
      %1556 = vmatpush.bf16.msra.mxu0 %v1322
      %1557 = vmatpush.bf16.msra.mxu0 %v1226
      %1558 = vmatmul.bf16.gmra.mxu0 %v1499
      %v1559 = vpop.f32.mrf.mxu0
      %v1560 = vadd.f32 %v1486, %v1559
      %v1561 = vpop.f32.mrf.mxu0
      %1562 = vdwg.mxu0
      %1563 = vmatpush.bf16.msra.mxu0 0
      %1564 = vmatpush.bf16.msra.mxu0 0
      %1565 = vmatpush.bf16.msra.mxu0 0
      %1566 = vmatpush.bf16.msra.mxu0 0
      %1567 = vmatpush.bf16.msra.mxu0 %v1508
      %1568 = vmatpush.bf16.msra.mxu0 %v1421
      %1569 = vmatpush.bf16.msra.mxu0 %v1325
      %1570 = vmatpush.bf16.msra.mxu0 %v1229
      %1571 = vmatmul.bf16.gmra.mxu0 %v1499
      %v1572 = vpop.f32.mrf.mxu0
      %v1573 = vadd.f32 %v1487, %v1572
      %v1574 = vpop.f32.mrf.mxu0
      %1575 = vdwg.mxu0
      %1576 = vmatpush.bf16.msra.mxu0 0
      %1577 = vmatpush.bf16.msra.mxu0 0
      %1578 = vmatpush.bf16.msra.mxu0 0
      %1579 = vmatpush.bf16.msra.mxu0 0
      %1580 = vmatpush.bf16.msra.mxu0 %v1511
      %1581 = vmatpush.bf16.msra.mxu0 %v1424
      %1582 = vmatpush.bf16.msra.mxu0 %v1328
      %1583 = vmatpush.bf16.msra.mxu0 %v1232
      %1584 = vmatmul.bf16.gmra.mxu0 %v1499
      %v1585 = vpop.f32.mrf.mxu0
      %v1586 = vadd.f32 %v1488, %v1585
      %v1587 = vpop.f32.mrf.mxu0
      %1588 = vdwg.mxu0
      %1589 = vmatpush.bf16.msra.mxu0 0
      %1590 = vmatpush.bf16.msra.mxu0 0
      %1591 = vmatpush.bf16.msra.mxu0 0
      %1592 = vmatpush.bf16.msra.mxu0 0
      %1593 = vmatpush.bf16.msra.mxu0 %v1514
      %1594 = vmatpush.bf16.msra.mxu0 %v1427
      %1595 = vmatpush.bf16.msra.mxu0 %v1331
      %1596 = vmatpush.bf16.msra.mxu0 %v1235
      %1597 = vmatmul.bf16.gmra.mxu0 %v1499
      %v1598 = vpop.f32.mrf.mxu0
      %v1599 = vadd.f32 %v1489, %v1598
      %v1600 = vpop.f32.mrf.mxu0
      %1601 = vdwg.mxu0
      %1602 = vmatpush.bf16.msra.mxu0 0
      %1603 = vmatpush.bf16.msra.mxu0 0
      %1604 = vmatpush.bf16.msra.mxu0 0
      %1605 = vmatpush.bf16.msra.mxu0 0
      %1606 = vmatpush.bf16.msra.mxu0 %v1517
      %1607 = vmatpush.bf16.msra.mxu0 %v1430
      %1608 = vmatpush.bf16.msra.mxu0 %v1334
      %1609 = vmatpush.bf16.msra.mxu0 %v1238
      %1610 = vmatmul.bf16.gmra.mxu0 %v1499
      %v1611 = vpop.f32.mrf.mxu0
      %v1612 = vadd.f32 %v1490, %v1611
      %v1613 = vpop.f32.mrf.mxu0
      %1614 = vdwg.mxu0
      %1615 = vmatpush.bf16.msra.mxu0 0
      %1616 = vmatpush.bf16.msra.mxu0 0
      %1617 = vmatpush.bf16.msra.mxu0 0
      %1618 = vmatpush.bf16.msra.mxu0 0
      %1619 = vmatpush.bf16.msra.mxu0 %v1520
      %1620 = vmatpush.bf16.msra.mxu0 %v1433
      %1621 = vmatpush.bf16.msra.mxu0 %v1337
      %1622 = vmatpush.bf16.msra.mxu0 %v1241
      %1623 = vmatmul.bf16.gmra.mxu0 %v1499
      %v1624 = vpop.f32.mrf.mxu0
      %v1625 = vadd.f32 %v1491, %v1624
      %v1626 = vpop.f32.mrf.mxu0
      %1627 = vdwg.mxu0
      %1628 = vmatpush.bf16.msra.mxu0 0
      %1629 = vmatpush.bf16.msra.mxu0 0
      %1630 = vmatpush.bf16.msra.mxu0 0
      %1631 = vmatpush.bf16.msra.mxu0 0
      %1632 = vmatpush.bf16.msra.mxu0 %v1523
      %1633 = vmatpush.bf16.msra.mxu0 %v1436
      %1634 = vmatpush.bf16.msra.mxu0 %v1340
      %1635 = vmatpush.bf16.msra.mxu0 %v1244
      %1636 = vmatmul.bf16.gmra.mxu0 %v1499
      %v1637 = vpop.f32.mrf.mxu0
      %v1638 = vadd.f32 %v1492, %v1637
      %v1639 = vpop.f32.mrf.mxu0
      %1640 = vdwg.mxu0
      %1641 = vmatpush.bf16.msra.mxu0 0
      %1642 = vmatpush.bf16.msra.mxu0 0
      %1643 = vmatpush.bf16.msra.mxu0 0
      %1644 = vmatpush.bf16.msra.mxu0 0
      %1645 = vmatpush.bf16.msra.mxu0 %v1526
      %1646 = vmatpush.bf16.msra.mxu0 %v1439
      %1647 = vmatpush.bf16.msra.mxu0 %v1343
      %1648 = vmatpush.bf16.msra.mxu0 %v1247
      %1649 = vmatmul.bf16.gmra.mxu0 %v1499
      %v1650 = vpop.f32.mrf.mxu0
      %v1651 = vadd.f32 %v1493, %v1650
      %v1652 = vpop.f32.mrf.mxu0
      %1653 = vdwg.mxu0
      %1654 = vmatpush.bf16.msra.mxu0 0
      %1655 = vmatpush.bf16.msra.mxu0 0
      %1656 = vmatpush.bf16.msra.mxu0 0
      %1657 = vmatpush.bf16.msra.mxu0 0
      %1658 = vmatpush.bf16.msra.mxu0 %v1529
      %1659 = vmatpush.bf16.msra.mxu0 %v1442
      %1660 = vmatpush.bf16.msra.mxu0 %v1346
      %1661 = vmatpush.bf16.msra.mxu0 %v1250
      %1662 = vmatmul.bf16.gmra.mxu0 %v1499
      %v1663 = vpop.f32.mrf.mxu0
      %v1664 = vadd.f32 %v1494, %v1663
      %v1665 = vpop.f32.mrf.mxu0
      %1666 = vdwg.mxu0
      %1667 = vmatpush.bf16.msra.mxu0 0
      %1668 = vmatpush.bf16.msra.mxu0 0
      %1669 = vmatpush.bf16.msra.mxu0 0
      %1670 = vmatpush.bf16.msra.mxu0 0
      %1671 = vmatpush.bf16.msra.mxu0 %v1532
      %1672 = vmatpush.bf16.msra.mxu0 %v1445
      %1673 = vmatpush.bf16.msra.mxu0 %v1349
      %1674 = vmatpush.bf16.msra.mxu0 %v1253
      %1675 = vmatmul.bf16.gmra.mxu0 %v1499
      %v1676 = vpop.f32.mrf.mxu0
      %v1677 = vadd.f32 %v1495, %v1676
      %v1678 = vpop.f32.mrf.mxu0
      %1679 = vdwg.mxu0
      %1680 = vmatpush.bf16.msra.mxu0 0
      %1681 = vmatpush.bf16.msra.mxu0 0
      %1682 = vmatpush.bf16.msra.mxu0 0
      %1683 = vmatpush.bf16.msra.mxu0 0
      %1684 = vmatpush.bf16.msra.mxu0 %v1535
      %1685 = vmatpush.bf16.msra.mxu0 %v1448
      %1686 = vmatpush.bf16.msra.mxu0 %v1352
      %1687 = vmatpush.bf16.msra.mxu0 %v1256
      %1688 = vmatmul.bf16.gmra.mxu0 %v1499
      %v1689 = vpop.f32.mrf.mxu0
      %v1690 = vadd.f32 %v1496, %v1689
      %v1691 = vpop.f32.mrf.mxu0
      %1692 = vdwg.mxu0
      %v1693 = vpack.c.bf16 %v1560, %v1547
      %v1694 = vpack.c.bf16 %v1586, %v1573
      %v1695 = vpack.c.bf16 %v1612, %v1599
      %v1696 = vpack.c.bf16 %v1638, %v1625
      %v1697 = vpack.c.bf16 %v1664, %v1651
      %v1698 = vpack.c.bf16 %v1690, %v1677
      %v1705 = vunpack.c.l.b16 %v1693
      %v1706 = vunpack.c.h.b16 %v1693
      %v1707 = vunpack.c.l.b16 %v1694
      %v1708 = vunpack.c.h.b16 %v1694
      %v1709 = vunpack.c.l.b16 %v1695
      %v1710 = vunpack.c.h.b16 %v1695
      %v1711 = vunpack.c.l.b16 %v1696
      %v1712 = vunpack.c.h.b16 %v1696
      %v1713 = vunpack.c.l.b16 %v1697
      %v1714 = vunpack.c.h.b16 %v1697
      %v1715 = vunpack.c.l.b16 %v1698
      %v1716 = vpack.c.b16 %v1705, %v1705
      %v1717 = vpack.c.b16 %v1706, %v1706
      %v1718 = vpack.c.b16 %v1707, %v1707
      %v1719 = vpack.c.b16 %v1708, %v1708
      %v1720 = vpack.c.b16 %v1709, %v1709
      %v1721 = vpack.c.b16 %v1710, %v1710
      %v1722 = vpack.c.b16 %v1711, %v1711
      %v1723 = vpack.c.b16 %v1712, %v1712
      %v1724 = vpack.c.b16 %v1713, %v1713
      %v1725 = vpack.c.b16 %v1714, %v1714
      %v1726 = vpack.c.b16 %v1715, %v1715
      %v1727 = vunpack.c.h.b16 %v1698
      %v1728 = vpack.c.b16 %v1727, %v1727
      %1729 = vrot.lane.b32.xlu0 %v1716, 127
      %v1730 = vpop.permute.xlu0 %1729
      %1731 = vrot.lane.b32.xlu0 %v1717, 127
      %v1732 = vpop.permute.xlu0 %1731
      %1733 = vrot.lane.b32.xlu0 %v1718, 127
      %v1734 = vpop.permute.xlu0 %1733
      %1735 = vrot.lane.b32.xlu0 %v1719, 127
      %v1736 = vpop.permute.xlu0 %1735
      %1737 = vrot.lane.b32.xlu0 %v1720, 127
      %v1738 = vpop.permute.xlu0 %1737
      %1739 = vrot.lane.b32.xlu0 %v1721, 127
      %v1740 = vpop.permute.xlu0 %1739
      %1741 = vrot.lane.b32.xlu0 %v1722, 127
      %v1742 = vpop.permute.xlu0 %1741
      %1743 = vrot.lane.b32.xlu0 %v1723, 127
      %v1744 = vpop.permute.xlu0 %1743
      %1745 = vrot.lane.b32.xlu0 %v1724, 127
      %v1746 = vpop.permute.xlu0 %1745
      %1747 = vrot.lane.b32.xlu0 %v1725, 127
      %v1748 = vpop.permute.xlu0 %1747
      %1749 = vrot.lane.b32.xlu0 %v1726, 127
      %v1750 = vpop.permute.xlu0 %1749
      %1751 = vrot.lane.b32.xlu0 %v1728, 127
      %v1752 = vpop.permute.xlu0 %1751
      %vm1753 = vcmask 1039360
      %v1754 = vsel %vm1753, %v1730, %v1732
      %v1755 = vsel %vm1753, %v1732, %v1734
      %v1756 = vsel %vm1753, %v1734, %v1736
      %v1757 = vsel %vm1753, %v1736, %v1738
      %v1758 = vsel %vm1753, %v1738, %v1740
      %v1759 = vsel %vm1753, %v1740, %v1742
      %v1760 = vsel %vm1753, %v1742, %v1744
      %v1761 = vsel %vm1753, %v1744, %v1746
      %v1762 = vsel %vm1753, %v1746, %v1748
      %v1763 = vsel %vm1753, %v1748, %v1750
      %v1764 = vsel %vm1753, %v1750, %v1752
      %1765 = vrot.lane.b32.xlu0 %v1716, 126
      %v1766 = vpop.permute.xlu0 %1765
      %1767 = vrot.lane.b32.xlu0 %v1717, 126
      %v1768 = vpop.permute.xlu0 %1767
      %1769 = vrot.lane.b32.xlu0 %v1718, 126
      %v1770 = vpop.permute.xlu0 %1769
      %1771 = vrot.lane.b32.xlu0 %v1719, 126
      %v1772 = vpop.permute.xlu0 %1771
      %1773 = vrot.lane.b32.xlu0 %v1720, 126
      %v1774 = vpop.permute.xlu0 %1773
      %1775 = vrot.lane.b32.xlu0 %v1721, 126
      %v1776 = vpop.permute.xlu0 %1775
      %1777 = vrot.lane.b32.xlu0 %v1722, 126
      %v1778 = vpop.permute.xlu0 %1777
      %1779 = vrot.lane.b32.xlu0 %v1723, 126
      %v1780 = vpop.permute.xlu0 %1779
      %1781 = vrot.lane.b32.xlu0 %v1724, 126
      %v1782 = vpop.permute.xlu0 %1781
      %1783 = vrot.lane.b32.xlu0 %v1725, 126
      %v1784 = vpop.permute.xlu0 %1783
      %1785 = vrot.lane.b32.xlu0 %v1726, 126
      %v1786 = vpop.permute.xlu0 %1785
      %1787 = vrot.lane.b32.xlu0 %v1728, 126
      %v1788 = vpop.permute.xlu0 %1787
      %vm1789 = vcmask 1031168
      %v1790 = vsel %vm1789, %v1766, %v1768
      %v1791 = vsel %vm1789, %v1768, %v1770
      %v1792 = vsel %vm1789, %v1770, %v1772
      %v1793 = vsel %vm1789, %v1772, %v1774
      %v1794 = vsel %vm1789, %v1774, %v1776
      %v1795 = vsel %vm1789, %v1776, %v1778
      %v1796 = vsel %vm1789, %v1778, %v1780
      %v1797 = vsel %vm1789, %v1780, %v1782
      %v1798 = vsel %vm1789, %v1782, %v1784
      %v1799 = vsel %vm1789, %v1784, %v1786
      %v1800 = vsel %vm1789, %v1786, %v1788
      %1801 = vrot.lane.b32.xlu0 %v1716, 125
      %v1802 = vpop.permute.xlu0 %1801
      %1803 = vrot.lane.b32.xlu0 %v1717, 125
      %v1804 = vpop.permute.xlu0 %1803
      %1805 = vrot.lane.b32.xlu0 %v1718, 125
      %v1806 = vpop.permute.xlu0 %1805
      %1807 = vrot.lane.b32.xlu0 %v1719, 125
      %v1808 = vpop.permute.xlu0 %1807
      %1809 = vrot.lane.b32.xlu0 %v1720, 125
      %v1810 = vpop.permute.xlu0 %1809
      %1811 = vrot.lane.b32.xlu0 %v1721, 125
      %v1812 = vpop.permute.xlu0 %1811
      %1813 = vrot.lane.b32.xlu0 %v1722, 125
      %v1814 = vpop.permute.xlu0 %1813
      %1815 = vrot.lane.b32.xlu0 %v1723, 125
      %v1816 = vpop.permute.xlu0 %1815
      %1817 = vrot.lane.b32.xlu0 %v1724, 125
      %v1818 = vpop.permute.xlu0 %1817
      %1819 = vrot.lane.b32.xlu0 %v1725, 125
      %v1820 = vpop.permute.xlu0 %1819
      %1821 = vrot.lane.b32.xlu0 %v1726, 125
      %v1822 = vpop.permute.xlu0 %1821
      %1823 = vrot.lane.b32.xlu0 %v1728, 125
      %v1824 = vpop.permute.xlu0 %1823
      %vm1825 = vcmask 1022976
      %v1826 = vsel %vm1825, %v1802, %v1804
      %v1827 = vsel %vm1825, %v1804, %v1806
      %v1828 = vsel %vm1825, %v1806, %v1808
      %v1829 = vsel %vm1825, %v1808, %v1810
      %v1830 = vsel %vm1825, %v1810, %v1812
      %v1831 = vsel %vm1825, %v1812, %v1814
      %v1832 = vsel %vm1825, %v1814, %v1816
      %v1833 = vsel %vm1825, %v1816, %v1818
      %v1834 = vsel %vm1825, %v1818, %v1820
      %v1835 = vsel %vm1825, %v1820, %v1822
      %v1836 = vsel %vm1825, %v1822, %v1824
      %1837 = vrot.lane.b32.xlu0 %v1716, 124
      %v1838 = vpop.permute.xlu0 %1837
      %1839 = vrot.lane.b32.xlu0 %v1717, 124
      %v1840 = vpop.permute.xlu0 %1839
      %1841 = vrot.lane.b32.xlu0 %v1718, 124
      %v1842 = vpop.permute.xlu0 %1841
      %1843 = vrot.lane.b32.xlu0 %v1719, 124
      %v1844 = vpop.permute.xlu0 %1843
      %1845 = vrot.lane.b32.xlu0 %v1720, 124
      %v1846 = vpop.permute.xlu0 %1845
      %1847 = vrot.lane.b32.xlu0 %v1721, 124
      %v1848 = vpop.permute.xlu0 %1847
      %1849 = vrot.lane.b32.xlu0 %v1722, 124
      %v1850 = vpop.permute.xlu0 %1849
      %1851 = vrot.lane.b32.xlu0 %v1723, 124
      %v1852 = vpop.permute.xlu0 %1851
      %1853 = vrot.lane.b32.xlu0 %v1724, 124
      %v1854 = vpop.permute.xlu0 %1853
      %1855 = vrot.lane.b32.xlu0 %v1725, 124
      %v1856 = vpop.permute.xlu0 %1855
      %1857 = vrot.lane.b32.xlu0 %v1726, 124
      %v1858 = vpop.permute.xlu0 %1857
      %1859 = vrot.lane.b32.xlu0 %v1728, 124
      %v1860 = vpop.permute.xlu0 %1859
      %v1861 = vsel %vm569, %v1838, %v1840
      %v1862 = vsel %vm569, %v1840, %v1842
      %v1863 = vsel %vm569, %v1842, %v1844
      %v1864 = vsel %vm569, %v1844, %v1846
      %v1865 = vsel %vm569, %v1846, %v1848
      %v1866 = vsel %vm569, %v1848, %v1850
      %v1867 = vsel %vm569, %v1850, %v1852
      %v1868 = vsel %vm569, %v1852, %v1854
      %v1869 = vsel %vm569, %v1854, %v1856
      %v1870 = vsel %vm569, %v1856, %v1858
      %v1871 = vsel %vm569, %v1858, %v1860
      %1872 = vrot.lane.b32.xlu0 %v1716, 123
      %v1873 = vpop.permute.xlu0 %1872
      %1874 = vrot.lane.b32.xlu0 %v1717, 123
      %v1875 = vpop.permute.xlu0 %1874
      %1876 = vrot.lane.b32.xlu0 %v1718, 123
      %v1877 = vpop.permute.xlu0 %1876
      %1878 = vrot.lane.b32.xlu0 %v1719, 123
      %v1879 = vpop.permute.xlu0 %1878
      %1880 = vrot.lane.b32.xlu0 %v1720, 123
      %v1881 = vpop.permute.xlu0 %1880
      %1882 = vrot.lane.b32.xlu0 %v1721, 123
      %v1883 = vpop.permute.xlu0 %1882
      %1884 = vrot.lane.b32.xlu0 %v1722, 123
      %v1885 = vpop.permute.xlu0 %1884
      %1886 = vrot.lane.b32.xlu0 %v1723, 123
      %v1887 = vpop.permute.xlu0 %1886
      %1888 = vrot.lane.b32.xlu0 %v1724, 123
      %v1889 = vpop.permute.xlu0 %1888
      %1890 = vrot.lane.b32.xlu0 %v1725, 123
      %v1891 = vpop.permute.xlu0 %1890
      %1892 = vrot.lane.b32.xlu0 %v1726, 123
      %v1893 = vpop.permute.xlu0 %1892
      %1894 = vrot.lane.b32.xlu0 %v1728, 123
      %v1895 = vpop.permute.xlu0 %1894
      %vm1896 = vcmask 1006592
      %v1897 = vsel %vm1896, %v1873, %v1875
      %v1898 = vsel %vm1896, %v1875, %v1877
      %v1899 = vsel %vm1896, %v1877, %v1879
      %v1900 = vsel %vm1896, %v1879, %v1881
      %v1901 = vsel %vm1896, %v1881, %v1883
      %v1902 = vsel %vm1896, %v1883, %v1885
      %v1903 = vsel %vm1896, %v1885, %v1887
      %v1904 = vsel %vm1896, %v1887, %v1889
      %v1905 = vsel %vm1896, %v1889, %v1891
      %v1906 = vsel %vm1896, %v1891, %v1893
      %v1907 = vsel %vm1896, %v1893, %v1895
      %1908 = vrot.lane.b32.xlu0 %v1716, 122
      %v1909 = vpop.permute.xlu0 %1908
      %1910 = vrot.lane.b32.xlu0 %v1717, 122
      %v1911 = vpop.permute.xlu0 %1910
      %1912 = vrot.lane.b32.xlu0 %v1718, 122
      %v1913 = vpop.permute.xlu0 %1912
      %1914 = vrot.lane.b32.xlu0 %v1719, 122
      %v1915 = vpop.permute.xlu0 %1914
      %1916 = vrot.lane.b32.xlu0 %v1720, 122
      %v1917 = vpop.permute.xlu0 %1916
      %1918 = vrot.lane.b32.xlu0 %v1721, 122
      %v1919 = vpop.permute.xlu0 %1918
      %1920 = vrot.lane.b32.xlu0 %v1722, 122
      %v1921 = vpop.permute.xlu0 %1920
      %1922 = vrot.lane.b32.xlu0 %v1723, 122
      %v1923 = vpop.permute.xlu0 %1922
      %1924 = vrot.lane.b32.xlu0 %v1724, 122
      %v1925 = vpop.permute.xlu0 %1924
      %1926 = vrot.lane.b32.xlu0 %v1725, 122
      %v1927 = vpop.permute.xlu0 %1926
      %1928 = vrot.lane.b32.xlu0 %v1726, 122
      %v1929 = vpop.permute.xlu0 %1928
      %1930 = vrot.lane.b32.xlu0 %v1728, 122
      %v1931 = vpop.permute.xlu0 %1930
      %vm1932 = vcmask 998400
      %v1933 = vsel %vm1932, %v1909, %v1911
      %v1934 = vsel %vm1932, %v1911, %v1913
      %v1935 = vsel %vm1932, %v1913, %v1915
      %v1936 = vsel %vm1932, %v1915, %v1917
      %v1937 = vsel %vm1932, %v1917, %v1919
      %v1938 = vsel %vm1932, %v1919, %v1921
      %v1939 = vsel %vm1932, %v1921, %v1923
      %v1940 = vsel %vm1932, %v1923, %v1925
      %v1941 = vsel %vm1932, %v1925, %v1927
      %v1942 = vsel %vm1932, %v1927, %v1929
      %v1943 = vsel %vm1932, %v1929, %v1931
      %1944 = vrot.lane.b32.xlu0 %v1716, 121
      %v1945 = vpop.permute.xlu0 %1944
      %1946 = vrot.lane.b32.xlu0 %v1717, 121
      %v1947 = vpop.permute.xlu0 %1946
      %1948 = vrot.lane.b32.xlu0 %v1718, 121
      %v1949 = vpop.permute.xlu0 %1948
      %1950 = vrot.lane.b32.xlu0 %v1719, 121
      %v1951 = vpop.permute.xlu0 %1950
      %1952 = vrot.lane.b32.xlu0 %v1720, 121
      %v1953 = vpop.permute.xlu0 %1952
      %1954 = vrot.lane.b32.xlu0 %v1721, 121
      %v1955 = vpop.permute.xlu0 %1954
      %1956 = vrot.lane.b32.xlu0 %v1722, 121
      %v1957 = vpop.permute.xlu0 %1956
      %1958 = vrot.lane.b32.xlu0 %v1723, 121
      %v1959 = vpop.permute.xlu0 %1958
      %1960 = vrot.lane.b32.xlu0 %v1724, 121
      %v1961 = vpop.permute.xlu0 %1960
      %1962 = vrot.lane.b32.xlu0 %v1725, 121
      %v1963 = vpop.permute.xlu0 %1962
      %1964 = vrot.lane.b32.xlu0 %v1726, 121
      %v1965 = vpop.permute.xlu0 %1964
      %1966 = vrot.lane.b32.xlu0 %v1728, 121
      %v1967 = vpop.permute.xlu0 %1966
      %vm1968 = vcmask 990208
      %v1969 = vsel %vm1968, %v1945, %v1947
      %v1970 = vsel %vm1968, %v1947, %v1949
      %v1971 = vsel %vm1968, %v1949, %v1951
      %v1972 = vsel %vm1968, %v1951, %v1953
      %v1973 = vsel %vm1968, %v1953, %v1955
      %v1974 = vsel %vm1968, %v1955, %v1957
      %v1975 = vsel %vm1968, %v1957, %v1959
      %v1976 = vsel %vm1968, %v1959, %v1961
      %v1977 = vsel %vm1968, %v1961, %v1963
      %v1978 = vsel %vm1968, %v1963, %v1965
      %v1979 = vsel %vm1968, %v1965, %v1967
      %1980 = vrot.lane.b32.xlu0 %v1716, 120
      %v1981 = vpop.permute.xlu0 %1980
      %1982 = vrot.lane.b32.xlu0 %v1717, 120
      %v1983 = vpop.permute.xlu0 %1982
      %1984 = vrot.lane.b32.xlu0 %v1718, 120
      %v1985 = vpop.permute.xlu0 %1984
      %1986 = vrot.lane.b32.xlu0 %v1719, 120
      %v1987 = vpop.permute.xlu0 %1986
      %1988 = vrot.lane.b32.xlu0 %v1720, 120
      %v1989 = vpop.permute.xlu0 %1988
      %1990 = vrot.lane.b32.xlu0 %v1721, 120
      %v1991 = vpop.permute.xlu0 %1990
      %1992 = vrot.lane.b32.xlu0 %v1722, 120
      %v1993 = vpop.permute.xlu0 %1992
      %1994 = vrot.lane.b32.xlu0 %v1723, 120
      %v1995 = vpop.permute.xlu0 %1994
      %1996 = vrot.lane.b32.xlu0 %v1724, 120
      %v1997 = vpop.permute.xlu0 %1996
      %1998 = vrot.lane.b32.xlu0 %v1725, 120
      %v1999 = vpop.permute.xlu0 %1998
      %2000 = vrot.lane.b32.xlu0 %v1726, 120
      %v2001 = vpop.permute.xlu0 %2000
      %2002 = vrot.lane.b32.xlu0 %v1728, 120
      %v2003 = vpop.permute.xlu0 %2002
      %v2004 = vsel %vm766, %v1981, %v1983
      %v2005 = vsel %vm766, %v1983, %v1985
      %v2006 = vsel %vm766, %v1985, %v1987
      %v2007 = vsel %vm766, %v1987, %v1989
      %v2008 = vsel %vm766, %v1989, %v1991
      %v2009 = vsel %vm766, %v1991, %v1993
      %v2010 = vsel %vm766, %v1993, %v1995
      %v2011 = vsel %vm766, %v1995, %v1997
      %v2012 = vsel %vm766, %v1997, %v1999
      %v2013 = vsel %vm766, %v1999, %v2001
      %v2014 = vsel %vm766, %v2001, %v2003
      %2015 = vrot.lane.b32.xlu0 %v1716, 119
      %v2016 = vpop.permute.xlu0 %2015
      %2017 = vrot.lane.b32.xlu0 %v1717, 119
      %v2018 = vpop.permute.xlu0 %2017
      %2019 = vrot.lane.b32.xlu0 %v1718, 119
      %v2020 = vpop.permute.xlu0 %2019
      %2021 = vrot.lane.b32.xlu0 %v1719, 119
      %v2022 = vpop.permute.xlu0 %2021
      %2023 = vrot.lane.b32.xlu0 %v1720, 119
      %v2024 = vpop.permute.xlu0 %2023
      %2025 = vrot.lane.b32.xlu0 %v1721, 119
      %v2026 = vpop.permute.xlu0 %2025
      %2027 = vrot.lane.b32.xlu0 %v1722, 119
      %v2028 = vpop.permute.xlu0 %2027
      %2029 = vrot.lane.b32.xlu0 %v1723, 119
      %v2030 = vpop.permute.xlu0 %2029
      %2031 = vrot.lane.b32.xlu0 %v1724, 119
      %v2032 = vpop.permute.xlu0 %2031
      %2033 = vrot.lane.b32.xlu0 %v1725, 119
      %v2034 = vpop.permute.xlu0 %2033
      %2035 = vrot.lane.b32.xlu0 %v1726, 119
      %v2036 = vpop.permute.xlu0 %2035
      %2037 = vrot.lane.b32.xlu0 %v1728, 119
      %v2038 = vpop.permute.xlu0 %2037
      %vm2039 = vcmask 973824
      %v2040 = vsel %vm2039, %v2016, %v2018
      %v2041 = vsel %vm2039, %v2018, %v2020
      %v2042 = vsel %vm2039, %v2020, %v2022
      %v2043 = vsel %vm2039, %v2022, %v2024
      %v2044 = vsel %vm2039, %v2024, %v2026
      %v2045 = vsel %vm2039, %v2026, %v2028
      %v2046 = vsel %vm2039, %v2028, %v2030
      %v2047 = vsel %vm2039, %v2030, %v2032
      %v2048 = vsel %vm2039, %v2032, %v2034
      %v2049 = vsel %vm2039, %v2034, %v2036
      %v2050 = vsel %vm2039, %v2036, %v2038
      %2051 = vrot.lane.b32.xlu0 %v1716, 118
      %v2052 = vpop.permute.xlu0 %2051
      %2053 = vrot.lane.b32.xlu0 %v1717, 118
      %v2054 = vpop.permute.xlu0 %2053
      %2055 = vrot.lane.b32.xlu0 %v1718, 118
      %v2056 = vpop.permute.xlu0 %2055
      %2057 = vrot.lane.b32.xlu0 %v1719, 118
      %v2058 = vpop.permute.xlu0 %2057
      %2059 = vrot.lane.b32.xlu0 %v1720, 118
      %v2060 = vpop.permute.xlu0 %2059
      %2061 = vrot.lane.b32.xlu0 %v1721, 118
      %v2062 = vpop.permute.xlu0 %2061
      %2063 = vrot.lane.b32.xlu0 %v1722, 118
      %v2064 = vpop.permute.xlu0 %2063
      %2065 = vrot.lane.b32.xlu0 %v1723, 118
      %v2066 = vpop.permute.xlu0 %2065
      %2067 = vrot.lane.b32.xlu0 %v1724, 118
      %v2068 = vpop.permute.xlu0 %2067
      %2069 = vrot.lane.b32.xlu0 %v1725, 118
      %v2070 = vpop.permute.xlu0 %2069
      %2071 = vrot.lane.b32.xlu0 %v1726, 118
      %v2072 = vpop.permute.xlu0 %2071
      %2073 = vrot.lane.b32.xlu0 %v1728, 118
      %v2074 = vpop.permute.xlu0 %2073
      %vm2075 = vcmask 965632
      %v2076 = vsel %vm2075, %v2052, %v2054
      %v2077 = vsel %vm2075, %v2054, %v2056
      %v2078 = vsel %vm2075, %v2056, %v2058
      %v2079 = vsel %vm2075, %v2058, %v2060
      %v2080 = vsel %vm2075, %v2060, %v2062
      %v2081 = vsel %vm2075, %v2062, %v2064
      %v2082 = vsel %vm2075, %v2064, %v2066
      %v2083 = vsel %vm2075, %v2066, %v2068
      %v2084 = vsel %vm2075, %v2068, %v2070
      %v2085 = vsel %vm2075, %v2070, %v2072
      %v2086 = vsel %vm2075, %v2072, %v2074
      %2087 = vrot.lane.b32.xlu0 %v1716, 117
      %v2088 = vpop.permute.xlu0 %2087
      %2089 = vrot.lane.b32.xlu0 %v1717, 117
      %v2090 = vpop.permute.xlu0 %2089
      %2091 = vrot.lane.b32.xlu0 %v1718, 117
      %v2092 = vpop.permute.xlu0 %2091
      %2093 = vrot.lane.b32.xlu0 %v1719, 117
      %v2094 = vpop.permute.xlu0 %2093
      %2095 = vrot.lane.b32.xlu0 %v1720, 117
      %v2096 = vpop.permute.xlu0 %2095
      %2097 = vrot.lane.b32.xlu0 %v1721, 117
      %v2098 = vpop.permute.xlu0 %2097
      %2099 = vrot.lane.b32.xlu0 %v1722, 117
      %v2100 = vpop.permute.xlu0 %2099
      %2101 = vrot.lane.b32.xlu0 %v1723, 117
      %v2102 = vpop.permute.xlu0 %2101
      %2103 = vrot.lane.b32.xlu0 %v1724, 117
      %v2104 = vpop.permute.xlu0 %2103
      %2105 = vrot.lane.b32.xlu0 %v1725, 117
      %v2106 = vpop.permute.xlu0 %2105
      %2107 = vrot.lane.b32.xlu0 %v1726, 117
      %v2108 = vpop.permute.xlu0 %2107
      %2109 = vrot.lane.b32.xlu0 %v1728, 117
      %v2110 = vpop.permute.xlu0 %2109
      %vm2111 = vcmask 957440
      %v2112 = vsel %vm2111, %v2088, %v2090
      %v2113 = vsel %vm2111, %v2090, %v2092
      %v2114 = vsel %vm2111, %v2092, %v2094
      %v2115 = vsel %vm2111, %v2094, %v2096
      %v2116 = vsel %vm2111, %v2096, %v2098
      %v2117 = vsel %vm2111, %v2098, %v2100
      %v2118 = vsel %vm2111, %v2100, %v2102
      %v2119 = vsel %vm2111, %v2102, %v2104
      %v2120 = vsel %vm2111, %v2104, %v2106
      %v2121 = vsel %vm2111, %v2106, %v2108
      %v2122 = vsel %vm2111, %v2108, %v2110
      %2123 = vrot.lane.b32.xlu0 %v1716, 116
      %v2124 = vpop.permute.xlu0 %2123
      %2125 = vrot.lane.b32.xlu0 %v1717, 116
      %v2126 = vpop.permute.xlu0 %2125
      %2127 = vrot.lane.b32.xlu0 %v1718, 116
      %v2128 = vpop.permute.xlu0 %2127
      %2129 = vrot.lane.b32.xlu0 %v1719, 116
      %v2130 = vpop.permute.xlu0 %2129
      %2131 = vrot.lane.b32.xlu0 %v1720, 116
      %v2132 = vpop.permute.xlu0 %2131
      %2133 = vrot.lane.b32.xlu0 %v1721, 116
      %v2134 = vpop.permute.xlu0 %2133
      %2135 = vrot.lane.b32.xlu0 %v1722, 116
      %v2136 = vpop.permute.xlu0 %2135
      %2137 = vrot.lane.b32.xlu0 %v1723, 116
      %v2138 = vpop.permute.xlu0 %2137
      %2139 = vrot.lane.b32.xlu0 %v1724, 116
      %v2140 = vpop.permute.xlu0 %2139
      %2141 = vrot.lane.b32.xlu0 %v1725, 116
      %v2142 = vpop.permute.xlu0 %2141
      %2143 = vrot.lane.b32.xlu0 %v1726, 116
      %v2144 = vpop.permute.xlu0 %2143
      %2145 = vrot.lane.b32.xlu0 %v1728, 116
      %v2146 = vpop.permute.xlu0 %2145
      %v2147 = vsel %vm963, %v2124, %v2126
      %v2148 = vsel %vm963, %v2126, %v2128
      %v2149 = vsel %vm963, %v2128, %v2130
      %v2150 = vsel %vm963, %v2130, %v2132
      %v2151 = vsel %vm963, %v2132, %v2134
      %v2152 = vsel %vm963, %v2134, %v2136
      %v2153 = vsel %vm963, %v2136, %v2138
      %v2154 = vsel %vm963, %v2138, %v2140
      %v2155 = vsel %vm963, %v2140, %v2142
      %v2156 = vsel %vm963, %v2142, %v2144
      %v2157 = vsel %vm963, %v2144, %v2146
      %v2160 = vsel %vm1196, %v1716, %v1754
      %v2164 = vsel %vm1196, %v1717, %v1755
      %v2168 = vsel %vm1196, %v1718, %v1756
      %v2172 = vsel %vm1196, %v1719, %v1757
      %v2176 = vsel %vm1196, %v1720, %v1758
      %v2180 = vsel %vm1196, %v1721, %v1759
      %v2184 = vsel %vm1196, %v1722, %v1760
      %v2188 = vsel %vm1196, %v1723, %v1761
      %v2192 = vsel %vm1196, %v1724, %v1762
      %v2196 = vsel %vm1196, %v1725, %v1763
      %v2200 = vsel %vm1196, %v1726, %v1764
      %v2204 = vsel %vm1196, %v1790, %v1826
      %v2208 = vsel %vm1196, %v1791, %v1827
      %v2212 = vsel %vm1196, %v1792, %v1828
      %v2216 = vsel %vm1196, %v1793, %v1829
      %v2220 = vsel %vm1196, %v1794, %v1830
      %v2224 = vsel %vm1196, %v1795, %v1831
      %v2228 = vsel %vm1196, %v1796, %v1832
      %v2232 = vsel %vm1196, %v1797, %v1833
      %v2236 = vsel %vm1196, %v1798, %v1834
      %v2240 = vsel %vm1196, %v1799, %v1835
      %v2244 = vsel %vm1196, %v1800, %v1836
      %v2248 = vsel %vm1196, %v1861, %v1897
      %v2252 = vsel %vm1196, %v1862, %v1898
      %v2256 = vsel %vm1196, %v1863, %v1899
      %v2260 = vsel %vm1196, %v1864, %v1900
      %v2264 = vsel %vm1196, %v1865, %v1901
      %v2268 = vsel %vm1196, %v1866, %v1902
      %v2272 = vsel %vm1196, %v1867, %v1903
      %v2276 = vsel %vm1196, %v1868, %v1904
      %v2280 = vsel %vm1196, %v1869, %v1905
      %v2284 = vsel %vm1196, %v1870, %v1906
      %v2288 = vsel %vm1196, %v1871, %v1907
      %v2292 = vsel %vm1196, %v1933, %v1969
      %v2296 = vsel %vm1196, %v1934, %v1970
      %v2300 = vsel %vm1196, %v1935, %v1971
      %v2304 = vsel %vm1196, %v1936, %v1972
      %v2308 = vsel %vm1196, %v1937, %v1973
      %v2312 = vsel %vm1196, %v1938, %v1974
      %v2316 = vsel %vm1196, %v1939, %v1975
      %v2320 = vsel %vm1196, %v1940, %v1976
      %v2324 = vsel %vm1196, %v1941, %v1977
      %v2328 = vsel %vm1196, %v1942, %v1978
      %v2332 = vsel %vm1196, %v1943, %v1979
      %v2336 = vsel %vm1196, %v2004, %v2040
      %v2340 = vsel %vm1196, %v2005, %v2041
      %v2344 = vsel %vm1196, %v2006, %v2042
      %v2348 = vsel %vm1196, %v2007, %v2043
      %v2352 = vsel %vm1196, %v2008, %v2044
      %v2356 = vsel %vm1196, %v2009, %v2045
      %v2360 = vsel %vm1196, %v2010, %v2046
      %v2364 = vsel %vm1196, %v2011, %v2047
      %v2368 = vsel %vm1196, %v2012, %v2048
      %v2372 = vsel %vm1196, %v2013, %v2049
      %v2376 = vsel %vm1196, %v2014, %v2050
      %v2380 = vsel %vm1196, %v2076, %v2112
      %v2384 = vsel %vm1196, %v2077, %v2113
      %v2388 = vsel %vm1196, %v2078, %v2114
      %v2392 = vsel %vm1196, %v2079, %v2115
      %v2396 = vsel %vm1196, %v2080, %v2116
      %v2400 = vsel %vm1196, %v2081, %v2117
      %v2404 = vsel %vm1196, %v2082, %v2118
      %v2408 = vsel %vm1196, %v2083, %v2119
      %v2412 = vsel %vm1196, %v2084, %v2120
      %v2416 = vsel %vm1196, %v2085, %v2121
      %v2420 = vsel %vm1196, %v2086, %v2122
      %v2422 = vld [vmem:[%s2] sm:$0xf]
      %2423 = vst [vmem:[#allocation1] ss:$4 sm:$0xff] %v361
      %s2424 = scalar_lea.vmem [#allocation1], 32
      %2425 = vst [vmem:[%s2424] ss:$4 sm:$0xff] %v362
      %v2426 = vld.sshfl [vmem:[#allocation1] sm:$0xff pattern:$0x73625140]
      %v2427 = vld.sshfl [vmem:[#allocation1 + $0x8] sm:$0xff pattern:$0x73625140]
      %v2428 = vld.sshfl [vmem:[#allocation1 + $0x10] sm:$0xff pattern:$0x73625140]
      %v2429 = vld.sshfl [vmem:[#allocation1 + $0x18] sm:$0xff pattern:$0x73625140]
      %v2430 = vld.sshfl [vmem:[#allocation1 + $0x20] sm:$0xff pattern:$0x73625140]
      %v2431 = vld.sshfl [vmem:[#allocation1 + $0x28] sm:$0xff pattern:$0x73625140]
      %v2432 = vld.sshfl [vmem:[#allocation1 + $0x30] sm:$0xff pattern:$0x73625140]
      %v2433 = vld.sshfl [vmem:[#allocation1 + $0x38] sm:$0xff pattern:$0x73625140]
      %2434 = vst [vmem:[#allocation1] ss:$4 sm:$0xff] %v363
      %2435 = vst [vmem:[%s2424] ss:$4 sm:$0xff] %v364
      %v2436 = vld.sshfl [vmem:[#allocation1] sm:$0xff pattern:$0x73625140]
      %v2437 = vld.sshfl [vmem:[#allocation1 + $0x8] sm:$0xff pattern:$0x73625140]
      %v2438 = vld.sshfl [vmem:[#allocation1 + $0x10] sm:$0xff pattern:$0x73625140]
      %v2439 = vld.sshfl [vmem:[#allocation1 + $0x18] sm:$0xff pattern:$0x73625140]
      %v2440 = vld.sshfl [vmem:[#allocation1 + $0x20] sm:$0xff pattern:$0x73625140]
      %v2441 = vld.sshfl [vmem:[#allocation1 + $0x28] sm:$0xff pattern:$0x73625140]
      %v2442 = vld.sshfl [vmem:[#allocation1 + $0x30] sm:$0xff pattern:$0x73625140]
      %v2443 = vld.sshfl [vmem:[#allocation1 + $0x38] sm:$0xff pattern:$0x73625140]
      %s2444 = scalar_lea.vmem [#allocation1], 1
      %2445 = vst [vmem:[%s2444] ss:$4 sm:$0xff] %v361
      %s2446 = scalar_lea.vmem [#allocation1], 33
      %2447 = vst [vmem:[%s2446] ss:$4 sm:$0xff] %v362
      %v2448 = vld.sshfl [vmem:[#allocation1] sm:$0xff pattern:$0x73625140]
      %v2450 = vld.sshfl [vmem:[#allocation1 + $0x8] sm:$0xff pattern:$0x73625140]
      %v2452 = vld.sshfl [vmem:[#allocation1 + $0x10] sm:$0xff pattern:$0x73625140]
      %v2454 = vld.sshfl [vmem:[#allocation1 + $0x18] sm:$0xff pattern:$0x73625140]
      %v2456 = vld.sshfl [vmem:[#allocation1 + $0x20] sm:$0xff pattern:$0x73625140]
      %v2458 = vld.sshfl [vmem:[#allocation1 + $0x28] sm:$0xff pattern:$0x73625140]
      %v2460 = vld.sshfl [vmem:[#allocation1 + $0x30] sm:$0xff pattern:$0x73625140]
      %v2462 = vld.sshfl [vmem:[#allocation1 + $0x38] sm:$0xff pattern:$0x73625140]
      %2464 = vst [vmem:[%s2444] ss:$4 sm:$0xff] %v363
      %2465 = vst [vmem:[%s2446] ss:$4 sm:$0xff] %v364
      %v2466 = vld.sshfl [vmem:[#allocation1] sm:$0xff pattern:$0x73625140]
      %v2468 = vld.sshfl [vmem:[#allocation1 + $0x8] sm:$0xff pattern:$0x73625140]
      %v2470 = vld.sshfl [vmem:[#allocation1 + $0x10] sm:$0xff pattern:$0x73625140]
      %v2472 = vld.sshfl [vmem:[#allocation1 + $0x18] sm:$0xff pattern:$0x73625140]
      %v2474 = vld.sshfl [vmem:[#allocation1 + $0x20] sm:$0xff pattern:$0x73625140]
      %v2476 = vld.sshfl [vmem:[#allocation1 + $0x28] sm:$0xff pattern:$0x73625140]
      %v2478 = vld.sshfl [vmem:[#allocation1 + $0x30] sm:$0xff pattern:$0x73625140]
      %v2480 = vld.sshfl [vmem:[#allocation1 + $0x38] sm:$0xff pattern:$0x73625140]
      %2482 = vrot.lane.b32.xlu0 %v2448, 127
      %v2483 = vpop.permute.xlu0 %2482
      %2484 = vrot.lane.b32.xlu0 %v2450, 127
      %v2485 = vpop.permute.xlu0 %2484
      %2486 = vrot.lane.b32.xlu0 %v2452, 127
      %v2487 = vpop.permute.xlu0 %2486
      %2488 = vrot.lane.b32.xlu0 %v2454, 127
      %v2489 = vpop.permute.xlu0 %2488
      %2490 = vrot.lane.b32.xlu0 %v2456, 127
      %v2491 = vpop.permute.xlu0 %2490
      %2492 = vrot.lane.b32.xlu0 %v2458, 127
      %v2493 = vpop.permute.xlu0 %2492
      %2494 = vrot.lane.b32.xlu0 %v2460, 127
      %v2495 = vpop.permute.xlu0 %2494
      %2496 = vrot.lane.b32.xlu0 %v2462, 127
      %v2497 = vpop.permute.xlu0 %2496
      %2498 = vrot.lane.b32.xlu0 %v2466, 127
      %v2499 = vpop.permute.xlu0 %2498
      %2500 = vrot.lane.b32.xlu0 %v2468, 127
      %v2501 = vpop.permute.xlu0 %2500
      %2502 = vrot.lane.b32.xlu0 %v2470, 127
      %v2503 = vpop.permute.xlu0 %2502
      %2504 = vrot.lane.b32.xlu0 %v2472, 127
      %v2505 = vpop.permute.xlu0 %2504
      %2506 = vrot.lane.b32.xlu0 %v2474, 127
      %v2507 = vpop.permute.xlu0 %2506
      %2508 = vrot.lane.b32.xlu0 %v2476, 127
      %v2509 = vpop.permute.xlu0 %2508
      %2510 = vrot.lane.b32.xlu0 %v2478, 127
      %v2511 = vpop.permute.xlu0 %2510
      %2512 = vrot.lane.b32.xlu0 %v2480, 127
      %v2513 = vpop.permute.xlu0 %2512
      %v2514 = vsel %vm1753, %v2483, %v2485
      %v2515 = vsel %vm1753, %v2485, %v2487
      %v2516 = vsel %vm1753, %v2487, %v2489
      %v2517 = vsel %vm1753, %v2489, %v2491
      %v2518 = vsel %vm1753, %v2491, %v2493
      %v2519 = vsel %vm1753, %v2493, %v2495
      %v2520 = vsel %vm1753, %v2495, %v2497
      %v2521 = vsel %vm1753, %v2497, %v2499
      %v2522 = vsel %vm1753, %v2499, %v2501
      %v2523 = vsel %vm1753, %v2501, %v2503
      %v2524 = vsel %vm1753, %v2503, %v2505
      %v2525 = vsel %vm1753, %v2505, %v2507
      %v2526 = vsel %vm1753, %v2507, %v2509
      %v2527 = vsel %vm1753, %v2509, %v2511
      %v2528 = vsel %vm1753, %v2511, %v2513
      %s2529 = scalar_lea.vmem [#allocation1], 2
      %2530 = vst [vmem:[%s2529] ss:$4 sm:$0xff] %v361
      %s2531 = scalar_lea.vmem [#allocation1], 34
      %2532 = vst [vmem:[%s2531] ss:$4 sm:$0xff] %v362
      %v2533 = vld.sshfl [vmem:[#allocation1] sm:$0xff pattern:$0x73625140]
      %v2535 = vld.sshfl [vmem:[#allocation1 + $0x8] sm:$0xff pattern:$0x73625140]
      %v2537 = vld.sshfl [vmem:[#allocation1 + $0x10] sm:$0xff pattern:$0x73625140]
      %v2539 = vld.sshfl [vmem:[#allocation1 + $0x18] sm:$0xff pattern:$0x73625140]
      %v2541 = vld.sshfl [vmem:[#allocation1 + $0x20] sm:$0xff pattern:$0x73625140]
      %v2543 = vld.sshfl [vmem:[#allocation1 + $0x28] sm:$0xff pattern:$0x73625140]
      %v2545 = vld.sshfl [vmem:[#allocation1 + $0x30] sm:$0xff pattern:$0x73625140]
      %v2547 = vld.sshfl [vmem:[#allocation1 + $0x38] sm:$0xff pattern:$0x73625140]
      %2549 = vst [vmem:[%s2529] ss:$4 sm:$0xff] %v363
      %2550 = vst [vmem:[%s2531] ss:$4 sm:$0xff] %v364
      %v2551 = vld.sshfl [vmem:[#allocation1] sm:$0xff pattern:$0x73625140]
      %v2553 = vld.sshfl [vmem:[#allocation1 + $0x8] sm:$0xff pattern:$0x73625140]
      %v2555 = vld.sshfl [vmem:[#allocation1 + $0x10] sm:$0xff pattern:$0x73625140]
      %v2557 = vld.sshfl [vmem:[#allocation1 + $0x18] sm:$0xff pattern:$0x73625140]
      %v2559 = vld.sshfl [vmem:[#allocation1 + $0x20] sm:$0xff pattern:$0x73625140]
      %v2561 = vld.sshfl [vmem:[#allocation1 + $0x28] sm:$0xff pattern:$0x73625140]
      %v2563 = vld.sshfl [vmem:[#allocation1 + $0x30] sm:$0xff pattern:$0x73625140]
      %v2565 = vld.sshfl [vmem:[#allocation1 + $0x38] sm:$0xff pattern:$0x73625140]
      %2567 = vrot.lane.b32.xlu0 %v2533, 126
      %v2568 = vpop.permute.xlu0 %2567
      %2569 = vrot.lane.b32.xlu0 %v2535, 126
      %v2570 = vpop.permute.xlu0 %2569
      %2571 = vrot.lane.b32.xlu0 %v2537, 126
      %v2572 = vpop.permute.xlu0 %2571
      %2573 = vrot.lane.b32.xlu0 %v2539, 126
      %v2574 = vpop.permute.xlu0 %2573
      %2575 = vrot.lane.b32.xlu0 %v2541, 126
      %v2576 = vpop.permute.xlu0 %2575
      %2577 = vrot.lane.b32.xlu0 %v2543, 126
      %v2578 = vpop.permute.xlu0 %2577
      %2579 = vrot.lane.b32.xlu0 %v2545, 126
      %v2580 = vpop.permute.xlu0 %2579
      %2581 = vrot.lane.b32.xlu0 %v2547, 126
      %v2582 = vpop.permute.xlu0 %2581
      %2583 = vrot.lane.b32.xlu0 %v2551, 126
      %v2584 = vpop.permute.xlu0 %2583
      %2585 = vrot.lane.b32.xlu0 %v2553, 126
      %v2586 = vpop.permute.xlu0 %2585
      %2587 = vrot.lane.b32.xlu0 %v2555, 126
      %v2588 = vpop.permute.xlu0 %2587
      %2589 = vrot.lane.b32.xlu0 %v2557, 126
      %v2590 = vpop.permute.xlu0 %2589
      %2591 = vrot.lane.b32.xlu0 %v2559, 126
      %v2592 = vpop.permute.xlu0 %2591
      %2593 = vrot.lane.b32.xlu0 %v2561, 126
      %v2594 = vpop.permute.xlu0 %2593
      %2595 = vrot.lane.b32.xlu0 %v2563, 126
      %v2596 = vpop.permute.xlu0 %2595
      %2597 = vrot.lane.b32.xlu0 %v2565, 126
      %v2598 = vpop.permute.xlu0 %2597
      %v2599 = vsel %vm1789, %v2568, %v2570
      %v2600 = vsel %vm1789, %v2570, %v2572
      %v2601 = vsel %vm1789, %v2572, %v2574
      %v2602 = vsel %vm1789, %v2574, %v2576
      %v2603 = vsel %vm1789, %v2576, %v2578
      %v2604 = vsel %vm1789, %v2578, %v2580
      %v2605 = vsel %vm1789, %v2580, %v2582
      %v2606 = vsel %vm1789, %v2582, %v2584
      %v2607 = vsel %vm1789, %v2584, %v2586
      %v2608 = vsel %vm1789, %v2586, %v2588
      %v2609 = vsel %vm1789, %v2588, %v2590
      %v2610 = vsel %vm1789, %v2590, %v2592
      %v2611 = vsel %vm1789, %v2592, %v2594
      %v2612 = vsel %vm1789, %v2594, %v2596
      %v2613 = vsel %vm1789, %v2596, %v2598
      %s2614 = scalar_lea.vmem [#allocation1], 3
      %2615 = vst [vmem:[%s2614] ss:$4 sm:$0xff] %v361
      %s2616 = scalar_lea.vmem [#allocation1], 35
      %2617 = vst [vmem:[%s2616] ss:$4 sm:$0xff] %v362
      %v2618 = vld.sshfl [vmem:[#allocation1] sm:$0xff pattern:$0x73625140]
      %v2620 = vld.sshfl [vmem:[#allocation1 + $0x8] sm:$0xff pattern:$0x73625140]
      %v2622 = vld.sshfl [vmem:[#allocation1 + $0x10] sm:$0xff pattern:$0x73625140]
      %v2624 = vld.sshfl [vmem:[#allocation1 + $0x18] sm:$0xff pattern:$0x73625140]
      %v2626 = vld.sshfl [vmem:[#allocation1 + $0x20] sm:$0xff pattern:$0x73625140]
      %v2628 = vld.sshfl [vmem:[#allocation1 + $0x28] sm:$0xff pattern:$0x73625140]
      %v2630 = vld.sshfl [vmem:[#allocation1 + $0x30] sm:$0xff pattern:$0x73625140]
      %v2632 = vld.sshfl [vmem:[#allocation1 + $0x38] sm:$0xff pattern:$0x73625140]
      %2634 = vst [vmem:[%s2614] ss:$4 sm:$0xff] %v363
      %2635 = vst [vmem:[%s2616] ss:$4 sm:$0xff] %v364
      %v2636 = vld.sshfl [vmem:[#allocation1] sm:$0xff pattern:$0x73625140]
      %v2638 = vld.sshfl [vmem:[#allocation1 + $0x8] sm:$0xff pattern:$0x73625140]
      %v2640 = vld.sshfl [vmem:[#allocation1 + $0x10] sm:$0xff pattern:$0x73625140]
      %v2642 = vld.sshfl [vmem:[#allocation1 + $0x18] sm:$0xff pattern:$0x73625140]
      %v2644 = vld.sshfl [vmem:[#allocation1 + $0x20] sm:$0xff pattern:$0x73625140]
      %v2646 = vld.sshfl [vmem:[#allocation1 + $0x28] sm:$0xff pattern:$0x73625140]
      %v2648 = vld.sshfl [vmem:[#allocation1 + $0x30] sm:$0xff pattern:$0x73625140]
      %v2650 = vld.sshfl [vmem:[#allocation1 + $0x38] sm:$0xff pattern:$0x73625140]
      %2652 = vrot.lane.b32.xlu0 %v2618, 125
      %v2653 = vpop.permute.xlu0 %2652
      %2654 = vrot.lane.b32.xlu0 %v2620, 125
      %v2655 = vpop.permute.xlu0 %2654
      %2656 = vrot.lane.b32.xlu0 %v2622, 125
      %v2657 = vpop.permute.xlu0 %2656
      %2658 = vrot.lane.b32.xlu0 %v2624, 125
      %v2659 = vpop.permute.xlu0 %2658
      %2660 = vrot.lane.b32.xlu0 %v2626, 125
      %v2661 = vpop.permute.xlu0 %2660
      %2662 = vrot.lane.b32.xlu0 %v2628, 125
      %v2663 = vpop.permute.xlu0 %2662
      %2664 = vrot.lane.b32.xlu0 %v2630, 125
      %v2665 = vpop.permute.xlu0 %2664
      %2666 = vrot.lane.b32.xlu0 %v2632, 125
      %v2667 = vpop.permute.xlu0 %2666
      %2668 = vrot.lane.b32.xlu0 %v2636, 125
      %v2669 = vpop.permute.xlu0 %2668
      %2670 = vrot.lane.b32.xlu0 %v2638, 125
      %v2671 = vpop.permute.xlu0 %2670
      %2672 = vrot.lane.b32.xlu0 %v2640, 125
      %v2673 = vpop.permute.xlu0 %2672
      %2674 = vrot.lane.b32.xlu0 %v2642, 125
      %v2675 = vpop.permute.xlu0 %2674
      %2676 = vrot.lane.b32.xlu0 %v2644, 125
      %v2677 = vpop.permute.xlu0 %2676
      %2678 = vrot.lane.b32.xlu0 %v2646, 125
      %v2679 = vpop.permute.xlu0 %2678
      %2680 = vrot.lane.b32.xlu0 %v2648, 125
      %v2681 = vpop.permute.xlu0 %2680
      %2682 = vrot.lane.b32.xlu0 %v2650, 125
      %v2683 = vpop.permute.xlu0 %2682
      %v2684 = vsel %vm1825, %v2653, %v2655
      %v2685 = vsel %vm1825, %v2655, %v2657
      %v2686 = vsel %vm1825, %v2657, %v2659
      %v2687 = vsel %vm1825, %v2659, %v2661
      %v2688 = vsel %vm1825, %v2661, %v2663
      %v2689 = vsel %vm1825, %v2663, %v2665
      %v2690 = vsel %vm1825, %v2665, %v2667
      %v2691 = vsel %vm1825, %v2667, %v2669
      %v2692 = vsel %vm1825, %v2669, %v2671
      %v2693 = vsel %vm1825, %v2671, %v2673
      %v2694 = vsel %vm1825, %v2673, %v2675
      %v2695 = vsel %vm1825, %v2675, %v2677
      %v2696 = vsel %vm1825, %v2677, %v2679
      %v2697 = vsel %vm1825, %v2679, %v2681
      %v2698 = vsel %vm1825, %v2681, %v2683
      %2699 = vst [vmem:[#allocation1] ss:$4 sm:$0xff] %v361
      %s2700 = scalar_lea.vmem [#allocation1], 32
      %2701 = vst [vmem:[%s2700] ss:$4 sm:$0xff] %v362
      %v2702 = vld.sshfl [vmem:[#allocation1] sm:$0xff pattern:$0x73625140]
      %v2704 = vld.sshfl [vmem:[#allocation1 + $0x8] sm:$0xff pattern:$0x73625140]
      %v2706 = vld.sshfl [vmem:[#allocation1 + $0x10] sm:$0xff pattern:$0x73625140]
      %v2708 = vld.sshfl [vmem:[#allocation1 + $0x18] sm:$0xff pattern:$0x73625140]
      %v2710 = vld.sshfl [vmem:[#allocation1 + $0x20] sm:$0xff pattern:$0x73625140]
      %v2712 = vld.sshfl [vmem:[#allocation1 + $0x28] sm:$0xff pattern:$0x73625140]
      %v2714 = vld.sshfl [vmem:[#allocation1 + $0x30] sm:$0xff pattern:$0x73625140]
      %v2716 = vld.sshfl [vmem:[#allocation1 + $0x38] sm:$0xff pattern:$0x73625140]
      %2718 = vst [vmem:[#allocation1] ss:$4 sm:$0xff] %v363
      %2719 = vst [vmem:[%s2700] ss:$4 sm:$0xff] %v364
      %v2720 = vld.sshfl [vmem:[#allocation1] sm:$0xff pattern:$0x73625140]
      %v2722 = vld.sshfl [vmem:[#allocation1 + $0x8] sm:$0xff pattern:$0x73625140]
      %v2724 = vld.sshfl [vmem:[#allocation1 + $0x10] sm:$0xff pattern:$0x73625140]
      %v2726 = vld.sshfl [vmem:[#allocation1 + $0x18] sm:$0xff pattern:$0x73625140]
      %v2728 = vld.sshfl [vmem:[#allocation1 + $0x20] sm:$0xff pattern:$0x73625140]
      %v2730 = vld.sshfl [vmem:[#allocation1 + $0x28] sm:$0xff pattern:$0x73625140]
      %v2732 = vld.sshfl [vmem:[#allocation1 + $0x30] sm:$0xff pattern:$0x73625140]
      %v2734 = vld.sshfl [vmem:[#allocation1 + $0x38] sm:$0xff pattern:$0x73625140]
      %2736 = vrot.lane.b32.xlu0 %v2702, 124
      %v2737 = vpop.permute.xlu0 %2736
      %2738 = vrot.lane.b32.xlu0 %v2704, 124
      %v2739 = vpop.permute.xlu0 %2738
      %2740 = vrot.lane.b32.xlu0 %v2706, 124
      %v2741 = vpop.permute.xlu0 %2740
      %2742 = vrot.lane.b32.xlu0 %v2708, 124
      %v2743 = vpop.permute.xlu0 %2742
      %2744 = vrot.lane.b32.xlu0 %v2710, 124
      %v2745 = vpop.permute.xlu0 %2744
      %2746 = vrot.lane.b32.xlu0 %v2712, 124
      %v2747 = vpop.permute.xlu0 %2746
      %2748 = vrot.lane.b32.xlu0 %v2714, 124
      %v2749 = vpop.permute.xlu0 %2748
      %2750 = vrot.lane.b32.xlu0 %v2716, 124
      %v2751 = vpop.permute.xlu0 %2750
      %2752 = vrot.lane.b32.xlu0 %v2720, 124
      %v2753 = vpop.permute.xlu0 %2752
      %2754 = vrot.lane.b32.xlu0 %v2722, 124
      %v2755 = vpop.permute.xlu0 %2754
      %2756 = vrot.lane.b32.xlu0 %v2724, 124
      %v2757 = vpop.permute.xlu0 %2756
      %2758 = vrot.lane.b32.xlu0 %v2726, 124
      %v2759 = vpop.permute.xlu0 %2758
      %2760 = vrot.lane.b32.xlu0 %v2728, 124
      %v2761 = vpop.permute.xlu0 %2760
      %2762 = vrot.lane.b32.xlu0 %v2730, 124
      %v2763 = vpop.permute.xlu0 %2762
      %2764 = vrot.lane.b32.xlu0 %v2732, 124
      %v2765 = vpop.permute.xlu0 %2764
      %2766 = vrot.lane.b32.xlu0 %v2734, 124
      %v2767 = vpop.permute.xlu0 %2766
      %v2768 = vsel %vm569, %v2737, %v2739
      %v2769 = vsel %vm569, %v2739, %v2741
      %v2770 = vsel %vm569, %v2741, %v2743
      %v2771 = vsel %vm569, %v2743, %v2745
      %v2772 = vsel %vm569, %v2745, %v2747
      %v2773 = vsel %vm569, %v2747, %v2749
      %v2774 = vsel %vm569, %v2749, %v2751
      %v2775 = vsel %vm569, %v2751, %v2753
      %v2776 = vsel %vm569, %v2753, %v2755
      %v2777 = vsel %vm569, %v2755, %v2757
      %v2778 = vsel %vm569, %v2757, %v2759
      %v2779 = vsel %vm569, %v2759, %v2761
      %v2780 = vsel %vm569, %v2761, %v2763
      %v2781 = vsel %vm569, %v2763, %v2765
      %v2782 = vsel %vm569, %v2765, %v2767
      %s2783 = scalar_lea.vmem [#allocation1], 1
      %2784 = vst [vmem:[%s2783] ss:$4 sm:$0xff] %v361
      %s2785 = scalar_lea.vmem [#allocation1], 33
      %2786 = vst [vmem:[%s2785] ss:$4 sm:$0xff] %v362
      %v2787 = vld.sshfl [vmem:[#allocation1] sm:$0xff pattern:$0x73625140]
      %v2789 = vld.sshfl [vmem:[#allocation1 + $0x8] sm:$0xff pattern:$0x73625140]
      %v2791 = vld.sshfl [vmem:[#allocation1 + $0x10] sm:$0xff pattern:$0x73625140]
      %v2793 = vld.sshfl [vmem:[#allocation1 + $0x18] sm:$0xff pattern:$0x73625140]
      %v2795 = vld.sshfl [vmem:[#allocation1 + $0x20] sm:$0xff pattern:$0x73625140]
      %v2797 = vld.sshfl [vmem:[#allocation1 + $0x28] sm:$0xff pattern:$0x73625140]
      %v2799 = vld.sshfl [vmem:[#allocation1 + $0x30] sm:$0xff pattern:$0x73625140]
      %v2801 = vld.sshfl [vmem:[#allocation1 + $0x38] sm:$0xff pattern:$0x73625140]
      %2803 = vst [vmem:[%s2783] ss:$4 sm:$0xff] %v363
      %2804 = vst [vmem:[%s2785] ss:$4 sm:$0xff] %v364
      %v2805 = vld.sshfl [vmem:[#allocation1] sm:$0xff pattern:$0x73625140]
      %v2807 = vld.sshfl [vmem:[#allocation1 + $0x8] sm:$0xff pattern:$0x73625140]
      %v2809 = vld.sshfl [vmem:[#allocation1 + $0x10] sm:$0xff pattern:$0x73625140]
      %v2811 = vld.sshfl [vmem:[#allocation1 + $0x18] sm:$0xff pattern:$0x73625140]
      %v2813 = vld.sshfl [vmem:[#allocation1 + $0x20] sm:$0xff pattern:$0x73625140]
      %v2815 = vld.sshfl [vmem:[#allocation1 + $0x28] sm:$0xff pattern:$0x73625140]
      %v2817 = vld.sshfl [vmem:[#allocation1 + $0x30] sm:$0xff pattern:$0x73625140]
      %v2819 = vld.sshfl [vmem:[#allocation1 + $0x38] sm:$0xff pattern:$0x73625140]
      %2821 = vrot.lane.b32.xlu0 %v2787, 123
      %v2822 = vpop.permute.xlu0 %2821
      %2823 = vrot.lane.b32.xlu0 %v2789, 123
      %v2824 = vpop.permute.xlu0 %2823
      %2825 = vrot.lane.b32.xlu0 %v2791, 123
      %v2826 = vpop.permute.xlu0 %2825
      %2827 = vrot.lane.b32.xlu0 %v2793, 123
      %v2828 = vpop.permute.xlu0 %2827
      %2829 = vrot.lane.b32.xlu0 %v2795, 123
      %v2830 = vpop.permute.xlu0 %2829
      %2831 = vrot.lane.b32.xlu0 %v2797, 123
      %v2832 = vpop.permute.xlu0 %2831
      %2833 = vrot.lane.b32.xlu0 %v2799, 123
      %v2834 = vpop.permute.xlu0 %2833
      %2835 = vrot.lane.b32.xlu0 %v2801, 123
      %v2836 = vpop.permute.xlu0 %2835
      %2837 = vrot.lane.b32.xlu0 %v2805, 123
      %v2838 = vpop.permute.xlu0 %2837
      %2839 = vrot.lane.b32.xlu0 %v2807, 123
      %v2840 = vpop.permute.xlu0 %2839
      %2841 = vrot.lane.b32.xlu0 %v2809, 123
      %v2842 = vpop.permute.xlu0 %2841
      %2843 = vrot.lane.b32.xlu0 %v2811, 123
      %v2844 = vpop.permute.xlu0 %2843
      %2845 = vrot.lane.b32.xlu0 %v2813, 123
      %v2846 = vpop.permute.xlu0 %2845
      %2847 = vrot.lane.b32.xlu0 %v2815, 123
      %v2848 = vpop.permute.xlu0 %2847
      %2849 = vrot.lane.b32.xlu0 %v2817, 123
      %v2850 = vpop.permute.xlu0 %2849
      %2851 = vrot.lane.b32.xlu0 %v2819, 123
      %v2852 = vpop.permute.xlu0 %2851
      %v2853 = vsel %vm1896, %v2822, %v2824
      %v2854 = vsel %vm1896, %v2824, %v2826
      %v2855 = vsel %vm1896, %v2826, %v2828
      %v2856 = vsel %vm1896, %v2828, %v2830
      %v2857 = vsel %vm1896, %v2830, %v2832
      %v2858 = vsel %vm1896, %v2832, %v2834
      %v2859 = vsel %vm1896, %v2834, %v2836
      %v2860 = vsel %vm1896, %v2836, %v2838
      %v2861 = vsel %vm1896, %v2838, %v2840
      %v2862 = vsel %vm1896, %v2840, %v2842
      %v2863 = vsel %vm1896, %v2842, %v2844
      %v2864 = vsel %vm1896, %v2844, %v2846
      %v2865 = vsel %vm1896, %v2846, %v2848
      %v2866 = vsel %vm1896, %v2848, %v2850
      %v2867 = vsel %vm1896, %v2850, %v2852
      %s2868 = scalar_lea.vmem [#allocation1], 2
      %2869 = vst [vmem:[%s2868] ss:$4 sm:$0xff] %v361
      %s2870 = scalar_lea.vmem [#allocation1], 34
      %2871 = vst [vmem:[%s2870] ss:$4 sm:$0xff] %v362
      %v2872 = vld.sshfl [vmem:[#allocation1] sm:$0xff pattern:$0x73625140]
      %v2874 = vld.sshfl [vmem:[#allocation1 + $0x8] sm:$0xff pattern:$0x73625140]
      %v2876 = vld.sshfl [vmem:[#allocation1 + $0x10] sm:$0xff pattern:$0x73625140]
      %v2878 = vld.sshfl [vmem:[#allocation1 + $0x18] sm:$0xff pattern:$0x73625140]
      %v2880 = vld.sshfl [vmem:[#allocation1 + $0x20] sm:$0xff pattern:$0x73625140]
      %v2882 = vld.sshfl [vmem:[#allocation1 + $0x28] sm:$0xff pattern:$0x73625140]
      %v2884 = vld.sshfl [vmem:[#allocation1 + $0x30] sm:$0xff pattern:$0x73625140]
      %v2886 = vld.sshfl [vmem:[#allocation1 + $0x38] sm:$0xff pattern:$0x73625140]
      %2888 = vst [vmem:[%s2868] ss:$4 sm:$0xff] %v363
      %2889 = vst [vmem:[%s2870] ss:$4 sm:$0xff] %v364
      %v2890 = vld.sshfl [vmem:[#allocation1] sm:$0xff pattern:$0x73625140]
      %v2892 = vld.sshfl [vmem:[#allocation1 + $0x8] sm:$0xff pattern:$0x73625140]
      %v2894 = vld.sshfl [vmem:[#allocation1 + $0x10] sm:$0xff pattern:$0x73625140]
      %v2896 = vld.sshfl [vmem:[#allocation1 + $0x18] sm:$0xff pattern:$0x73625140]
      %v2898 = vld.sshfl [vmem:[#allocation1 + $0x20] sm:$0xff pattern:$0x73625140]
      %v2900 = vld.sshfl [vmem:[#allocation1 + $0x28] sm:$0xff pattern:$0x73625140]
      %v2902 = vld.sshfl [vmem:[#allocation1 + $0x30] sm:$0xff pattern:$0x73625140]
      %v2904 = vld.sshfl [vmem:[#allocation1 + $0x38] sm:$0xff pattern:$0x73625140]
      %2906 = vrot.lane.b32.xlu0 %v2872, 122
      %v2907 = vpop.permute.xlu0 %2906
      %2908 = vrot.lane.b32.xlu0 %v2874, 122
      %v2909 = vpop.permute.xlu0 %2908
      %2910 = vrot.lane.b32.xlu0 %v2876, 122
      %v2911 = vpop.permute.xlu0 %2910
      %2912 = vrot.lane.b32.xlu0 %v2878, 122
      %v2913 = vpop.permute.xlu0 %2912
      %2914 = vrot.lane.b32.xlu0 %v2880, 122
      %v2915 = vpop.permute.xlu0 %2914
      %2916 = vrot.lane.b32.xlu0 %v2882, 122
      %v2917 = vpop.permute.xlu0 %2916
      %2918 = vrot.lane.b32.xlu0 %v2884, 122
      %v2919 = vpop.permute.xlu0 %2918
      %2920 = vrot.lane.b32.xlu0 %v2886, 122
      %v2921 = vpop.permute.xlu0 %2920
      %2922 = vrot.lane.b32.xlu0 %v2890, 122
      %v2923 = vpop.permute.xlu0 %2922
      %2924 = vrot.lane.b32.xlu0 %v2892, 122
      %v2925 = vpop.permute.xlu0 %2924
      %2926 = vrot.lane.b32.xlu0 %v2894, 122
      %v2927 = vpop.permute.xlu0 %2926
      %2928 = vrot.lane.b32.xlu0 %v2896, 122
      %v2929 = vpop.permute.xlu0 %2928
      %2930 = vrot.lane.b32.xlu0 %v2898, 122
      %v2931 = vpop.permute.xlu0 %2930
      %2932 = vrot.lane.b32.xlu0 %v2900, 122
      %v2933 = vpop.permute.xlu0 %2932
      %2934 = vrot.lane.b32.xlu0 %v2902, 122
      %v2935 = vpop.permute.xlu0 %2934
      %2936 = vrot.lane.b32.xlu0 %v2904, 122
      %v2937 = vpop.permute.xlu0 %2936
      %v2938 = vsel %vm1932, %v2907, %v2909
      %v2939 = vsel %vm1932, %v2909, %v2911
      %v2940 = vsel %vm1932, %v2911, %v2913
      %v2941 = vsel %vm1932, %v2913, %v2915
      %v2942 = vsel %vm1932, %v2915, %v2917
      %v2943 = vsel %vm1932, %v2917, %v2919
      %v2944 = vsel %vm1932, %v2919, %v2921
      %v2945 = vsel %vm1932, %v2921, %v2923
      %v2946 = vsel %vm1932, %v2923, %v2925
      %v2947 = vsel %vm1932, %v2925, %v2927
      %v2948 = vsel %vm1932, %v2927, %v2929
      %v2949 = vsel %vm1932, %v2929, %v2931
      %v2950 = vsel %vm1932, %v2931, %v2933
      %v2951 = vsel %vm1932, %v2933, %v2935
      %v2952 = vsel %vm1932, %v2935, %v2937
      %s2953 = scalar_lea.vmem [#allocation1], 3
      %2954 = vst [vmem:[%s2953] ss:$4 sm:$0xff] %v361
      %s2955 = scalar_lea.vmem [#allocation1], 35
      %2956 = vst [vmem:[%s2955] ss:$4 sm:$0xff] %v362
      %v2957 = vld.sshfl [vmem:[#allocation1] sm:$0xff pattern:$0x73625140]
      %v2959 = vld.sshfl [vmem:[#allocation1 + $0x8] sm:$0xff pattern:$0x73625140]
      %v2961 = vld.sshfl [vmem:[#allocation1 + $0x10] sm:$0xff pattern:$0x73625140]
      %v2963 = vld.sshfl [vmem:[#allocation1 + $0x18] sm:$0xff pattern:$0x73625140]
      %v2965 = vld.sshfl [vmem:[#allocation1 + $0x20] sm:$0xff pattern:$0x73625140]
      %v2967 = vld.sshfl [vmem:[#allocation1 + $0x28] sm:$0xff pattern:$0x73625140]
      %v2969 = vld.sshfl [vmem:[#allocation1 + $0x30] sm:$0xff pattern:$0x73625140]
      %v2971 = vld.sshfl [vmem:[#allocation1 + $0x38] sm:$0xff pattern:$0x73625140]
      %2973 = vst [vmem:[%s2953] ss:$4 sm:$0xff] %v363
      %2974 = vst [vmem:[%s2955] ss:$4 sm:$0xff] %v364
      %v2975 = vld.sshfl [vmem:[#allocation1] sm:$0xff pattern:$0x73625140]
      %v2977 = vld.sshfl [vmem:[#allocation1 + $0x8] sm:$0xff pattern:$0x73625140]
      %v2979 = vld.sshfl [vmem:[#allocation1 + $0x10] sm:$0xff pattern:$0x73625140]
      %v2981 = vld.sshfl [vmem:[#allocation1 + $0x18] sm:$0xff pattern:$0x73625140]
      %v2983 = vld.sshfl [vmem:[#allocation1 + $0x20] sm:$0xff pattern:$0x73625140]
      %v2985 = vld.sshfl [vmem:[#allocation1 + $0x28] sm:$0xff pattern:$0x73625140]
      %v2987 = vld.sshfl [vmem:[#allocation1 + $0x30] sm:$0xff pattern:$0x73625140]
      %v2989 = vld.sshfl [vmem:[#allocation1 + $0x38] sm:$0xff pattern:$0x73625140]
      %2991 = vrot.lane.b32.xlu0 %v2957, 121
      %v2992 = vpop.permute.xlu0 %2991
      %2993 = vrot.lane.b32.xlu0 %v2959, 121
      %v2994 = vpop.permute.xlu0 %2993
      %2995 = vrot.lane.b32.xlu0 %v2961, 121
      %v2996 = vpop.permute.xlu0 %2995
      %2997 = vrot.lane.b32.xlu0 %v2963, 121
      %v2998 = vpop.permute.xlu0 %2997
      %2999 = vrot.lane.b32.xlu0 %v2965, 121
      %v3000 = vpop.permute.xlu0 %2999
      %3001 = vrot.lane.b32.xlu0 %v2967, 121
      %v3002 = vpop.permute.xlu0 %3001
      %3003 = vrot.lane.b32.xlu0 %v2969, 121
      %v3004 = vpop.permute.xlu0 %3003
      %3005 = vrot.lane.b32.xlu0 %v2971, 121
      %v3006 = vpop.permute.xlu0 %3005
      %3007 = vrot.lane.b32.xlu0 %v2975, 121
      %v3008 = vpop.permute.xlu0 %3007
      %3009 = vrot.lane.b32.xlu0 %v2977, 121
      %v3010 = vpop.permute.xlu0 %3009
      %3011 = vrot.lane.b32.xlu0 %v2979, 121
      %v3012 = vpop.permute.xlu0 %3011
      %3013 = vrot.lane.b32.xlu0 %v2981, 121
      %v3014 = vpop.permute.xlu0 %3013
      %3015 = vrot.lane.b32.xlu0 %v2983, 121
      %v3016 = vpop.permute.xlu0 %3015
      %3017 = vrot.lane.b32.xlu0 %v2985, 121
      %v3018 = vpop.permute.xlu0 %3017
      %3019 = vrot.lane.b32.xlu0 %v2987, 121
      %v3020 = vpop.permute.xlu0 %3019
      %3021 = vrot.lane.b32.xlu0 %v2989, 121
      %v3022 = vpop.permute.xlu0 %3021
      %v3023 = vsel %vm1968, %v2992, %v2994
      %v3024 = vsel %vm1968, %v2994, %v2996
      %v3025 = vsel %vm1968, %v2996, %v2998
      %v3026 = vsel %vm1968, %v2998, %v3000
      %v3027 = vsel %vm1968, %v3000, %v3002
      %v3028 = vsel %vm1968, %v3002, %v3004
      %v3029 = vsel %vm1968, %v3004, %v3006
      %v3030 = vsel %vm1968, %v3006, %v3008
      %v3031 = vsel %vm1968, %v3008, %v3010
      %v3032 = vsel %vm1968, %v3010, %v3012
      %v3033 = vsel %vm1968, %v3012, %v3014
      %v3034 = vsel %vm1968, %v3014, %v3016
      %v3035 = vsel %vm1968, %v3016, %v3018
      %v3036 = vsel %vm1968, %v3018, %v3020
      %v3037 = vsel %vm1968, %v3020, %v3022
      %3038 = vst [vmem:[#allocation1] ss:$4 sm:$0xff] %v361
      %s3039 = scalar_lea.vmem [#allocation1], 32
      %3040 = vst [vmem:[%s3039] ss:$4 sm:$0xff] %v362
      %v3041 = vld.sshfl [vmem:[#allocation1] sm:$0xff pattern:$0x73625140]
      %v3043 = vld.sshfl [vmem:[#allocation1 + $0x8] sm:$0xff pattern:$0x73625140]
      %v3045 = vld.sshfl [vmem:[#allocation1 + $0x10] sm:$0xff pattern:$0x73625140]
      %v3047 = vld.sshfl [vmem:[#allocation1 + $0x18] sm:$0xff pattern:$0x73625140]
      %v3049 = vld.sshfl [vmem:[#allocation1 + $0x20] sm:$0xff pattern:$0x73625140]
      %v3051 = vld.sshfl [vmem:[#allocation1 + $0x28] sm:$0xff pattern:$0x73625140]
      %v3053 = vld.sshfl [vmem:[#allocation1 + $0x30] sm:$0xff pattern:$0x73625140]
      %v3055 = vld.sshfl [vmem:[#allocation1 + $0x38] sm:$0xff pattern:$0x73625140]
      %3057 = vst [vmem:[#allocation1] ss:$4 sm:$0xff] %v363
      %3058 = vst [vmem:[%s3039] ss:$4 sm:$0xff] %v364
      %v3059 = vld.sshfl [vmem:[#allocation1] sm:$0xff pattern:$0x73625140]
      %v3061 = vld.sshfl [vmem:[#allocation1 + $0x8] sm:$0xff pattern:$0x73625140]
      %v3063 = vld.sshfl [vmem:[#allocation1 + $0x10] sm:$0xff pattern:$0x73625140]
      %v3065 = vld.sshfl [vmem:[#allocation1 + $0x18] sm:$0xff pattern:$0x73625140]
      %v3067 = vld.sshfl [vmem:[#allocation1 + $0x20] sm:$0xff pattern:$0x73625140]
      %v3069 = vld.sshfl [vmem:[#allocation1 + $0x28] sm:$0xff pattern:$0x73625140]
      %v3071 = vld.sshfl [vmem:[#allocation1 + $0x30] sm:$0xff pattern:$0x73625140]
      %v3073 = vld.sshfl [vmem:[#allocation1 + $0x38] sm:$0xff pattern:$0x73625140]
      %3075 = vrot.lane.b32.xlu0 %v3041, 120
      %v3076 = vpop.permute.xlu0 %3075
      %3077 = vrot.lane.b32.xlu0 %v3043, 120
      %v3078 = vpop.permute.xlu0 %3077
      %3079 = vrot.lane.b32.xlu0 %v3045, 120
      %v3080 = vpop.permute.xlu0 %3079
      %3081 = vrot.lane.b32.xlu0 %v3047, 120
      %v3082 = vpop.permute.xlu0 %3081
      %3083 = vrot.lane.b32.xlu0 %v3049, 120
      %v3084 = vpop.permute.xlu0 %3083
      %3085 = vrot.lane.b32.xlu0 %v3051, 120
      %v3086 = vpop.permute.xlu0 %3085
      %3087 = vrot.lane.b32.xlu0 %v3053, 120
      %v3088 = vpop.permute.xlu0 %3087
      %3089 = vrot.lane.b32.xlu0 %v3055, 120
      %v3090 = vpop.permute.xlu0 %3089
      %3091 = vrot.lane.b32.xlu0 %v3059, 120
      %v3092 = vpop.permute.xlu0 %3091
      %3093 = vrot.lane.b32.xlu0 %v3061, 120
      %v3094 = vpop.permute.xlu0 %3093
      %3095 = vrot.lane.b32.xlu0 %v3063, 120
      %v3096 = vpop.permute.xlu0 %3095
      %3097 = vrot.lane.b32.xlu0 %v3065, 120
      %v3098 = vpop.permute.xlu0 %3097
      %3099 = vrot.lane.b32.xlu0 %v3067, 120
      %v3100 = vpop.permute.xlu0 %3099
      %3101 = vrot.lane.b32.xlu0 %v3069, 120
      %v3102 = vpop.permute.xlu0 %3101
      %3103 = vrot.lane.b32.xlu0 %v3071, 120
      %v3104 = vpop.permute.xlu0 %3103
      %3105 = vrot.lane.b32.xlu0 %v3073, 120
      %v3106 = vpop.permute.xlu0 %3105
      %v3107 = vsel %vm766, %v3076, %v3078
      %v3108 = vsel %vm766, %v3078, %v3080
      %v3109 = vsel %vm766, %v3080, %v3082
      %v3110 = vsel %vm766, %v3082, %v3084
      %v3111 = vsel %vm766, %v3084, %v3086
      %v3112 = vsel %vm766, %v3086, %v3088
      %v3113 = vsel %vm766, %v3088, %v3090
      %v3114 = vsel %vm766, %v3090, %v3092
      %v3115 = vsel %vm766, %v3092, %v3094
      %v3116 = vsel %vm766, %v3094, %v3096
      %v3117 = vsel %vm766, %v3096, %v3098
      %v3118 = vsel %vm766, %v3098, %v3100
      %v3119 = vsel %vm766, %v3100, %v3102
      %v3120 = vsel %vm766, %v3102, %v3104
      %v3121 = vsel %vm766, %v3104, %v3106
      %s3122 = scalar_lea.vmem [#allocation1], 1
      %3123 = vst [vmem:[%s3122] ss:$4 sm:$0xff] %v361
      %s3124 = scalar_lea.vmem [#allocation1], 33
      %3125 = vst [vmem:[%s3124] ss:$4 sm:$0xff] %v362
      %v3126 = vld.sshfl [vmem:[#allocation1] sm:$0xff pattern:$0x73625140]
      %v3128 = vld.sshfl [vmem:[#allocation1 + $0x8] sm:$0xff pattern:$0x73625140]
      %v3130 = vld.sshfl [vmem:[#allocation1 + $0x10] sm:$0xff pattern:$0x73625140]
      %v3132 = vld.sshfl [vmem:[#allocation1 + $0x18] sm:$0xff pattern:$0x73625140]
      %v3134 = vld.sshfl [vmem:[#allocation1 + $0x20] sm:$0xff pattern:$0x73625140]
      %v3136 = vld.sshfl [vmem:[#allocation1 + $0x28] sm:$0xff pattern:$0x73625140]
      %v3138 = vld.sshfl [vmem:[#allocation1 + $0x30] sm:$0xff pattern:$0x73625140]
      %v3140 = vld.sshfl [vmem:[#allocation1 + $0x38] sm:$0xff pattern:$0x73625140]
      %3142 = vst [vmem:[%s3122] ss:$4 sm:$0xff] %v363
      %3143 = vst [vmem:[%s3124] ss:$4 sm:$0xff] %v364
      %v3144 = vld.sshfl [vmem:[#allocation1] sm:$0xff pattern:$0x73625140]
      %v3146 = vld.sshfl [vmem:[#allocation1 + $0x8] sm:$0xff pattern:$0x73625140]
      %v3148 = vld.sshfl [vmem:[#allocation1 + $0x10] sm:$0xff pattern:$0x73625140]
      %v3150 = vld.sshfl [vmem:[#allocation1 + $0x18] sm:$0xff pattern:$0x73625140]
      %v3152 = vld.sshfl [vmem:[#allocation1 + $0x20] sm:$0xff pattern:$0x73625140]
      %v3154 = vld.sshfl [vmem:[#allocation1 + $0x28] sm:$0xff pattern:$0x73625140]
      %v3156 = vld.sshfl [vmem:[#allocation1 + $0x30] sm:$0xff pattern:$0x73625140]
      %v3158 = vld.sshfl [vmem:[#allocation1 + $0x38] sm:$0xff pattern:$0x73625140]
      %3160 = vrot.lane.b32.xlu0 %v3126, 119
      %v3161 = vpop.permute.xlu0 %3160
      %3162 = vrot.lane.b32.xlu0 %v3128, 119
      %v3163 = vpop.permute.xlu0 %3162
      %3164 = vrot.lane.b32.xlu0 %v3130, 119
      %v3165 = vpop.permute.xlu0 %3164
      %3166 = vrot.lane.b32.xlu0 %v3132, 119
      %v3167 = vpop.permute.xlu0 %3166
      %3168 = vrot.lane.b32.xlu0 %v3134, 119
      %v3169 = vpop.permute.xlu0 %3168
      %3170 = vrot.lane.b32.xlu0 %v3136, 119
      %v3171 = vpop.permute.xlu0 %3170
      %3172 = vrot.lane.b32.xlu0 %v3138, 119
      %v3173 = vpop.permute.xlu0 %3172
      %3174 = vrot.lane.b32.xlu0 %v3140, 119
      %v3175 = vpop.permute.xlu0 %3174
      %3176 = vrot.lane.b32.xlu0 %v3144, 119
      %v3177 = vpop.permute.xlu0 %3176
      %3178 = vrot.lane.b32.xlu0 %v3146, 119
      %v3179 = vpop.permute.xlu0 %3178
      %3180 = vrot.lane.b32.xlu0 %v3148, 119
      %v3181 = vpop.permute.xlu0 %3180
      %3182 = vrot.lane.b32.xlu0 %v3150, 119
      %v3183 = vpop.permute.xlu0 %3182
      %3184 = vrot.lane.b32.xlu0 %v3152, 119
      %v3185 = vpop.permute.xlu0 %3184
      %3186 = vrot.lane.b32.xlu0 %v3154, 119
      %v3187 = vpop.permute.xlu0 %3186
      %3188 = vrot.lane.b32.xlu0 %v3156, 119
      %v3189 = vpop.permute.xlu0 %3188
      %3190 = vrot.lane.b32.xlu0 %v3158, 119
      %v3191 = vpop.permute.xlu0 %3190
      %v3192 = vsel %vm2039, %v3161, %v3163
      %v3193 = vsel %vm2039, %v3163, %v3165
      %v3194 = vsel %vm2039, %v3165, %v3167
      %v3195 = vsel %vm2039, %v3167, %v3169
      %v3196 = vsel %vm2039, %v3169, %v3171
      %v3197 = vsel %vm2039, %v3171, %v3173
      %v3198 = vsel %vm2039, %v3173, %v3175
      %v3199 = vsel %vm2039, %v3175, %v3177
      %v3200 = vsel %vm2039, %v3177, %v3179
      %v3201 = vsel %vm2039, %v3179, %v3181
      %v3202 = vsel %vm2039, %v3181, %v3183
      %v3203 = vsel %vm2039, %v3183, %v3185
      %v3204 = vsel %vm2039, %v3185, %v3187
      %v3205 = vsel %vm2039, %v3187, %v3189
      %v3206 = vsel %vm2039, %v3189, %v3191
      %s3207 = scalar_lea.vmem [#allocation1], 2
      %3208 = vst [vmem:[%s3207] ss:$4 sm:$0xff] %v361
      %s3209 = scalar_lea.vmem [#allocation1], 34
      %3210 = vst [vmem:[%s3209] ss:$4 sm:$0xff] %v362
      %v3211 = vld.sshfl [vmem:[#allocation1] sm:$0xff pattern:$0x73625140]
      %v3213 = vld.sshfl [vmem:[#allocation1 + $0x8] sm:$0xff pattern:$0x73625140]
      %v3215 = vld.sshfl [vmem:[#allocation1 + $0x10] sm:$0xff pattern:$0x73625140]
      %v3217 = vld.sshfl [vmem:[#allocation1 + $0x18] sm:$0xff pattern:$0x73625140]
      %v3219 = vld.sshfl [vmem:[#allocation1 + $0x20] sm:$0xff pattern:$0x73625140]
      %v3221 = vld.sshfl [vmem:[#allocation1 + $0x28] sm:$0xff pattern:$0x73625140]
      %v3223 = vld.sshfl [vmem:[#allocation1 + $0x30] sm:$0xff pattern:$0x73625140]
      %v3225 = vld.sshfl [vmem:[#allocation1 + $0x38] sm:$0xff pattern:$0x73625140]
      %3227 = vst [vmem:[%s3207] ss:$4 sm:$0xff] %v363
      %3228 = vst [vmem:[%s3209] ss:$4 sm:$0xff] %v364
      %v3229 = vld.sshfl [vmem:[#allocation1] sm:$0xff pattern:$0x73625140]
      %v3231 = vld.sshfl [vmem:[#allocation1 + $0x8] sm:$0xff pattern:$0x73625140]
      %v3233 = vld.sshfl [vmem:[#allocation1 + $0x10] sm:$0xff pattern:$0x73625140]
      %v3235 = vld.sshfl [vmem:[#allocation1 + $0x18] sm:$0xff pattern:$0x73625140]
      %v3237 = vld.sshfl [vmem:[#allocation1 + $0x20] sm:$0xff pattern:$0x73625140]
      %v3239 = vld.sshfl [vmem:[#allocation1 + $0x28] sm:$0xff pattern:$0x73625140]
      %v3241 = vld.sshfl [vmem:[#allocation1 + $0x30] sm:$0xff pattern:$0x73625140]
      %v3243 = vld.sshfl [vmem:[#allocation1 + $0x38] sm:$0xff pattern:$0x73625140]
      %3245 = vrot.lane.b32.xlu0 %v3211, 118
      %v3246 = vpop.permute.xlu0 %3245
      %3247 = vrot.lane.b32.xlu0 %v3213, 118
      %v3248 = vpop.permute.xlu0 %3247
      %3249 = vrot.lane.b32.xlu0 %v3215, 118
      %v3250 = vpop.permute.xlu0 %3249
      %3251 = vrot.lane.b32.xlu0 %v3217, 118
      %v3252 = vpop.permute.xlu0 %3251
      %3253 = vrot.lane.b32.xlu0 %v3219, 118
      %v3254 = vpop.permute.xlu0 %3253
      %3255 = vrot.lane.b32.xlu0 %v3221, 118
      %v3256 = vpop.permute.xlu0 %3255
      %3257 = vrot.lane.b32.xlu0 %v3223, 118
      %v3258 = vpop.permute.xlu0 %3257
      %3259 = vrot.lane.b32.xlu0 %v3225, 118
      %v3260 = vpop.permute.xlu0 %3259
      %3261 = vrot.lane.b32.xlu0 %v3229, 118
      %v3262 = vpop.permute.xlu0 %3261
      %3263 = vrot.lane.b32.xlu0 %v3231, 118
      %v3264 = vpop.permute.xlu0 %3263
      %3265 = vrot.lane.b32.xlu0 %v3233, 118
      %v3266 = vpop.permute.xlu0 %3265
      %3267 = vrot.lane.b32.xlu0 %v3235, 118
      %v3268 = vpop.permute.xlu0 %3267
      %3269 = vrot.lane.b32.xlu0 %v3237, 118
      %v3270 = vpop.permute.xlu0 %3269
      %3271 = vrot.lane.b32.xlu0 %v3239, 118
      %v3272 = vpop.permute.xlu0 %3271
      %3273 = vrot.lane.b32.xlu0 %v3241, 118
      %v3274 = vpop.permute.xlu0 %3273
      %3275 = vrot.lane.b32.xlu0 %v3243, 118
      %v3276 = vpop.permute.xlu0 %3275
      %v3277 = vsel %vm2075, %v3246, %v3248
      %v3278 = vsel %vm2075, %v3248, %v3250
      %v3279 = vsel %vm2075, %v3250, %v3252
      %v3280 = vsel %vm2075, %v3252, %v3254
      %v3281 = vsel %vm2075, %v3254, %v3256
      %v3282 = vsel %vm2075, %v3256, %v3258
      %v3283 = vsel %vm2075, %v3258, %v3260
      %v3284 = vsel %vm2075, %v3260, %v3262
      %v3285 = vsel %vm2075, %v3262, %v3264
      %v3286 = vsel %vm2075, %v3264, %v3266
      %v3287 = vsel %vm2075, %v3266, %v3268
      %v3288 = vsel %vm2075, %v3268, %v3270
      %v3289 = vsel %vm2075, %v3270, %v3272
      %v3290 = vsel %vm2075, %v3272, %v3274
      %v3291 = vsel %vm2075, %v3274, %v3276
      %s3292 = scalar_lea.vmem [#allocation1], 3
      %3293 = vst [vmem:[%s3292] ss:$4 sm:$0xff] %v361
      %s3294 = scalar_lea.vmem [#allocation1], 35
      %3295 = vst [vmem:[%s3294] ss:$4 sm:$0xff] %v362
      %v3296 = vld.sshfl [vmem:[#allocation1] sm:$0xff pattern:$0x73625140]
      %v3298 = vld.sshfl [vmem:[#allocation1 + $0x8] sm:$0xff pattern:$0x73625140]
      %v3300 = vld.sshfl [vmem:[#allocation1 + $0x10] sm:$0xff pattern:$0x73625140]
      %v3302 = vld.sshfl [vmem:[#allocation1 + $0x18] sm:$0xff pattern:$0x73625140]
      %v3304 = vld.sshfl [vmem:[#allocation1 + $0x20] sm:$0xff pattern:$0x73625140]
      %v3306 = vld.sshfl [vmem:[#allocation1 + $0x28] sm:$0xff pattern:$0x73625140]
      %v3308 = vld.sshfl [vmem:[#allocation1 + $0x30] sm:$0xff pattern:$0x73625140]
      %v3310 = vld.sshfl [vmem:[#allocation1 + $0x38] sm:$0xff pattern:$0x73625140]
      %3312 = vst [vmem:[%s3292] ss:$4 sm:$0xff] %v363
      %3313 = vst [vmem:[%s3294] ss:$4 sm:$0xff] %v364
      %v3314 = vld.sshfl [vmem:[#allocation1] sm:$0xff pattern:$0x73625140]
      %v3316 = vld.sshfl [vmem:[#allocation1 + $0x8] sm:$0xff pattern:$0x73625140]
      %v3318 = vld.sshfl [vmem:[#allocation1 + $0x10] sm:$0xff pattern:$0x73625140]
      %v3320 = vld.sshfl [vmem:[#allocation1 + $0x18] sm:$0xff pattern:$0x73625140]
      %v3322 = vld.sshfl [vmem:[#allocation1 + $0x20] sm:$0xff pattern:$0x73625140]
      %v3324 = vld.sshfl [vmem:[#allocation1 + $0x28] sm:$0xff pattern:$0x73625140]
      %v3326 = vld.sshfl [vmem:[#allocation1 + $0x30] sm:$0xff pattern:$0x73625140]
      %v3328 = vld.sshfl [vmem:[#allocation1 + $0x38] sm:$0xff pattern:$0x73625140]
      %3330 = vrot.lane.b32.xlu0 %v3296, 117
      %v3331 = vpop.permute.xlu0 %3330
      %3332 = vrot.lane.b32.xlu0 %v3298, 117
      %v3333 = vpop.permute.xlu0 %3332
      %3334 = vrot.lane.b32.xlu0 %v3300, 117
      %v3335 = vpop.permute.xlu0 %3334
      %3336 = vrot.lane.b32.xlu0 %v3302, 117
      %v3337 = vpop.permute.xlu0 %3336
      %3338 = vrot.lane.b32.xlu0 %v3304, 117
      %v3339 = vpop.permute.xlu0 %3338
      %3340 = vrot.lane.b32.xlu0 %v3306, 117
      %v3341 = vpop.permute.xlu0 %3340
      %3342 = vrot.lane.b32.xlu0 %v3308, 117
      %v3343 = vpop.permute.xlu0 %3342
      %3344 = vrot.lane.b32.xlu0 %v3310, 117
      %v3345 = vpop.permute.xlu0 %3344
      %3346 = vrot.lane.b32.xlu0 %v3314, 117
      %v3347 = vpop.permute.xlu0 %3346
      %3348 = vrot.lane.b32.xlu0 %v3316, 117
      %v3349 = vpop.permute.xlu0 %3348
      %3350 = vrot.lane.b32.xlu0 %v3318, 117
      %v3351 = vpop.permute.xlu0 %3350
      %3352 = vrot.lane.b32.xlu0 %v3320, 117
      %v3353 = vpop.permute.xlu0 %3352
      %3354 = vrot.lane.b32.xlu0 %v3322, 117
      %v3355 = vpop.permute.xlu0 %3354
      %3356 = vrot.lane.b32.xlu0 %v3324, 117
      %v3357 = vpop.permute.xlu0 %3356
      %3358 = vrot.lane.b32.xlu0 %v3326, 117
      %v3359 = vpop.permute.xlu0 %3358
      %3360 = vrot.lane.b32.xlu0 %v3328, 117
      %v3361 = vpop.permute.xlu0 %3360
      %v3362 = vsel %vm2111, %v3331, %v3333
      %v3363 = vsel %vm2111, %v3333, %v3335
      %v3364 = vsel %vm2111, %v3335, %v3337
      %v3365 = vsel %vm2111, %v3337, %v3339
      %v3366 = vsel %vm2111, %v3339, %v3341
      %v3367 = vsel %vm2111, %v3341, %v3343
      %v3368 = vsel %vm2111, %v3343, %v3345
      %v3369 = vsel %vm2111, %v3345, %v3347
      %v3370 = vsel %vm2111, %v3347, %v3349
      %v3371 = vsel %vm2111, %v3349, %v3351
      %v3372 = vsel %vm2111, %v3351, %v3353
      %v3373 = vsel %vm2111, %v3353, %v3355
      %v3374 = vsel %vm2111, %v3355, %v3357
      %v3375 = vsel %vm2111, %v3357, %v3359
      %v3376 = vsel %vm2111, %v3359, %v3361
      %3377 = vst [vmem:[#allocation1] ss:$4 sm:$0xff] %v361
      %s3378 = scalar_lea.vmem [#allocation1], 32
      %3379 = vst [vmem:[%s3378] ss:$4 sm:$0xff] %v362
      %v3380 = vld.sshfl [vmem:[#allocation1] sm:$0xff pattern:$0x73625140]
      %v3382 = vld.sshfl [vmem:[#allocation1 + $0x8] sm:$0xff pattern:$0x73625140]
      %v3384 = vld.sshfl [vmem:[#allocation1 + $0x10] sm:$0xff pattern:$0x73625140]
      %v3386 = vld.sshfl [vmem:[#allocation1 + $0x18] sm:$0xff pattern:$0x73625140]
      %v3388 = vld.sshfl [vmem:[#allocation1 + $0x20] sm:$0xff pattern:$0x73625140]
      %v3390 = vld.sshfl [vmem:[#allocation1 + $0x28] sm:$0xff pattern:$0x73625140]
      %v3392 = vld.sshfl [vmem:[#allocation1 + $0x30] sm:$0xff pattern:$0x73625140]
      %v3394 = vld.sshfl [vmem:[#allocation1 + $0x38] sm:$0xff pattern:$0x73625140]
      %3396 = vst [vmem:[#allocation1] ss:$4 sm:$0xff] %v363
      %3397 = vst [vmem:[%s3378] ss:$4 sm:$0xff] %v364
      %v3398 = vld.sshfl [vmem:[#allocation1] sm:$0xff pattern:$0x73625140]
      %v3400 = vld.sshfl [vmem:[#allocation1 + $0x8] sm:$0xff pattern:$0x73625140]
      %v3402 = vld.sshfl [vmem:[#allocation1 + $0x10] sm:$0xff pattern:$0x73625140]
      %v3404 = vld.sshfl [vmem:[#allocation1 + $0x18] sm:$0xff pattern:$0x73625140]
      %v3406 = vld.sshfl [vmem:[#allocation1 + $0x20] sm:$0xff pattern:$0x73625140]
      %v3408 = vld.sshfl [vmem:[#allocation1 + $0x28] sm:$0xff pattern:$0x73625140]
      %v3410 = vld.sshfl [vmem:[#allocation1 + $0x30] sm:$0xff pattern:$0x73625140]
      %v3412 = vld.sshfl [vmem:[#allocation1 + $0x38] sm:$0xff pattern:$0x73625140]
      %3414 = vrot.lane.b32.xlu0 %v3380, 116
      %v3415 = vpop.permute.xlu0 %3414
      %3416 = vrot.lane.b32.xlu0 %v3382, 116
      %v3417 = vpop.permute.xlu0 %3416
      %3418 = vrot.lane.b32.xlu0 %v3384, 116
      %v3419 = vpop.permute.xlu0 %3418
      %3420 = vrot.lane.b32.xlu0 %v3386, 116
      %v3421 = vpop.permute.xlu0 %3420
      %3422 = vrot.lane.b32.xlu0 %v3388, 116
      %v3423 = vpop.permute.xlu0 %3422
      %3424 = vrot.lane.b32.xlu0 %v3390, 116
      %v3425 = vpop.permute.xlu0 %3424
      %3426 = vrot.lane.b32.xlu0 %v3392, 116
      %v3427 = vpop.permute.xlu0 %3426
      %3428 = vrot.lane.b32.xlu0 %v3394, 116
      %v3429 = vpop.permute.xlu0 %3428
      %3430 = vrot.lane.b32.xlu0 %v3398, 116
      %v3431 = vpop.permute.xlu0 %3430
      %3432 = vrot.lane.b32.xlu0 %v3400, 116
      %v3433 = vpop.permute.xlu0 %3432
      %3434 = vrot.lane.b32.xlu0 %v3402, 116
      %v3435 = vpop.permute.xlu0 %3434
      %3436 = vrot.lane.b32.xlu0 %v3404, 116
      %v3437 = vpop.permute.xlu0 %3436
      %3438 = vrot.lane.b32.xlu0 %v3406, 116
      %v3439 = vpop.permute.xlu0 %3438
      %3440 = vrot.lane.b32.xlu0 %v3408, 116
      %v3441 = vpop.permute.xlu0 %3440
      %3442 = vrot.lane.b32.xlu0 %v3410, 116
      %v3443 = vpop.permute.xlu0 %3442
      %3444 = vrot.lane.b32.xlu0 %v3412, 116
      %v3445 = vpop.permute.xlu0 %3444
      %v3446 = vsel %vm963, %v3415, %v3417
      %v3447 = vsel %vm963, %v3417, %v3419
      %v3448 = vsel %vm963, %v3419, %v3421
      %v3449 = vsel %vm963, %v3421, %v3423
      %v3450 = vsel %vm963, %v3423, %v3425
      %v3451 = vsel %vm963, %v3425, %v3427
      %v3452 = vsel %vm963, %v3427, %v3429
      %v3453 = vsel %vm963, %v3429, %v3431
      %v3454 = vsel %vm963, %v3431, %v3433
      %v3455 = vsel %vm963, %v3433, %v3435
      %v3456 = vsel %vm963, %v3435, %v3437
      %v3457 = vsel %vm963, %v3437, %v3439
      %v3458 = vsel %vm963, %v3439, %v3441
      %v3459 = vsel %vm963, %v3441, %v3443
      %v3460 = vsel %vm963, %v3443, %v3445
      %v3462 = vsel %vm1171, %v2426, %v2514
      %v3464 = vsel %vm1171, %v2427, %v2515
      %v3466 = vsel %vm1171, %v2428, %v2516
      %v3468 = vsel %vm1171, %v2429, %v2517
      %v3470 = vsel %vm1171, %v2430, %v2518
      %v3472 = vsel %vm1171, %v2431, %v2519
      %v3474 = vsel %vm1171, %v2432, %v2520
      %v3476 = vsel %vm1171, %v2433, %v2521
      %v3478 = vsel %vm1171, %v2436, %v2522
      %v3480 = vsel %vm1171, %v2437, %v2523
      %v3482 = vsel %vm1171, %v2438, %v2524
      %v3484 = vsel %vm1171, %v2439, %v2525
      %v3486 = vsel %vm1171, %v2440, %v2526
      %v3488 = vsel %vm1171, %v2441, %v2527
      %v3490 = vsel %vm1171, %v2442, %v2528
      %v3492 = vsel %vm1171, %v2443, %v2513
      %v3494 = vsel %vm1196, %v3462, %v2599
      %v3496 = vsel %vm1196, %v3464, %v2600
      %v3498 = vsel %vm1196, %v3466, %v2601
      %v3500 = vsel %vm1196, %v3468, %v2602
      %v3502 = vsel %vm1196, %v3470, %v2603
      %v3504 = vsel %vm1196, %v3472, %v2604
      %v3506 = vsel %vm1196, %v3474, %v2605
      %v3508 = vsel %vm1196, %v3476, %v2606
      %v3510 = vsel %vm1196, %v3478, %v2607
      %v3512 = vsel %vm1196, %v3480, %v2608
      %v3514 = vsel %vm1196, %v3482, %v2609
      %v3516 = vsel %vm1196, %v3484, %v2610
      %v3518 = vsel %vm1196, %v3486, %v2611
      %v3520 = vsel %vm1196, %v3488, %v2612
      %v3522 = vsel %vm1196, %v3490, %v2613
      %v3524 = vsel %vm1196, %v3492, %v2598
      %v3526 = vsel %vm1221, %v3494, %v2684
      %v3529 = vsel %vm1221, %v3496, %v2685
      %v3532 = vsel %vm1221, %v3498, %v2686
      %v3535 = vsel %vm1221, %v3500, %v2687
      %v3538 = vsel %vm1221, %v3502, %v2688
      %v3541 = vsel %vm1221, %v3504, %v2689
      %v3544 = vsel %vm1221, %v3506, %v2690
      %v3547 = vsel %vm1221, %v3508, %v2691
      %v3550 = vsel %vm1221, %v3510, %v2692
      %v3553 = vsel %vm1221, %v3512, %v2693
      %v3556 = vsel %vm1221, %v3514, %v2694
      %v3559 = vsel %vm1221, %v3516, %v2695
      %v3562 = vsel %vm1221, %v3518, %v2696
      %v3565 = vsel %vm1221, %v3520, %v2697
      %v3568 = vsel %vm1221, %v3522, %v2698
      %v3571 = vsel %vm1221, %v3524, %v2683
      %v3575 = vsel %vm1171, %v2768, %v2853
      %v3578 = vsel %vm1171, %v2769, %v2854
      %v3581 = vsel %vm1171, %v2770, %v2855
      %v3584 = vsel %vm1171, %v2771, %v2856
      %v3587 = vsel %vm1171, %v2772, %v2857
      %v3590 = vsel %vm1171, %v2773, %v2858
      %v3593 = vsel %vm1171, %v2774, %v2859
      %v3596 = vsel %vm1171, %v2775, %v2860
      %v3599 = vsel %vm1171, %v2776, %v2861
      %v3602 = vsel %vm1171, %v2777, %v2862
      %v3605 = vsel %vm1171, %v2778, %v2863
      %v3608 = vsel %vm1171, %v2779, %v2864
      %v3611 = vsel %vm1171, %v2780, %v2865
      %v3614 = vsel %vm1171, %v2781, %v2866
      %v3617 = vsel %vm1171, %v2782, %v2867
      %v3620 = vsel %vm1171, %v2767, %v2852
      %v3622 = vsel %vm1196, %v3575, %v2938
      %v3624 = vsel %vm1196, %v3578, %v2939
      %v3626 = vsel %vm1196, %v3581, %v2940
      %v3628 = vsel %vm1196, %v3584, %v2941
      %v3630 = vsel %vm1196, %v3587, %v2942
      %v3632 = vsel %vm1196, %v3590, %v2943
      %v3634 = vsel %vm1196, %v3593, %v2944
      %v3636 = vsel %vm1196, %v3596, %v2945
      %v3638 = vsel %vm1196, %v3599, %v2946
      %v3640 = vsel %vm1196, %v3602, %v2947
      %v3642 = vsel %vm1196, %v3605, %v2948
      %v3644 = vsel %vm1196, %v3608, %v2949
      %v3646 = vsel %vm1196, %v3611, %v2950
      %v3648 = vsel %vm1196, %v3614, %v2951
      %v3650 = vsel %vm1196, %v3617, %v2952
      %v3652 = vsel %vm1196, %v3620, %v2937
      %v3654 = vsel %vm1221, %v3622, %v3023
      %v3657 = vsel %vm1221, %v3624, %v3024
      %v3660 = vsel %vm1221, %v3626, %v3025
      %v3663 = vsel %vm1221, %v3628, %v3026
      %v3666 = vsel %vm1221, %v3630, %v3027
      %v3669 = vsel %vm1221, %v3632, %v3028
      %v3672 = vsel %vm1221, %v3634, %v3029
      %v3675 = vsel %vm1221, %v3636, %v3030
      %v3678 = vsel %vm1221, %v3638, %v3031
      %v3681 = vsel %vm1221, %v3640, %v3032
      %v3684 = vsel %vm1221, %v3642, %v3033
      %v3687 = vsel %vm1221, %v3644, %v3034
      %v3690 = vsel %vm1221, %v3646, %v3035
      %v3693 = vsel %vm1221, %v3648, %v3036
      %v3696 = vsel %vm1221, %v3650, %v3037
      %v3699 = vsel %vm1221, %v3652, %v3022
      %v3703 = vsel %vm1171, %v3107, %v3192
      %v3706 = vsel %vm1171, %v3108, %v3193
      %v3709 = vsel %vm1171, %v3109, %v3194
      %v3712 = vsel %vm1171, %v3110, %v3195
      %v3715 = vsel %vm1171, %v3111, %v3196
      %v3718 = vsel %vm1171, %v3112, %v3197
      %v3721 = vsel %vm1171, %v3113, %v3198
      %v3724 = vsel %vm1171, %v3114, %v3199
      %v3727 = vsel %vm1171, %v3115, %v3200
      %v3730 = vsel %vm1171, %v3116, %v3201
      %v3733 = vsel %vm1171, %v3117, %v3202
      %v3736 = vsel %vm1171, %v3118, %v3203
      %v3739 = vsel %vm1171, %v3119, %v3204
      %v3742 = vsel %vm1171, %v3120, %v3205
      %v3745 = vsel %vm1171, %v3121, %v3206
      %v3748 = vsel %vm1171, %v3106, %v3191
      %v3750 = vsel %vm1196, %v3703, %v3277
      %v3752 = vsel %vm1196, %v3706, %v3278
      %v3754 = vsel %vm1196, %v3709, %v3279
      %v3756 = vsel %vm1196, %v3712, %v3280
      %v3758 = vsel %vm1196, %v3715, %v3281
      %v3760 = vsel %vm1196, %v3718, %v3282
      %v3762 = vsel %vm1196, %v3721, %v3283
      %v3764 = vsel %vm1196, %v3724, %v3284
      %v3766 = vsel %vm1196, %v3727, %v3285
      %v3768 = vsel %vm1196, %v3730, %v3286
      %v3770 = vsel %vm1196, %v3733, %v3287
      %v3772 = vsel %vm1196, %v3736, %v3288
      %v3774 = vsel %vm1196, %v3739, %v3289
      %v3776 = vsel %vm1196, %v3742, %v3290
      %v3778 = vsel %vm1196, %v3745, %v3291
      %v3780 = vsel %vm1196, %v3748, %v3276
      %v3782 = vsel %vm1221, %v3750, %v3362
      %v3785 = vsel %vm1221, %v3752, %v3363
      %v3788 = vsel %vm1221, %v3754, %v3364
      %v3791 = vsel %vm1221, %v3756, %v3365
      %v3794 = vsel %vm1221, %v3758, %v3366
      %v3797 = vsel %vm1221, %v3760, %v3367
      %v3800 = vsel %vm1221, %v3762, %v3368
      %v3803 = vsel %vm1221, %v3764, %v3369
      %v3806 = vsel %vm1221, %v3766, %v3370
      %v3809 = vsel %vm1221, %v3768, %v3371
      %v3812 = vsel %vm1221, %v3770, %v3372
      %v3815 = vsel %vm1221, %v3772, %v3373
      %v3818 = vsel %vm1221, %v3774, %v3374
      %v3821 = vsel %vm1221, %v3776, %v3375
      %v3824 = vsel %vm1221, %v3778, %v3376
      %v3827 = vsel %vm1221, %v3780, %v3361
      %v3829 = vld [vmem:[%s3] sm:$0xf]
      %v3830 = vld [vmem:[%s6] sm:$0xff]
      %3832 = vset.pattern.permute.xlu0 0
      %3833 = vperm.xlu0 %3832, %v3830
      %v3834 = vpop.permute.xlu0 %3833
      %v3837 = vsel %vm1497, %v3829, 0
      %v3840 = vsel %vm1171, %v3446, 0
      %v3843 = vsel %vm1171, %v3447, 0
      %v3846 = vsel %vm1171, %v3448, 0
      %v3849 = vsel %vm1171, %v3449, 0
      %v3852 = vsel %vm1171, %v3450, 0
      %v3855 = vsel %vm1171, %v3451, 0
      %v3858 = vsel %vm1171, %v3452, 0
      %v3861 = vsel %vm1171, %v3453, 0
      %v3864 = vsel %vm1171, %v3454, 0
      %v3867 = vsel %vm1171, %v3455, 0
      %v3870 = vsel %vm1171, %v3456, 0
      %v3873 = vsel %vm1171, %v3457, 0
      %v3876 = vsel %vm1171, %v3458, 0
      %v3879 = vsel %vm1171, %v3459, 0
      %v3882 = vsel %vm1171, %v3460, 0
      %v3885 = vsel %vm1171, %v3445, 0
      %3887 = vmatpush.bf16.msra.mxu0 0
      %3888 = vmatpush.bf16.msra.mxu0 0
      %3889 = vmatpush.bf16.msra.mxu0 0
      %3890 = vmatpush.bf16.msra.mxu0 0
      %3891 = vmatpush.bf16.msra.mxu0 %v3840
      %3892 = vmatpush.bf16.msra.mxu0 %v3782
      %3893 = vmatpush.bf16.msra.mxu0 %v3654
      %3894 = vmatpush.bf16.msra.mxu0 %v3526
      %3895 = vmatmul.bf16.gmra.mxu0 %v3837
      %v3896 = vpop.f32.mrf.mxu0
      %v3897 = vadd.f32 %v3834, %v3896
      %v3898 = vpop.f32.mrf.mxu0
      %3899 = vdwg.mxu0
      %3900 = vmatpush.bf16.msra.mxu0 0
      %3901 = vmatpush.bf16.msra.mxu0 0
      %3902 = vmatpush.bf16.msra.mxu0 0
      %3903 = vmatpush.bf16.msra.mxu0 0
      %3904 = vmatpush.bf16.msra.mxu0 %v3843
      %3905 = vmatpush.bf16.msra.mxu0 %v3785
      %3906 = vmatpush.bf16.msra.mxu0 %v3657
      %3907 = vmatpush.bf16.msra.mxu0 %v3529
      %3908 = vmatmul.bf16.gmra.mxu0 %v3837
      %v3909 = vpop.f32.mrf.mxu0
      %v3910 = vadd.f32 %v3834, %v3909
      %v3911 = vpop.f32.mrf.mxu0
      %3912 = vdwg.mxu0
      %3913 = vmatpush.bf16.msra.mxu0 0
      %3914 = vmatpush.bf16.msra.mxu0 0
      %3915 = vmatpush.bf16.msra.mxu0 0
      %3916 = vmatpush.bf16.msra.mxu0 0
      %3917 = vmatpush.bf16.msra.mxu0 %v3846
      %3918 = vmatpush.bf16.msra.mxu0 %v3788
      %3919 = vmatpush.bf16.msra.mxu0 %v3660
      %3920 = vmatpush.bf16.msra.mxu0 %v3532
      %3921 = vmatmul.bf16.gmra.mxu0 %v3837
      %v3922 = vpop.f32.mrf.mxu0
      %v3923 = vadd.f32 %v3834, %v3922
      %v3924 = vpop.f32.mrf.mxu0
      %3925 = vdwg.mxu0
      %3926 = vmatpush.bf16.msra.mxu0 0
      %3927 = vmatpush.bf16.msra.mxu0 0
      %3928 = vmatpush.bf16.msra.mxu0 0
      %3929 = vmatpush.bf16.msra.mxu0 0
      %3930 = vmatpush.bf16.msra.mxu0 %v3849
      %3931 = vmatpush.bf16.msra.mxu0 %v3791
      %3932 = vmatpush.bf16.msra.mxu0 %v3663
      %3933 = vmatpush.bf16.msra.mxu0 %v3535
      %3934 = vmatmul.bf16.gmra.mxu0 %v3837
      %v3935 = vpop.f32.mrf.mxu0
      %v3936 = vadd.f32 %v3834, %v3935
      %v3937 = vpop.f32.mrf.mxu0
      %3938 = vdwg.mxu0
      %3939 = vmatpush.bf16.msra.mxu0 0
      %3940 = vmatpush.bf16.msra.mxu0 0
      %3941 = vmatpush.bf16.msra.mxu0 0
      %3942 = vmatpush.bf16.msra.mxu0 0
      %3943 = vmatpush.bf16.msra.mxu0 %v3852
      %3944 = vmatpush.bf16.msra.mxu0 %v3794
      %3945 = vmatpush.bf16.msra.mxu0 %v3666
      %3946 = vmatpush.bf16.msra.mxu0 %v3538
      %3947 = vmatmul.bf16.gmra.mxu0 %v3837
      %v3948 = vpop.f32.mrf.mxu0
      %v3949 = vadd.f32 %v3834, %v3948
      %v3950 = vpop.f32.mrf.mxu0
      %3951 = vdwg.mxu0
      %3952 = vmatpush.bf16.msra.mxu0 0
      %3953 = vmatpush.bf16.msra.mxu0 0
      %3954 = vmatpush.bf16.msra.mxu0 0
      %3955 = vmatpush.bf16.msra.mxu0 0
      %3956 = vmatpush.bf16.msra.mxu0 %v3855
      %3957 = vmatpush.bf16.msra.mxu0 %v3797
      %3958 = vmatpush.bf16.msra.mxu0 %v3669
      %3959 = vmatpush.bf16.msra.mxu0 %v3541
      %3960 = vmatmul.bf16.gmra.mxu0 %v3837
      %v3961 = vpop.f32.mrf.mxu0
      %v3962 = vadd.f32 %v3834, %v3961
      %v3963 = vpop.f32.mrf.mxu0
      %3964 = vdwg.mxu0
      %3965 = vmatpush.bf16.msra.mxu0 0
      %3966 = vmatpush.bf16.msra.mxu0 0
      %3967 = vmatpush.bf16.msra.mxu0 0
      %3968 = vmatpush.bf16.msra.mxu0 0
      %3969 = vmatpush.bf16.msra.mxu0 %v3858
      %3970 = vmatpush.bf16.msra.mxu0 %v3800
      %3971 = vmatpush.bf16.msra.mxu0 %v3672
      %3972 = vmatpush.bf16.msra.mxu0 %v3544
      %3973 = vmatmul.bf16.gmra.mxu0 %v3837
      %v3974 = vpop.f32.mrf.mxu0
      %v3975 = vadd.f32 %v3834, %v3974
      %v3976 = vpop.f32.mrf.mxu0
      %3977 = vdwg.mxu0
      %3978 = vmatpush.bf16.msra.mxu0 0
      %3979 = vmatpush.bf16.msra.mxu0 0
      %3980 = vmatpush.bf16.msra.mxu0 0
      %3981 = vmatpush.bf16.msra.mxu0 0
      %3982 = vmatpush.bf16.msra.mxu0 %v3861
      %3983 = vmatpush.bf16.msra.mxu0 %v3803
      %3984 = vmatpush.bf16.msra.mxu0 %v3675
      %3985 = vmatpush.bf16.msra.mxu0 %v3547
      %3986 = vmatmul.bf16.gmra.mxu0 %v3837
      %v3987 = vpop.f32.mrf.mxu0
      %v3988 = vadd.f32 %v3834, %v3987
      %v3989 = vpop.f32.mrf.mxu0
      %3990 = vdwg.mxu0
      %3991 = vmatpush.bf16.msra.mxu0 0
      %3992 = vmatpush.bf16.msra.mxu0 0
      %3993 = vmatpush.bf16.msra.mxu0 0
      %3994 = vmatpush.bf16.msra.mxu0 0
      %3995 = vmatpush.bf16.msra.mxu0 %v3864
      %3996 = vmatpush.bf16.msra.mxu0 %v3806
      %3997 = vmatpush.bf16.msra.mxu0 %v3678
      %3998 = vmatpush.bf16.msra.mxu0 %v3550
      %3999 = vmatmul.bf16.gmra.mxu0 %v3837
      %v4000 = vpop.f32.mrf.mxu0
      %v4001 = vadd.f32 %v3834, %v4000
      %v4002 = vpop.f32.mrf.mxu0
      %4003 = vdwg.mxu0
      %4004 = vmatpush.bf16.msra.mxu0 0
      %4005 = vmatpush.bf16.msra.mxu0 0
      %4006 = vmatpush.bf16.msra.mxu0 0
      %4007 = vmatpush.bf16.msra.mxu0 0
      %4008 = vmatpush.bf16.msra.mxu0 %v3867
      %4009 = vmatpush.bf16.msra.mxu0 %v3809
      %4010 = vmatpush.bf16.msra.mxu0 %v3681
      %4011 = vmatpush.bf16.msra.mxu0 %v3553
      %4012 = vmatmul.bf16.gmra.mxu0 %v3837
      %v4013 = vpop.f32.mrf.mxu0
      %v4014 = vadd.f32 %v3834, %v4013
      %v4015 = vpop.f32.mrf.mxu0
      %4016 = vdwg.mxu0
      %4017 = vmatpush.bf16.msra.mxu0 0
      %4018 = vmatpush.bf16.msra.mxu0 0
      %4019 = vmatpush.bf16.msra.mxu0 0
      %4020 = vmatpush.bf16.msra.mxu0 0
      %4021 = vmatpush.bf16.msra.mxu0 %v3870
      %4022 = vmatpush.bf16.msra.mxu0 %v3812
      %4023 = vmatpush.bf16.msra.mxu0 %v3684
      %4024 = vmatpush.bf16.msra.mxu0 %v3556
      %4025 = vmatmul.bf16.gmra.mxu0 %v3837
      %v4026 = vpop.f32.mrf.mxu0
      %v4027 = vadd.f32 %v3834, %v4026
      %v4028 = vpop.f32.mrf.mxu0
      %4029 = vdwg.mxu0
      %4030 = vmatpush.bf16.msra.mxu0 0
      %4031 = vmatpush.bf16.msra.mxu0 0
      %4032 = vmatpush.bf16.msra.mxu0 0
      %4033 = vmatpush.bf16.msra.mxu0 0
      %4034 = vmatpush.bf16.msra.mxu0 %v3873
      %4035 = vmatpush.bf16.msra.mxu0 %v3815
      %4036 = vmatpush.bf16.msra.mxu0 %v3687
      %4037 = vmatpush.bf16.msra.mxu0 %v3559
      %4038 = vmatmul.bf16.gmra.mxu0 %v3837
      %v4039 = vpop.f32.mrf.mxu0
      %v4040 = vadd.f32 %v3834, %v4039
      %v4041 = vpop.f32.mrf.mxu0
      %4042 = vdwg.mxu0
      %4043 = vmatpush.bf16.msra.mxu0 0
      %4044 = vmatpush.bf16.msra.mxu0 0
      %4045 = vmatpush.bf16.msra.mxu0 0
      %4046 = vmatpush.bf16.msra.mxu0 0
      %4047 = vmatpush.bf16.msra.mxu0 %v3876
      %4048 = vmatpush.bf16.msra.mxu0 %v3818
      %4049 = vmatpush.bf16.msra.mxu0 %v3690
      %4050 = vmatpush.bf16.msra.mxu0 %v3562
      %4051 = vmatmul.bf16.gmra.mxu0 %v3837
      %v4052 = vpop.f32.mrf.mxu0
      %v4053 = vadd.f32 %v3834, %v4052
      %v4054 = vpop.f32.mrf.mxu0
      %4055 = vdwg.mxu0
      %4056 = vmatpush.bf16.msra.mxu0 0
      %4057 = vmatpush.bf16.msra.mxu0 0
      %4058 = vmatpush.bf16.msra.mxu0 0
      %4059 = vmatpush.bf16.msra.mxu0 0
      %4060 = vmatpush.bf16.msra.mxu0 %v3879
      %4061 = vmatpush.bf16.msra.mxu0 %v3821
      %4062 = vmatpush.bf16.msra.mxu0 %v3693
      %4063 = vmatpush.bf16.msra.mxu0 %v3565
      %4064 = vmatmul.bf16.gmra.mxu0 %v3837
      %v4065 = vpop.f32.mrf.mxu0
      %v4066 = vadd.f32 %v3834, %v4065
      %v4067 = vpop.f32.mrf.mxu0
      %4068 = vdwg.mxu0
      %4069 = vmatpush.bf16.msra.mxu0 0
      %4070 = vmatpush.bf16.msra.mxu0 0
      %4071 = vmatpush.bf16.msra.mxu0 0
      %4072 = vmatpush.bf16.msra.mxu0 0
      %4073 = vmatpush.bf16.msra.mxu0 %v3882
      %4074 = vmatpush.bf16.msra.mxu0 %v3824
      %4075 = vmatpush.bf16.msra.mxu0 %v3696
      %4076 = vmatpush.bf16.msra.mxu0 %v3568
      %4077 = vmatmul.bf16.gmra.mxu0 %v3837
      %v4078 = vpop.f32.mrf.mxu0
      %v4079 = vadd.f32 %v3834, %v4078
      %v4080 = vpop.f32.mrf.mxu0
      %4081 = vdwg.mxu0
      %4082 = vmatpush.bf16.msra.mxu0 0
      %4083 = vmatpush.bf16.msra.mxu0 0
      %4084 = vmatpush.bf16.msra.mxu0 0
      %4085 = vmatpush.bf16.msra.mxu0 0
      %4086 = vmatpush.bf16.msra.mxu0 %v3885
      %4087 = vmatpush.bf16.msra.mxu0 %v3827
      %4088 = vmatpush.bf16.msra.mxu0 %v3699
      %4089 = vmatpush.bf16.msra.mxu0 %v3571
      %4090 = vmatmul.bf16.gmra.mxu0 %v3837
      %v4091 = vpop.f32.mrf.mxu0
      %v4092 = vadd.f32 %v3834, %v4091
      %v4093 = vpop.f32.mrf.mxu0
      %4094 = vdwg.mxu0
      %v4095 = vld [vmem:[%s9] sm:$0xff]
      %v4096 = vld [vmem:[%s9 + $0x8] sm:$0xff]
      %v4099 = vperm.slane %v4095, 0
      %v4100 = vperm.slane %v4095, 1
      %v4101 = vperm.slane %v4095, 2
      %v4102 = vperm.slane %v4095, 3
      %v4103 = vperm.slane %v4095, 4
      %v4104 = vperm.slane %v4095, 5
      %v4105 = vperm.slane %v4095, 6
      %v4106 = vperm.slane %v4095, 7
      %v4107 = vperm.slane %v4096, 0
      %v4108 = vperm.slane %v4096, 1
      %v4109 = vperm.slane %v4096, 2
      %v4110 = vperm.slane %v4096, 3
      %v4111 = vperm.slane %v4096, 4
      %v4112 = vperm.slane %v4096, 5
      %v4113 = vperm.slane %v4096, 6
      %v4114 = vperm.slane %v4096, 7
      %v4131 = vmul.f32 %v3897, %v4099
      %v4132 = vmul.f32 %v3910, %v4100
      %v4133 = vmul.f32 %v3923, %v4101
      %v4134 = vmul.f32 %v3936, %v4102
      %v4135 = vmul.f32 %v3949, %v4103
      %v4136 = vmul.f32 %v3962, %v4104
      %v4137 = vmul.f32 %v3975, %v4105
      %v4138 = vmul.f32 %v3988, %v4106
      %v4139 = vmul.f32 %v4001, %v4107
      %v4140 = vmul.f32 %v4014, %v4108
      %v4141 = vmul.f32 %v4027, %v4109
      %v4142 = vmul.f32 %v4040, %v4110
      %v4143 = vmul.f32 %v4053, %v4111
      %v4144 = vmul.f32 %v4066, %v4112
      %v4145 = vmul.f32 %v4079, %v4113
      %v4146 = vmul.f32 %v4092, %v4114
      %v4147 = vpack.c.bf16 %v4132, %v4131
      %v4148 = vpack.c.bf16 %v4134, %v4133
      %v4149 = vpack.c.bf16 %v4136, %v4135
      %v4150 = vpack.c.bf16 %v4138, %v4137
      %v4151 = vpack.c.bf16 %v4140, %v4139
      %v4152 = vpack.c.bf16 %v4142, %v4141
      %v4153 = vpack.c.bf16 %v4144, %v4143
      %v4154 = vpack.c.bf16 %v4146, %v4145
      %v4161 = vunpack.c.l.b16 %v4147
      %v4162 = vunpack.c.h.b16 %v4147
      %v4163 = vunpack.c.l.b16 %v4148
      %v4164 = vunpack.c.h.b16 %v4148
      %v4165 = vunpack.c.l.b16 %v4149
      %v4166 = vunpack.c.h.b16 %v4149
      %v4167 = vunpack.c.l.b16 %v4150
      %v4168 = vunpack.c.h.b16 %v4150
      %v4169 = vunpack.c.l.b16 %v4151
      %v4170 = vunpack.c.h.b16 %v4151
      %v4171 = vunpack.c.l.b16 %v4152
      %v4172 = vpack.c.b16 %v4161, %v4161
      %v4173 = vpack.c.b16 %v4162, %v4162
      %v4174 = vpack.c.b16 %v4163, %v4163
      %v4175 = vpack.c.b16 %v4164, %v4164
      %v4176 = vpack.c.b16 %v4165, %v4165
      %v4177 = vpack.c.b16 %v4166, %v4166
      %v4178 = vpack.c.b16 %v4167, %v4167
      %v4179 = vpack.c.b16 %v4168, %v4168
      %v4180 = vpack.c.b16 %v4169, %v4169
      %v4181 = vpack.c.b16 %v4170, %v4170
      %v4182 = vpack.c.b16 %v4171, %v4171
      %v4183 = vunpack.c.h.b16 %v4152
      %v4184 = vpack.c.b16 %v4183, %v4183
      %4185 = vrot.lane.b32.xlu0 %v4172, 84
      %v4186 = vpop.permute.xlu0 %4185
      %4187 = vrot.lane.b32.xlu0 %v4173, 84
      %v4188 = vpop.permute.xlu0 %4187
      %4189 = vrot.lane.b32.xlu0 %v4174, 84
      %v4190 = vpop.permute.xlu0 %4189
      %4191 = vrot.lane.b32.xlu0 %v4175, 84
      %v4192 = vpop.permute.xlu0 %4191
      %4193 = vrot.lane.b32.xlu0 %v4176, 84
      %v4194 = vpop.permute.xlu0 %4193
      %4195 = vrot.lane.b32.xlu0 %v4177, 84
      %v4196 = vpop.permute.xlu0 %4195
      %4197 = vrot.lane.b32.xlu0 %v4178, 84
      %v4198 = vpop.permute.xlu0 %4197
      %4199 = vrot.lane.b32.xlu0 %v4179, 84
      %v4200 = vpop.permute.xlu0 %4199
      %4201 = vrot.lane.b32.xlu0 %v4180, 84
      %v4202 = vpop.permute.xlu0 %4201
      %4203 = vrot.lane.b32.xlu0 %v4181, 84
      %v4204 = vpop.permute.xlu0 %4203
      %4205 = vrot.lane.b32.xlu0 %v4182, 84
      %v4206 = vpop.permute.xlu0 %4205
      %4207 = vrot.lane.b32.xlu0 %v4184, 84
      %v4208 = vpop.permute.xlu0 %4207
      %v4209 = vsel %vm437, %v4186, %v4188
      %v4210 = vsel %vm437, %v4188, %v4190
      %v4211 = vsel %vm437, %v4190, %v4192
      %v4212 = vsel %vm437, %v4192, %v4194
      %v4213 = vsel %vm437, %v4194, %v4196
      %v4214 = vsel %vm437, %v4196, %v4198
      %v4215 = vsel %vm437, %v4198, %v4200
      %v4216 = vsel %vm437, %v4200, %v4202
      %v4217 = vsel %vm437, %v4202, %v4204
      %v4218 = vsel %vm437, %v4204, %v4206
      %v4219 = vsel %vm437, %v4206, %v4208
      %4220 = vrot.lane.b32.xlu0 %v4172, 40
      %v4221 = vpop.permute.xlu0 %4220
      %4222 = vrot.lane.b32.xlu0 %v4173, 40
      %v4223 = vpop.permute.xlu0 %4222
      %4224 = vrot.lane.b32.xlu0 %v4174, 40
      %v4225 = vpop.permute.xlu0 %4224
      %4226 = vrot.lane.b32.xlu0 %v4175, 40
      %v4227 = vpop.permute.xlu0 %4226
      %4228 = vrot.lane.b32.xlu0 %v4176, 40
      %v4229 = vpop.permute.xlu0 %4228
      %4230 = vrot.lane.b32.xlu0 %v4177, 40
      %v4231 = vpop.permute.xlu0 %4230
      %4232 = vrot.lane.b32.xlu0 %v4178, 40
      %v4233 = vpop.permute.xlu0 %4232
      %4234 = vrot.lane.b32.xlu0 %v4179, 40
      %v4235 = vpop.permute.xlu0 %4234
      %4236 = vrot.lane.b32.xlu0 %v4180, 40
      %v4237 = vpop.permute.xlu0 %4236
      %4238 = vrot.lane.b32.xlu0 %v4181, 40
      %v4239 = vpop.permute.xlu0 %4238
      %4240 = vrot.lane.b32.xlu0 %v4182, 40
      %v4241 = vpop.permute.xlu0 %4240
      %4242 = vrot.lane.b32.xlu0 %v4184, 40
      %v4243 = vpop.permute.xlu0 %4242
      %v4244 = vsel %vm502, %v4221, %v4223
      %v4245 = vsel %vm502, %v4223, %v4225
      %v4246 = vsel %vm502, %v4225, %v4227
      %v4247 = vsel %vm502, %v4227, %v4229
      %v4248 = vsel %vm502, %v4229, %v4231
      %v4249 = vsel %vm502, %v4231, %v4233
      %v4250 = vsel %vm502, %v4233, %v4235
      %v4251 = vsel %vm502, %v4235, %v4237
      %v4252 = vsel %vm502, %v4237, %v4239
      %v4253 = vsel %vm502, %v4239, %v4241
      %v4254 = vsel %vm502, %v4241, %v4243
      %v4256 = vunpack.c.l.b16 %v4153
      %v4257 = vpack.c.b16 %v4256, %v4256
      %4258 = vrot.lane.b32.xlu0 %v4173, 124
      %v4259 = vpop.permute.xlu0 %4258
      %4260 = vrot.lane.b32.xlu0 %v4174, 124
      %v4261 = vpop.permute.xlu0 %4260
      %4262 = vrot.lane.b32.xlu0 %v4175, 124
      %v4263 = vpop.permute.xlu0 %4262
      %4264 = vrot.lane.b32.xlu0 %v4176, 124
      %v4265 = vpop.permute.xlu0 %4264
      %4266 = vrot.lane.b32.xlu0 %v4177, 124
      %v4267 = vpop.permute.xlu0 %4266
      %4268 = vrot.lane.b32.xlu0 %v4178, 124
      %v4269 = vpop.permute.xlu0 %4268
      %4270 = vrot.lane.b32.xlu0 %v4179, 124
      %v4271 = vpop.permute.xlu0 %4270
      %4272 = vrot.lane.b32.xlu0 %v4180, 124
      %v4273 = vpop.permute.xlu0 %4272
      %4274 = vrot.lane.b32.xlu0 %v4181, 124
      %v4275 = vpop.permute.xlu0 %4274
      %4276 = vrot.lane.b32.xlu0 %v4182, 124
      %v4277 = vpop.permute.xlu0 %4276
      %4278 = vrot.lane.b32.xlu0 %v4184, 124
      %v4279 = vpop.permute.xlu0 %4278
      %4280 = vrot.lane.b32.xlu0 %v4257, 124
      %v4281 = vpop.permute.xlu0 %4280
      %v4282 = vsel %vm569, %v4259, %v4261
      %v4283 = vsel %vm569, %v4261, %v4263
      %v4284 = vsel %vm569, %v4263, %v4265
      %v4285 = vsel %vm569, %v4265, %v4267
      %v4286 = vsel %vm569, %v4267, %v4269
      %v4287 = vsel %vm569, %v4269, %v4271
      %v4288 = vsel %vm569, %v4271, %v4273
      %v4289 = vsel %vm569, %v4273, %v4275
      %v4290 = vsel %vm569, %v4275, %v4277
      %v4291 = vsel %vm569, %v4277, %v4279
      %v4292 = vsel %vm569, %v4279, %v4281
      %4293 = vrot.lane.b32.xlu0 %v4173, 80
      %v4294 = vpop.permute.xlu0 %4293
      %4295 = vrot.lane.b32.xlu0 %v4174, 80
      %v4296 = vpop.permute.xlu0 %4295
      %4297 = vrot.lane.b32.xlu0 %v4175, 80
      %v4298 = vpop.permute.xlu0 %4297
      %4299 = vrot.lane.b32.xlu0 %v4176, 80
      %v4300 = vpop.permute.xlu0 %4299
      %4301 = vrot.lane.b32.xlu0 %v4177, 80
      %v4302 = vpop.permute.xlu0 %4301
      %4303 = vrot.lane.b32.xlu0 %v4178, 80
      %v4304 = vpop.permute.xlu0 %4303
      %4305 = vrot.lane.b32.xlu0 %v4179, 80
      %v4306 = vpop.permute.xlu0 %4305
      %4307 = vrot.lane.b32.xlu0 %v4180, 80
      %v4308 = vpop.permute.xlu0 %4307
      %4309 = vrot.lane.b32.xlu0 %v4181, 80
      %v4310 = vpop.permute.xlu0 %4309
      %4311 = vrot.lane.b32.xlu0 %v4182, 80
      %v4312 = vpop.permute.xlu0 %4311
      %4313 = vrot.lane.b32.xlu0 %v4184, 80
      %v4314 = vpop.permute.xlu0 %4313
      %4315 = vrot.lane.b32.xlu0 %v4257, 80
      %v4316 = vpop.permute.xlu0 %4315
      %v4317 = vsel %vm634, %v4294, %v4296
      %v4318 = vsel %vm634, %v4296, %v4298
      %v4319 = vsel %vm634, %v4298, %v4300
      %v4320 = vsel %vm634, %v4300, %v4302
      %v4321 = vsel %vm634, %v4302, %v4304
      %v4322 = vsel %vm634, %v4304, %v4306
      %v4323 = vsel %vm634, %v4306, %v4308
      %v4324 = vsel %vm634, %v4308, %v4310
      %v4325 = vsel %vm634, %v4310, %v4312
      %v4326 = vsel %vm634, %v4312, %v4314
      %v4327 = vsel %vm634, %v4314, %v4316
      %4328 = vrot.lane.b32.xlu0 %v4173, 36
      %v4329 = vpop.permute.xlu0 %4328
      %4330 = vrot.lane.b32.xlu0 %v4174, 36
      %v4331 = vpop.permute.xlu0 %4330
      %4332 = vrot.lane.b32.xlu0 %v4175, 36
      %v4333 = vpop.permute.xlu0 %4332
      %4334 = vrot.lane.b32.xlu0 %v4176, 36
      %v4335 = vpop.permute.xlu0 %4334
      %4336 = vrot.lane.b32.xlu0 %v4177, 36
      %v4337 = vpop.permute.xlu0 %4336
      %4338 = vrot.lane.b32.xlu0 %v4178, 36
      %v4339 = vpop.permute.xlu0 %4338
      %4340 = vrot.lane.b32.xlu0 %v4179, 36
      %v4341 = vpop.permute.xlu0 %4340
      %4342 = vrot.lane.b32.xlu0 %v4180, 36
      %v4343 = vpop.permute.xlu0 %4342
      %4344 = vrot.lane.b32.xlu0 %v4181, 36
      %v4345 = vpop.permute.xlu0 %4344
      %4346 = vrot.lane.b32.xlu0 %v4182, 36
      %v4347 = vpop.permute.xlu0 %4346
      %4348 = vrot.lane.b32.xlu0 %v4184, 36
      %v4349 = vpop.permute.xlu0 %4348
      %4350 = vrot.lane.b32.xlu0 %v4257, 36
      %v4351 = vpop.permute.xlu0 %4350
      %v4352 = vsel %vm700, %v4329, %v4331
      %v4353 = vsel %vm700, %v4331, %v4333
      %v4354 = vsel %vm700, %v4333, %v4335
      %v4355 = vsel %vm700, %v4335, %v4337
      %v4356 = vsel %vm700, %v4337, %v4339
      %v4357 = vsel %vm700, %v4339, %v4341
      %v4358 = vsel %vm700, %v4341, %v4343
      %v4359 = vsel %vm700, %v4343, %v4345
      %v4360 = vsel %vm700, %v4345, %v4347
      %v4361 = vsel %vm700, %v4347, %v4349
      %v4362 = vsel %vm700, %v4349, %v4351
      %v4363 = vunpack.c.h.b16 %v4153
      %v4364 = vpack.c.b16 %v4363, %v4363
      %4365 = vrot.lane.b32.xlu0 %v4174, 120
      %v4366 = vpop.permute.xlu0 %4365
      %4367 = vrot.lane.b32.xlu0 %v4175, 120
      %v4368 = vpop.permute.xlu0 %4367
      %4369 = vrot.lane.b32.xlu0 %v4176, 120
      %v4370 = vpop.permute.xlu0 %4369
      %4371 = vrot.lane.b32.xlu0 %v4177, 120
      %v4372 = vpop.permute.xlu0 %4371
      %4373 = vrot.lane.b32.xlu0 %v4178, 120
      %v4374 = vpop.permute.xlu0 %4373
      %4375 = vrot.lane.b32.xlu0 %v4179, 120
      %v4376 = vpop.permute.xlu0 %4375
      %4377 = vrot.lane.b32.xlu0 %v4180, 120
      %v4378 = vpop.permute.xlu0 %4377
      %4379 = vrot.lane.b32.xlu0 %v4181, 120
      %v4380 = vpop.permute.xlu0 %4379
      %4381 = vrot.lane.b32.xlu0 %v4182, 120
      %v4382 = vpop.permute.xlu0 %4381
      %4383 = vrot.lane.b32.xlu0 %v4184, 120
      %v4384 = vpop.permute.xlu0 %4383
      %4385 = vrot.lane.b32.xlu0 %v4257, 120
      %v4386 = vpop.permute.xlu0 %4385
      %4387 = vrot.lane.b32.xlu0 %v4364, 120
      %v4388 = vpop.permute.xlu0 %4387
      %v4389 = vsel %vm766, %v4366, %v4368
      %v4390 = vsel %vm766, %v4368, %v4370
      %v4391 = vsel %vm766, %v4370, %v4372
      %v4392 = vsel %vm766, %v4372, %v4374
      %v4393 = vsel %vm766, %v4374, %v4376
      %v4394 = vsel %vm766, %v4376, %v4378
      %v4395 = vsel %vm766, %v4378, %v4380
      %v4396 = vsel %vm766, %v4380, %v4382
      %v4397 = vsel %vm766, %v4382, %v4384
      %v4398 = vsel %vm766, %v4384, %v4386
      %v4399 = vsel %vm766, %v4386, %v4388
      %4400 = vrot.lane.b32.xlu0 %v4174, 76
      %v4401 = vpop.permute.xlu0 %4400
      %4402 = vrot.lane.b32.xlu0 %v4175, 76
      %v4403 = vpop.permute.xlu0 %4402
      %4404 = vrot.lane.b32.xlu0 %v4176, 76
      %v4405 = vpop.permute.xlu0 %4404
      %4406 = vrot.lane.b32.xlu0 %v4177, 76
      %v4407 = vpop.permute.xlu0 %4406
      %4408 = vrot.lane.b32.xlu0 %v4178, 76
      %v4409 = vpop.permute.xlu0 %4408
      %4410 = vrot.lane.b32.xlu0 %v4179, 76
      %v4411 = vpop.permute.xlu0 %4410
      %4412 = vrot.lane.b32.xlu0 %v4180, 76
      %v4413 = vpop.permute.xlu0 %4412
      %4414 = vrot.lane.b32.xlu0 %v4181, 76
      %v4415 = vpop.permute.xlu0 %4414
      %4416 = vrot.lane.b32.xlu0 %v4182, 76
      %v4417 = vpop.permute.xlu0 %4416
      %4418 = vrot.lane.b32.xlu0 %v4184, 76
      %v4419 = vpop.permute.xlu0 %4418
      %4420 = vrot.lane.b32.xlu0 %v4257, 76
      %v4421 = vpop.permute.xlu0 %4420
      %4422 = vrot.lane.b32.xlu0 %v4364, 76
      %v4423 = vpop.permute.xlu0 %4422
      %v4424 = vsel %vm832, %v4401, %v4403
      %v4425 = vsel %vm832, %v4403, %v4405
      %v4426 = vsel %vm832, %v4405, %v4407
      %v4427 = vsel %vm832, %v4407, %v4409
      %v4428 = vsel %vm832, %v4409, %v4411
      %v4429 = vsel %vm832, %v4411, %v4413
      %v4430 = vsel %vm832, %v4413, %v4415
      %v4431 = vsel %vm832, %v4415, %v4417
      %v4432 = vsel %vm832, %v4417, %v4419
      %v4433 = vsel %vm832, %v4419, %v4421
      %v4434 = vsel %vm832, %v4421, %v4423
      %4435 = vrot.lane.b32.xlu0 %v4174, 32
      %v4436 = vpop.permute.xlu0 %4435
      %4437 = vrot.lane.b32.xlu0 %v4175, 32
      %v4438 = vpop.permute.xlu0 %4437
      %4439 = vrot.lane.b32.xlu0 %v4176, 32
      %v4440 = vpop.permute.xlu0 %4439
      %4441 = vrot.lane.b32.xlu0 %v4177, 32
      %v4442 = vpop.permute.xlu0 %4441
      %4443 = vrot.lane.b32.xlu0 %v4178, 32
      %v4444 = vpop.permute.xlu0 %4443
      %4445 = vrot.lane.b32.xlu0 %v4179, 32
      %v4446 = vpop.permute.xlu0 %4445
      %4447 = vrot.lane.b32.xlu0 %v4180, 32
      %v4448 = vpop.permute.xlu0 %4447
      %4449 = vrot.lane.b32.xlu0 %v4181, 32
      %v4450 = vpop.permute.xlu0 %4449
      %4451 = vrot.lane.b32.xlu0 %v4182, 32
      %v4452 = vpop.permute.xlu0 %4451
      %4453 = vrot.lane.b32.xlu0 %v4184, 32
      %v4454 = vpop.permute.xlu0 %4453
      %4455 = vrot.lane.b32.xlu0 %v4257, 32
      %v4456 = vpop.permute.xlu0 %4455
      %4457 = vrot.lane.b32.xlu0 %v4364, 32
      %v4458 = vpop.permute.xlu0 %4457
      %v4459 = vsel %vm897, %v4436, %v4438
      %v4460 = vsel %vm897, %v4438, %v4440
      %v4461 = vsel %vm897, %v4440, %v4442
      %v4462 = vsel %vm897, %v4442, %v4444
      %v4463 = vsel %vm897, %v4444, %v4446
      %v4464 = vsel %vm897, %v4446, %v4448
      %v4465 = vsel %vm897, %v4448, %v4450
      %v4466 = vsel %vm897, %v4450, %v4452
      %v4467 = vsel %vm897, %v4452, %v4454
      %v4468 = vsel %vm897, %v4454, %v4456
      %v4469 = vsel %vm897, %v4456, %v4458
      %v4471 = vunpack.c.l.b16 %v4154
      %v4472 = vpack.c.b16 %v4471, %v4471
      %4473 = vrot.lane.b32.xlu0 %v4175, 116
      %v4474 = vpop.permute.xlu0 %4473
      %4475 = vrot.lane.b32.xlu0 %v4176, 116
      %v4476 = vpop.permute.xlu0 %4475
      %4477 = vrot.lane.b32.xlu0 %v4177, 116
      %v4478 = vpop.permute.xlu0 %4477
      %4479 = vrot.lane.b32.xlu0 %v4178, 116
      %v4480 = vpop.permute.xlu0 %4479
      %4481 = vrot.lane.b32.xlu0 %v4179, 116
      %v4482 = vpop.permute.xlu0 %4481
      %4483 = vrot.lane.b32.xlu0 %v4180, 116
      %v4484 = vpop.permute.xlu0 %4483
      %4485 = vrot.lane.b32.xlu0 %v4181, 116
      %v4486 = vpop.permute.xlu0 %4485
      %4487 = vrot.lane.b32.xlu0 %v4182, 116
      %v4488 = vpop.permute.xlu0 %4487
      %4489 = vrot.lane.b32.xlu0 %v4184, 116
      %v4490 = vpop.permute.xlu0 %4489
      %4491 = vrot.lane.b32.xlu0 %v4257, 116
      %v4492 = vpop.permute.xlu0 %4491
      %4493 = vrot.lane.b32.xlu0 %v4364, 116
      %v4494 = vpop.permute.xlu0 %4493
      %4495 = vrot.lane.b32.xlu0 %v4472, 116
      %v4496 = vpop.permute.xlu0 %4495
      %v4497 = vsel %vm963, %v4474, %v4476
      %v4498 = vsel %vm963, %v4476, %v4478
      %v4499 = vsel %vm963, %v4478, %v4480
      %v4500 = vsel %vm963, %v4480, %v4482
      %v4501 = vsel %vm963, %v4482, %v4484
      %v4502 = vsel %vm963, %v4484, %v4486
      %v4503 = vsel %vm963, %v4486, %v4488
      %v4504 = vsel %vm963, %v4488, %v4490
      %v4505 = vsel %vm963, %v4490, %v4492
      %v4506 = vsel %vm963, %v4492, %v4494
      %v4507 = vsel %vm963, %v4494, %v4496
      %4508 = vrot.lane.b32.xlu0 %v4175, 72
      %v4509 = vpop.permute.xlu0 %4508
      %4510 = vrot.lane.b32.xlu0 %v4176, 72
      %v4511 = vpop.permute.xlu0 %4510
      %4512 = vrot.lane.b32.xlu0 %v4177, 72
      %v4513 = vpop.permute.xlu0 %4512
      %4514 = vrot.lane.b32.xlu0 %v4178, 72
      %v4515 = vpop.permute.xlu0 %4514
      %4516 = vrot.lane.b32.xlu0 %v4179, 72
      %v4517 = vpop.permute.xlu0 %4516
      %4518 = vrot.lane.b32.xlu0 %v4180, 72
      %v4519 = vpop.permute.xlu0 %4518
      %4520 = vrot.lane.b32.xlu0 %v4181, 72
      %v4521 = vpop.permute.xlu0 %4520
      %4522 = vrot.lane.b32.xlu0 %v4182, 72
      %v4523 = vpop.permute.xlu0 %4522
      %4524 = vrot.lane.b32.xlu0 %v4184, 72
      %v4525 = vpop.permute.xlu0 %4524
      %4526 = vrot.lane.b32.xlu0 %v4257, 72
      %v4527 = vpop.permute.xlu0 %4526
      %4528 = vrot.lane.b32.xlu0 %v4364, 72
      %v4529 = vpop.permute.xlu0 %4528
      %4530 = vrot.lane.b32.xlu0 %v4472, 72
      %v4531 = vpop.permute.xlu0 %4530
      %v4532 = vsel %vm1029, %v4509, %v4511
      %v4533 = vsel %vm1029, %v4511, %v4513
      %v4534 = vsel %vm1029, %v4513, %v4515
      %v4535 = vsel %vm1029, %v4515, %v4517
      %v4536 = vsel %vm1029, %v4517, %v4519
      %v4537 = vsel %vm1029, %v4519, %v4521
      %v4538 = vsel %vm1029, %v4521, %v4523
      %v4539 = vsel %vm1029, %v4523, %v4525
      %v4540 = vsel %vm1029, %v4525, %v4527
      %v4541 = vsel %vm1029, %v4527, %v4529
      %v4542 = vsel %vm1029, %v4529, %v4531
      %4543 = vrot.lane.b32.xlu0 %v4175, 28
      %v4544 = vpop.permute.xlu0 %4543
      %4545 = vrot.lane.b32.xlu0 %v4176, 28
      %v4546 = vpop.permute.xlu0 %4545
      %4547 = vrot.lane.b32.xlu0 %v4177, 28
      %v4548 = vpop.permute.xlu0 %4547
      %4549 = vrot.lane.b32.xlu0 %v4178, 28
      %v4550 = vpop.permute.xlu0 %4549
      %4551 = vrot.lane.b32.xlu0 %v4179, 28
      %v4552 = vpop.permute.xlu0 %4551
      %4553 = vrot.lane.b32.xlu0 %v4180, 28
      %v4554 = vpop.permute.xlu0 %4553
      %4555 = vrot.lane.b32.xlu0 %v4181, 28
      %v4556 = vpop.permute.xlu0 %4555
      %4557 = vrot.lane.b32.xlu0 %v4182, 28
      %v4558 = vpop.permute.xlu0 %4557
      %4559 = vrot.lane.b32.xlu0 %v4184, 28
      %v4560 = vpop.permute.xlu0 %4559
      %4561 = vrot.lane.b32.xlu0 %v4257, 28
      %v4562 = vpop.permute.xlu0 %4561
      %4563 = vrot.lane.b32.xlu0 %v4364, 28
      %v4564 = vpop.permute.xlu0 %4563
      %4565 = vrot.lane.b32.xlu0 %v4472, 28
      %v4566 = vpop.permute.xlu0 %4565
      %v4567 = vsel %vm1095, %v4544, %v4546
      %v4568 = vsel %vm1095, %v4546, %v4548
      %v4569 = vsel %vm1095, %v4548, %v4550
      %v4570 = vsel %vm1095, %v4550, %v4552
      %v4571 = vsel %vm1095, %v4552, %v4554
      %v4572 = vsel %vm1095, %v4554, %v4556
      %v4573 = vsel %vm1095, %v4556, %v4558
      %v4574 = vsel %vm1095, %v4558, %v4560
      %v4575 = vsel %vm1095, %v4560, %v4562
      %v4576 = vsel %vm1095, %v4562, %v4564
      %v4577 = vsel %vm1095, %v4564, %v4566
      %v4578 = vunpack.c.h.b16 %v4154
      %v4579 = vpack.c.b16 %v4578, %v4578
      %4580 = vrot.lane.b32.xlu0 %v4176, 112
      %v4581 = vpop.permute.xlu0 %4580
      %4582 = vrot.lane.b32.xlu0 %v4177, 112
      %v4583 = vpop.permute.xlu0 %4582
      %4584 = vrot.lane.b32.xlu0 %v4178, 112
      %v4585 = vpop.permute.xlu0 %4584
      %4586 = vrot.lane.b32.xlu0 %v4179, 112
      %v4587 = vpop.permute.xlu0 %4586
      %4588 = vrot.lane.b32.xlu0 %v4180, 112
      %v4589 = vpop.permute.xlu0 %4588
      %4590 = vrot.lane.b32.xlu0 %v4181, 112
      %v4591 = vpop.permute.xlu0 %4590
      %4592 = vrot.lane.b32.xlu0 %v4182, 112
      %v4593 = vpop.permute.xlu0 %4592
      %4594 = vrot.lane.b32.xlu0 %v4184, 112
      %v4595 = vpop.permute.xlu0 %4594
      %4596 = vrot.lane.b32.xlu0 %v4257, 112
      %v4597 = vpop.permute.xlu0 %4596
      %4598 = vrot.lane.b32.xlu0 %v4364, 112
      %v4599 = vpop.permute.xlu0 %4598
      %4600 = vrot.lane.b32.xlu0 %v4472, 112
      %v4601 = vpop.permute.xlu0 %4600
      %4602 = vrot.lane.b32.xlu0 %v4579, 112
      %v4603 = vpop.permute.xlu0 %4602
      %v4604 = vsel %vm1159, %v4581, %v4583
      %v4605 = vsel %vm1159, %v4583, %v4585
      %v4606 = vsel %vm1159, %v4585, %v4587
      %v4607 = vsel %vm1159, %v4587, %v4589
      %v4608 = vsel %vm1159, %v4589, %v4591
      %v4609 = vsel %vm1159, %v4591, %v4593
      %v4610 = vsel %vm1159, %v4593, %v4595
      %v4611 = vsel %vm1159, %v4595, %v4597
      %v4612 = vsel %vm1159, %v4597, %v4599
      %v4613 = vsel %vm1159, %v4599, %v4601
      %v4614 = vsel %vm1159, %v4601, %v4603
      %v4617 = vsel %vm1196, %v4172, %v4209
      %v4621 = vsel %vm1196, %v4173, %v4210
      %v4625 = vsel %vm1196, %v4174, %v4211
      %v4629 = vsel %vm1196, %v4175, %v4212
      %v4633 = vsel %vm1196, %v4176, %v4213
      %v4637 = vsel %vm1196, %v4177, %v4214
      %v4641 = vsel %vm1196, %v4178, %v4215
      %v4645 = vsel %vm1196, %v4179, %v4216
      %v4649 = vsel %vm1196, %v4180, %v4217
      %v4653 = vsel %vm1196, %v4181, %v4218
      %v4657 = vsel %vm1196, %v4182, %v4219
      %v4661 = vsel %vm1196, %v4244, %v4282
      %v4665 = vsel %vm1196, %v4245, %v4283
      %v4669 = vsel %vm1196, %v4246, %v4284
      %v4673 = vsel %vm1196, %v4247, %v4285
      %v4677 = vsel %vm1196, %v4248, %v4286
      %v4681 = vsel %vm1196, %v4249, %v4287
      %v4685 = vsel %vm1196, %v4250, %v4288
      %v4689 = vsel %vm1196, %v4251, %v4289
      %v4693 = vsel %vm1196, %v4252, %v4290
      %v4697 = vsel %vm1196, %v4253, %v4291
      %v4701 = vsel %vm1196, %v4254, %v4292
      %v4705 = vsel %vm1196, %v4317, %v4352
      %v4709 = vsel %vm1196, %v4318, %v4353
      %v4713 = vsel %vm1196, %v4319, %v4354
      %v4717 = vsel %vm1196, %v4320, %v4355
      %v4721 = vsel %vm1196, %v4321, %v4356
      %v4725 = vsel %vm1196, %v4322, %v4357
      %v4729 = vsel %vm1196, %v4323, %v4358
      %v4733 = vsel %vm1196, %v4324, %v4359
      %v4737 = vsel %vm1196, %v4325, %v4360
      %v4741 = vsel %vm1196, %v4326, %v4361
      %v4745 = vsel %vm1196, %v4327, %v4362
      %v4749 = vsel %vm1196, %v4389, %v4424
      %v4753 = vsel %vm1196, %v4390, %v4425
      %v4757 = vsel %vm1196, %v4391, %v4426
      %v4761 = vsel %vm1196, %v4392, %v4427
      %v4765 = vsel %vm1196, %v4393, %v4428
      %v4769 = vsel %vm1196, %v4394, %v4429
      %v4773 = vsel %vm1196, %v4395, %v4430
      %v4777 = vsel %vm1196, %v4396, %v4431
      %v4781 = vsel %vm1196, %v4397, %v4432
      %v4785 = vsel %vm1196, %v4398, %v4433
      %v4789 = vsel %vm1196, %v4399, %v4434
      %v4793 = vsel %vm1196, %v4459, %v4497
      %v4797 = vsel %vm1196, %v4460, %v4498
      %v4801 = vsel %vm1196, %v4461, %v4499
      %v4805 = vsel %vm1196, %v4462, %v4500
      %v4809 = vsel %vm1196, %v4463, %v4501
      %v4813 = vsel %vm1196, %v4464, %v4502
      %v4817 = vsel %vm1196, %v4465, %v4503
      %v4821 = vsel %vm1196, %v4466, %v4504
      %v4825 = vsel %vm1196, %v4467, %v4505
      %v4829 = vsel %vm1196, %v4468, %v4506
      %v4833 = vsel %vm1196, %v4469, %v4507
      %v4837 = vsel %vm1196, %v4532, %v4567
      %v4841 = vsel %vm1196, %v4533, %v4568
      %v4845 = vsel %vm1196, %v4534, %v4569
      %v4849 = vsel %vm1196, %v4535, %v4570
      %v4853 = vsel %vm1196, %v4536, %v4571
      %v4857 = vsel %vm1196, %v4537, %v4572
      %v4861 = vsel %vm1196, %v4538, %v4573
      %v4865 = vsel %vm1196, %v4539, %v4574
      %v4869 = vsel %vm1196, %v4540, %v4575
      %v4873 = vsel %vm1196, %v4541, %v4576
      %v4877 = vsel %vm1196, %v4542, %v4577
      %v4879 = vld [vmem:[%s4] sm:$0xf]
      %vm4880 = vcmask 850944
      %v4882 = vsel %vm4880, %v4879, 0
      %v4885 = vsel %vm1196, %v4604, 0
      %v4888 = vsel %vm1196, %v4605, 0
      %v4891 = vsel %vm1196, %v4606, 0
      %v4894 = vsel %vm1196, %v4607, 0
      %v4897 = vsel %vm1196, %v4608, 0
      %v4900 = vsel %vm1196, %v4609, 0
      %v4903 = vsel %vm1196, %v4610, 0
      %v4906 = vsel %vm1196, %v4611, 0
      %v4909 = vsel %vm1196, %v4612, 0
      %v4912 = vsel %vm1196, %v4613, 0
      %v4915 = vsel %vm1196, %v4614, 0
      %4917 = vmatpush.bf16.msra.mxu0 0
      %4918 = vmatpush.bf16.msra.mxu0 %v4885
      %4919 = vmatpush.bf16.msra.mxu0 %v4837
      %4920 = vmatpush.bf16.msra.mxu0 %v4793
      %4921 = vmatpush.bf16.msra.mxu0 %v4749
      %4922 = vmatpush.bf16.msra.mxu0 %v4705
      %4923 = vmatpush.bf16.msra.mxu0 %v4661
      %4924 = vmatpush.bf16.msra.mxu0 %v4617
      %4925 = vmatmul.bf16.gmra.mxu0 %v4882
      %v4926 = vpop.f32.mrf.mxu0
      %v4927 = vadd.f32 0.0, %v4926
      %v4928 = vpop.f32.mrf.mxu0
      %4929 = vdwg.mxu0
      %4930 = vmatpush.bf16.msra.mxu0 0
      %4931 = vmatpush.bf16.msra.mxu0 %v4888
      %4932 = vmatpush.bf16.msra.mxu0 %v4841
      %4933 = vmatpush.bf16.msra.mxu0 %v4797
      %4934 = vmatpush.bf16.msra.mxu0 %v4753
      %4935 = vmatpush.bf16.msra.mxu0 %v4709
      %4936 = vmatpush.bf16.msra.mxu0 %v4665
      %4937 = vmatpush.bf16.msra.mxu0 %v4621
      %4938 = vmatmul.bf16.gmra.mxu0 %v4882
      %v4939 = vpop.f32.mrf.mxu0
      %v4940 = vadd.f32 0.0, %v4939
      %v4941 = vpop.f32.mrf.mxu0
      %4942 = vdwg.mxu0
      %4943 = vmatpush.bf16.msra.mxu0 0
      %4944 = vmatpush.bf16.msra.mxu0 %v4891
      %4945 = vmatpush.bf16.msra.mxu0 %v4845
      %4946 = vmatpush.bf16.msra.mxu0 %v4801
      %4947 = vmatpush.bf16.msra.mxu0 %v4757
      %4948 = vmatpush.bf16.msra.mxu0 %v4713
      %4949 = vmatpush.bf16.msra.mxu0 %v4669
      %4950 = vmatpush.bf16.msra.mxu0 %v4625
      %4951 = vmatmul.bf16.gmra.mxu0 %v4882
      %v4952 = vpop.f32.mrf.mxu0
      %v4953 = vadd.f32 0.0, %v4952
      %v4954 = vpop.f32.mrf.mxu0
      %4955 = vdwg.mxu0
      %4956 = vmatpush.bf16.msra.mxu0 0
      %4957 = vmatpush.bf16.msra.mxu0 %v4894
      %4958 = vmatpush.bf16.msra.mxu0 %v4849
      %4959 = vmatpush.bf16.msra.mxu0 %v4805
      %4960 = vmatpush.bf16.msra.mxu0 %v4761
      %4961 = vmatpush.bf16.msra.mxu0 %v4717
      %4962 = vmatpush.bf16.msra.mxu0 %v4673
      %4963 = vmatpush.bf16.msra.mxu0 %v4629
      %4964 = vmatmul.bf16.gmra.mxu0 %v4882
      %v4965 = vpop.f32.mrf.mxu0
      %v4966 = vadd.f32 0.0, %v4965
      %v4967 = vpop.f32.mrf.mxu0
      %4968 = vdwg.mxu0
      %4969 = vmatpush.bf16.msra.mxu0 0
      %4970 = vmatpush.bf16.msra.mxu0 %v4897
      %4971 = vmatpush.bf16.msra.mxu0 %v4853
      %4972 = vmatpush.bf16.msra.mxu0 %v4809
      %4973 = vmatpush.bf16.msra.mxu0 %v4765
      %4974 = vmatpush.bf16.msra.mxu0 %v4721
      %4975 = vmatpush.bf16.msra.mxu0 %v4677
      %4976 = vmatpush.bf16.msra.mxu0 %v4633
      %4977 = vmatmul.bf16.gmra.mxu0 %v4882
      %v4978 = vpop.f32.mrf.mxu0
      %v4979 = vadd.f32 0.0, %v4978
      %v4980 = vpop.f32.mrf.mxu0
      %4981 = vdwg.mxu0
      %4982 = vmatpush.bf16.msra.mxu0 0
      %4983 = vmatpush.bf16.msra.mxu0 %v4900
      %4984 = vmatpush.bf16.msra.mxu0 %v4857
      %4985 = vmatpush.bf16.msra.mxu0 %v4813
      %4986 = vmatpush.bf16.msra.mxu0 %v4769
      %4987 = vmatpush.bf16.msra.mxu0 %v4725
      %4988 = vmatpush.bf16.msra.mxu0 %v4681
      %4989 = vmatpush.bf16.msra.mxu0 %v4637
      %4990 = vmatmul.bf16.gmra.mxu0 %v4882
      %v4991 = vpop.f32.mrf.mxu0
      %v4992 = vadd.f32 0.0, %v4991
      %v4993 = vpop.f32.mrf.mxu0
      %4994 = vdwg.mxu0
      %4995 = vmatpush.bf16.msra.mxu0 0
      %4996 = vmatpush.bf16.msra.mxu0 %v4903
      %4997 = vmatpush.bf16.msra.mxu0 %v4861
      %4998 = vmatpush.bf16.msra.mxu0 %v4817
      %4999 = vmatpush.bf16.msra.mxu0 %v4773
      %5000 = vmatpush.bf16.msra.mxu0 %v4729
      %5001 = vmatpush.bf16.msra.mxu0 %v4685
      %5002 = vmatpush.bf16.msra.mxu0 %v4641
      %5003 = vmatmul.bf16.gmra.mxu0 %v4882
      %v5004 = vpop.f32.mrf.mxu0
      %v5005 = vadd.f32 0.0, %v5004
      %v5006 = vpop.f32.mrf.mxu0
      %5007 = vdwg.mxu0
      %5008 = vmatpush.bf16.msra.mxu0 0
      %5009 = vmatpush.bf16.msra.mxu0 %v4906
      %5010 = vmatpush.bf16.msra.mxu0 %v4865
      %5011 = vmatpush.bf16.msra.mxu0 %v4821
      %5012 = vmatpush.bf16.msra.mxu0 %v4777
      %5013 = vmatpush.bf16.msra.mxu0 %v4733
      %5014 = vmatpush.bf16.msra.mxu0 %v4689
      %5015 = vmatpush.bf16.msra.mxu0 %v4645
      %5016 = vmatmul.bf16.gmra.mxu0 %v4882
      %v5017 = vpop.f32.mrf.mxu0
      %v5018 = vadd.f32 0.0, %v5017
      %v5019 = vpop.f32.mrf.mxu0
      %5020 = vdwg.mxu0
      %5021 = vmatpush.bf16.msra.mxu0 0
      %5022 = vmatpush.bf16.msra.mxu0 %v4909
      %5023 = vmatpush.bf16.msra.mxu0 %v4869
      %5024 = vmatpush.bf16.msra.mxu0 %v4825
      %5025 = vmatpush.bf16.msra.mxu0 %v4781
      %5026 = vmatpush.bf16.msra.mxu0 %v4737
      %5027 = vmatpush.bf16.msra.mxu0 %v4693
      %5028 = vmatpush.bf16.msra.mxu0 %v4649
      %5029 = vmatmul.bf16.gmra.mxu0 %v4882
      %v5030 = vpop.f32.mrf.mxu0
      %v5031 = vadd.f32 0.0, %v5030
      %v5032 = vpop.f32.mrf.mxu0
      %5033 = vdwg.mxu0
      %5034 = vmatpush.bf16.msra.mxu0 0
      %5035 = vmatpush.bf16.msra.mxu0 %v4912
      %5036 = vmatpush.bf16.msra.mxu0 %v4873
      %5037 = vmatpush.bf16.msra.mxu0 %v4829
      %5038 = vmatpush.bf16.msra.mxu0 %v4785
      %5039 = vmatpush.bf16.msra.mxu0 %v4741
      %5040 = vmatpush.bf16.msra.mxu0 %v4697
      %5041 = vmatpush.bf16.msra.mxu0 %v4653
      %5042 = vmatmul.bf16.gmra.mxu0 %v4882
      %v5043 = vpop.f32.mrf.mxu0
      %v5044 = vadd.f32 0.0, %v5043
      %v5045 = vpop.f32.mrf.mxu0
      %5046 = vdwg.mxu0
      %5047 = vmatpush.bf16.msra.mxu0 0
      %5048 = vmatpush.bf16.msra.mxu0 %v4915
      %5049 = vmatpush.bf16.msra.mxu0 %v4877
      %5050 = vmatpush.bf16.msra.mxu0 %v4833
      %5051 = vmatpush.bf16.msra.mxu0 %v4789
      %5052 = vmatpush.bf16.msra.mxu0 %v4745
      %5053 = vmatpush.bf16.msra.mxu0 %v4701
      %5054 = vmatpush.bf16.msra.mxu0 %v4657
      %5055 = vmatmul.bf16.gmra.mxu0 %v4882
      %v5056 = vpop.f32.mrf.mxu0
      %v5057 = vadd.f32 0.0, %v5056
      %v5058 = vpop.f32.mrf.mxu0
      %5059 = vdwg.mxu0
      %v5061 = vsel %vm4880, %v2422, 0
      %v5064 = vsel %vm1196, %v2147, 0
      %v5067 = vsel %vm1196, %v2148, 0
      %v5070 = vsel %vm1196, %v2149, 0
      %v5073 = vsel %vm1196, %v2150, 0
      %v5076 = vsel %vm1196, %v2151, 0
      %v5079 = vsel %vm1196, %v2152, 0
      %v5082 = vsel %vm1196, %v2153, 0
      %v5085 = vsel %vm1196, %v2154, 0
      %v5088 = vsel %vm1196, %v2155, 0
      %v5091 = vsel %vm1196, %v2156, 0
      %v5094 = vsel %vm1196, %v2157, 0
      %5096 = vmatpush.bf16.msra.mxu0 0
      %5097 = vmatpush.bf16.msra.mxu0 %v5064
      %5098 = vmatpush.bf16.msra.mxu0 %v2380
      %5099 = vmatpush.bf16.msra.mxu0 %v2336
      %5100 = vmatpush.bf16.msra.mxu0 %v2292
      %5101 = vmatpush.bf16.msra.mxu0 %v2248
      %5102 = vmatpush.bf16.msra.mxu0 %v2204
      %5103 = vmatpush.bf16.msra.mxu0 %v2160
      %5104 = vmatmul.bf16.gmra.mxu0 %v5061
      %v5105 = vpop.f32.mrf.mxu0
      %v5106 = vadd.f32 %v4927, %v5105
      %v5107 = vpop.f32.mrf.mxu0
      %5108 = vdwg.mxu0
      %5109 = vmatpush.bf16.msra.mxu0 0
      %5110 = vmatpush.bf16.msra.mxu0 %v5067
      %5111 = vmatpush.bf16.msra.mxu0 %v2384
      %5112 = vmatpush.bf16.msra.mxu0 %v2340
      %5113 = vmatpush.bf16.msra.mxu0 %v2296
      %5114 = vmatpush.bf16.msra.mxu0 %v2252
      %5115 = vmatpush.bf16.msra.mxu0 %v2208
      %5116 = vmatpush.bf16.msra.mxu0 %v2164
      %5117 = vmatmul.bf16.gmra.mxu0 %v5061
      %v5118 = vpop.f32.mrf.mxu0
      %v5119 = vadd.f32 %v4940, %v5118
      %v5120 = vpop.f32.mrf.mxu0
      %5121 = vdwg.mxu0
      %5122 = vmatpush.bf16.msra.mxu0 0
      %5123 = vmatpush.bf16.msra.mxu0 %v5070
      %5124 = vmatpush.bf16.msra.mxu0 %v2388
      %5125 = vmatpush.bf16.msra.mxu0 %v2344
      %5126 = vmatpush.bf16.msra.mxu0 %v2300
      %5127 = vmatpush.bf16.msra.mxu0 %v2256
      %5128 = vmatpush.bf16.msra.mxu0 %v2212
      %5129 = vmatpush.bf16.msra.mxu0 %v2168
      %5130 = vmatmul.bf16.gmra.mxu0 %v5061
      %v5131 = vpop.f32.mrf.mxu0
      %v5132 = vadd.f32 %v4953, %v5131
      %v5133 = vpop.f32.mrf.mxu0
      %5134 = vdwg.mxu0
      %5135 = vmatpush.bf16.msra.mxu0 0
      %5136 = vmatpush.bf16.msra.mxu0 %v5073
      %5137 = vmatpush.bf16.msra.mxu0 %v2392
      %5138 = vmatpush.bf16.msra.mxu0 %v2348
      %5139 = vmatpush.bf16.msra.mxu0 %v2304
      %5140 = vmatpush.bf16.msra.mxu0 %v2260
      %5141 = vmatpush.bf16.msra.mxu0 %v2216
      %5142 = vmatpush.bf16.msra.mxu0 %v2172
      %5143 = vmatmul.bf16.gmra.mxu0 %v5061
      %v5144 = vpop.f32.mrf.mxu0
      %v5145 = vadd.f32 %v4966, %v5144
      %v5146 = vpop.f32.mrf.mxu0
      %5147 = vdwg.mxu0
      %5148 = vmatpush.bf16.msra.mxu0 0
      %5149 = vmatpush.bf16.msra.mxu0 %v5076
      %5150 = vmatpush.bf16.msra.mxu0 %v2396
      %5151 = vmatpush.bf16.msra.mxu0 %v2352
      %5152 = vmatpush.bf16.msra.mxu0 %v2308
      %5153 = vmatpush.bf16.msra.mxu0 %v2264
      %5154 = vmatpush.bf16.msra.mxu0 %v2220
      %5155 = vmatpush.bf16.msra.mxu0 %v2176
      %5156 = vmatmul.bf16.gmra.mxu0 %v5061
      %v5157 = vpop.f32.mrf.mxu0
      %v5158 = vadd.f32 %v4979, %v5157
      %v5159 = vpop.f32.mrf.mxu0
      %5160 = vdwg.mxu0
      %5161 = vmatpush.bf16.msra.mxu0 0
      %5162 = vmatpush.bf16.msra.mxu0 %v5079
      %5163 = vmatpush.bf16.msra.mxu0 %v2400
      %5164 = vmatpush.bf16.msra.mxu0 %v2356
      %5165 = vmatpush.bf16.msra.mxu0 %v2312
      %5166 = vmatpush.bf16.msra.mxu0 %v2268
      %5167 = vmatpush.bf16.msra.mxu0 %v2224
      %5168 = vmatpush.bf16.msra.mxu0 %v2180
      %5169 = vmatmul.bf16.gmra.mxu0 %v5061
      %v5170 = vpop.f32.mrf.mxu0
      %v5171 = vadd.f32 %v4992, %v5170
      %v5172 = vpop.f32.mrf.mxu0
      %5173 = vdwg.mxu0
      %5174 = vmatpush.bf16.msra.mxu0 0
      %5175 = vmatpush.bf16.msra.mxu0 %v5082
      %5176 = vmatpush.bf16.msra.mxu0 %v2404
      %5177 = vmatpush.bf16.msra.mxu0 %v2360
      %5178 = vmatpush.bf16.msra.mxu0 %v2316
      %5179 = vmatpush.bf16.msra.mxu0 %v2272
      %5180 = vmatpush.bf16.msra.mxu0 %v2228
      %5181 = vmatpush.bf16.msra.mxu0 %v2184
      %5182 = vmatmul.bf16.gmra.mxu0 %v5061
      %v5183 = vpop.f32.mrf.mxu0
      %v5184 = vadd.f32 %v5005, %v5183
      %v5185 = vpop.f32.mrf.mxu0
      %5186 = vdwg.mxu0
      %5187 = vmatpush.bf16.msra.mxu0 0
      %5188 = vmatpush.bf16.msra.mxu0 %v5085
      %5189 = vmatpush.bf16.msra.mxu0 %v2408
      %5190 = vmatpush.bf16.msra.mxu0 %v2364
      %5191 = vmatpush.bf16.msra.mxu0 %v2320
      %5192 = vmatpush.bf16.msra.mxu0 %v2276
      %5193 = vmatpush.bf16.msra.mxu0 %v2232
      %5194 = vmatpush.bf16.msra.mxu0 %v2188
      %5195 = vmatmul.bf16.gmra.mxu0 %v5061
      %v5196 = vpop.f32.mrf.mxu0
      %v5197 = vadd.f32 %v5018, %v5196
      %v5198 = vpop.f32.mrf.mxu0
      %5199 = vdwg.mxu0
      %5200 = vmatpush.bf16.msra.mxu0 0
      %5201 = vmatpush.bf16.msra.mxu0 %v5088
      %5202 = vmatpush.bf16.msra.mxu0 %v2412
      %5203 = vmatpush.bf16.msra.mxu0 %v2368
      %5204 = vmatpush.bf16.msra.mxu0 %v2324
      %5205 = vmatpush.bf16.msra.mxu0 %v2280
      %5206 = vmatpush.bf16.msra.mxu0 %v2236
      %5207 = vmatpush.bf16.msra.mxu0 %v2192
      %5208 = vmatmul.bf16.gmra.mxu0 %v5061
      %v5209 = vpop.f32.mrf.mxu0
      %v5210 = vadd.f32 %v5031, %v5209
      %v5211 = vpop.f32.mrf.mxu0
      %5212 = vdwg.mxu0
      %5213 = vmatpush.bf16.msra.mxu0 0
      %5214 = vmatpush.bf16.msra.mxu0 %v5091
      %5215 = vmatpush.bf16.msra.mxu0 %v2416
      %5216 = vmatpush.bf16.msra.mxu0 %v2372
      %5217 = vmatpush.bf16.msra.mxu0 %v2328
      %5218 = vmatpush.bf16.msra.mxu0 %v2284
      %5219 = vmatpush.bf16.msra.mxu0 %v2240
      %5220 = vmatpush.bf16.msra.mxu0 %v2196
      %5221 = vmatmul.bf16.gmra.mxu0 %v5061
      %v5222 = vpop.f32.mrf.mxu0
      %v5223 = vadd.f32 %v5044, %v5222
      %v5224 = vpop.f32.mrf.mxu0
      %5225 = vdwg.mxu0
      %5226 = vmatpush.bf16.msra.mxu0 0
      %5227 = vmatpush.bf16.msra.mxu0 %v5094
      %5228 = vmatpush.bf16.msra.mxu0 %v2420
      %5229 = vmatpush.bf16.msra.mxu0 %v2376
      %5230 = vmatpush.bf16.msra.mxu0 %v2332
      %5231 = vmatpush.bf16.msra.mxu0 %v2288
      %5232 = vmatpush.bf16.msra.mxu0 %v2244
      %5233 = vmatpush.bf16.msra.mxu0 %v2200
      %5234 = vmatmul.bf16.gmra.mxu0 %v5061
      %v5235 = vpop.f32.mrf.mxu0
      %v5236 = vadd.f32 %v5057, %v5235
      %v5237 = vpop.f32.mrf.mxu0
      %5238 = vdwg.mxu0
      %v5239 = vld [vmem:[%s7] sm:$0xff]
      %5241 = vset.pattern.permute.xlu0 0
      %5242 = vperm.xlu0 %5241, %v5239
      %v5243 = vpop.permute.xlu0 %5242
      %v5245 = vadd.f32 %v5106, %v5243
      %v5246 = vadd.f32 %v5119, %v5243
      %v5247 = vadd.f32 %v5132, %v5243
      %v5248 = vadd.f32 %v5145, %v5243
      %v5249 = vadd.f32 %v5158, %v5243
      %v5250 = vadd.f32 %v5171, %v5243
      %v5251 = vadd.f32 %v5184, %v5243
      %v5252 = vadd.f32 %v5197, %v5243
      %v5253 = vadd.f32 %v5210, %v5243
      %v5254 = vadd.f32 %v5223, %v5243
      %v5255 = vadd.f32 %v5236, %v5243
      %5256 = vst [vmem:[%s359] sm:$0xff] %v5245
      %5257 = vst [vmem:[%s359 + $0x8] sm:$0xff] %v5246
      %5258 = vst [vmem:[%s359 + $0x10] sm:$0xff] %v5247
      %5259 = vst [vmem:[%s359 + $0x18] sm:$0xff] %v5248
      %5260 = vst [vmem:[%s359 + $0x20] sm:$0xff] %v5249
      %5261 = vst [vmem:[%s359 + $0x28] sm:$0xff] %v5250
      %5262 = vst [vmem:[%s359 + $0x30] sm:$0xff] %v5251
      %5263 = vst [vmem:[%s359 + $0x38] sm:$0xff] %v5252
      %5264 = vst [vmem:[%s359 + $0x40] sm:$0xff] %v5253
      %5265 = vst [vmem:[%s359 + $0x48] sm:$0xff] %v5254
      %5266 = vst [vmem:[%s359 + $0x50] sm:$0xff] %v5255
      %p5267 = scmp.lt.s32.totalorder %s21, 1
      %s5268 = scalar_select %p5267, %s21, 1
      %s5269 = smul.addr %s5268, 11
      %s5270 = smul.addr %s5269, 8
      %s5271 = scalar_lea.vmem %s10, %s5270
      // Predicated region
      $region61: #{gcn_forward.1} parent=59 // pred_check
        %p5272 = pneg %p254
      $region62: #{gcn_forward.1} parent=59 // pred_check_branch
        %5274 = sbr.rel (%p5272) target = $region64
      $region63: #{gcn_forward.1} parent=59 // pred_region
        _
      $region64: #{gcn_forward.1} parent=59 // pred_fallthru
        _
    $region60: #{gcn_forward.1} parent=5 // pred_fallthru
      _
    %p5275 = scmp.le.s32.totalorder 2, %s16
    // Predicated region
    $region65: #{gcn_forward.1} parent=5 // pred_check
      %p5276 = pneg %p5275
    $region66: #{gcn_forward.1} parent=5 // pred_check_branch
      %5278 = sbr.rel (%p5276) target = $region68
    $region67: #{gcn_forward.1} parent=5 // pred_region
      %s5279 = ssub.s32 %s16, 2
      // Predicated region
      $region69: #{gcn_forward.1} parent=67 // pred_check
        %p5280 = pneg %p260
      $region70: #{gcn_forward.1} parent=67 // pred_check_branch
        %5282 = sbr.rel (%p5280) target = $region72
      $region71: #{gcn_forward.1} parent=67 // pred_region
        %p5283 = scmp.lt.s32.totalorder %s22, 1
        %s5284 = scalar_select %p5283, %s22, 1
        %s5285 = smul.addr %s5284, 11
        %s5286 = smul.addr %s5285, 8
        %s5287 = scalar_lea.vmem %s10, %s5286
      $region72: #{gcn_forward.1} parent=67 // pred_fallthru
        _
    $region68: #{gcn_forward.1} parent=5 // pred_fallthru
      _
  $region6: #{gcn_forward.1} parent=0 // loop_footer
    %s20 = sadd.s32 1, %s16
  $region7: #{gcn_forward.1} parent=0 // loop_footer_branch
    %15 = sbr.rel target = $region3
  $region8: #{gcn_forward.1} parent=0 // loop_exit
    _

</llo_original>
